<compile_context>
chip_gen: v7x
topology: tpu7x:2x2x1
jax: 0.10.0
libtpu: 0.0.40
codegen_flags: <defaults>
</compile_context>

<pallas_src>
import functools

import jax
import jax.numpy as jnp
from jax.experimental import pallas as pl
from jax.experimental.pallas import tpu as pltpu

CLASSES = 10
OUT_PAD = 128            # lane-dense padded output width (sliced to 10 outside)
EPS = 1e-5

D_IN, D_H1, D_H2 = 256, 640, 1024

# VMEM sizing: keep the double-buffered input stream within ~10 MiB so that
# input (<=10 MiB) + double-buffered bf16 weights (~3.8 MiB) + output/scratch
# (<1 MiB) stay under v5e's 16 MiB default scoped-VMEM limit and leave ample
# headroom on v6e (32 MiB scoped) and v7x (64 MiB total).
INPUT_DB_BUDGET = 10 << 20
TB_MAX = 256


# --------------------------------------------------------------------------
# Kernel
# --------------------------------------------------------------------------
def head_kernel(x_ref, w1_ref, b1_ref, w2_ref, b2_ref, w3_ref, b3_ref,
                out_ref, pool_acc, *, inv_hw):
    # Grid: (batch tiles [parallel], spatial chunks [arbitrary]).
    k = pl.program_id(1)

    @pl.when(k == 0)
    def _():
        pool_acc[...] = jnp.zeros_like(pool_acc)

    # AdaptiveAvgPool2d((1,1)): accumulate the spatial sum in f32 (input bf16).
    pool_acc[...] += jnp.sum(x_ref[...].astype(jnp.float32), axis=1)

    @pl.when(k == pl.num_programs(1) - 1)
    def _():
        pooled = (pool_acc[...] * inv_hw).astype(jnp.bfloat16)       # (TB, 256)

        # fc1: Linear(256,640) with eval-BN folded in, then ReLU (Dropout = id).
        h1 = jnp.dot(pooled, w1_ref[...],
                     preferred_element_type=jnp.float32) + b1_ref[...]
        h1 = jnp.maximum(h1, 0.0)

        # fc2: Linear(640,1024) with eval-BN folded in, then ReLU (Dropout = id).
        h2 = jnp.dot(h1.astype(jnp.bfloat16), w2_ref[...],
                     preferred_element_type=jnp.float32) + b2_ref[...]
        h2 = jnp.maximum(h2, 0.0)

        # linear_layers: Linear(1024, 10), zero-padded to 128 lane-dense cols.
        out_ref[...] = jnp.dot(h2.astype(jnp.bfloat16), w3_ref[...],
                               preferred_element_type=jnp.float32) + b3_ref[...]


# --------------------------------------------------------------------------
# Tiling policy (VMEM-budget aware, padding-waste aware, v7x 2-TC aware)
# --------------------------------------------------------------------------
def _round_up(x, m):
    return -(-x // m) * m


def _batch_tile(B):
    if B <= TB_MAX:
        if B >= 16:
            # Two batch tiles so the "parallel" grid axis shards across v7x's
            # two TensorCores (measured ~neutral on single-TC v5e/v6e).
            return min(TB_MAX, _round_up(-(-B // 2), 8))
        return _round_up(max(B, 1), 8)
    # Minimize batch padding waste on the dominant HBM stream.
    best_tb, best_waste = 8, None
    for tb in range(8, TB_MAX + 1, 8):
        waste = _round_up(B, tb) - B
        if best_waste is None or waste < best_waste or \
           (waste == best_waste and tb > best_tb):
            best_tb, best_waste = tb, waste
    return best_tb


def _choose_tiling(B, HW, itemsize=2):
    tb = _batch_tile(B)
    # Largest spatial chunk keeping the double-buffered bf16 input block
    # inside the budget; pad HW (with zeros) to a multiple of the chunk.
    max_thw = INPUT_DB_BUDGET // (2 * tb * D_IN * itemsize)
    max_thw = max(8, (max_thw // 8) * 8)
    hw8 = _round_up(max(HW, 1), 8)
    thw = hw8 if hw8 <= max_thw else max_thw
    hw_pad = _round_up(hw8, thw)
    return tb, thw, hw_pad


# --------------------------------------------------------------------------
# Wrapper
# --------------------------------------------------------------------------
def net_student_head(x_feat, folded):
    """Head forward (eval). x_feat: (B, H, W, 256) float32, channels-last."""
    B, H, W, C = x_feat.shape
    assert C == D_IN
    HW = H * W

    TB, THW, HW_pad = _choose_tiling(B, HW)
    n_hw = HW_pad // THW
    B_pad = _round_up(B, TB)
    n_tiles = B_pad // TB

    # bf16 downcast fused with the (free) channels-last reshape: halves the
    # dominant HBM read. Zero-padding the spatial axis is safe for the sum.
    x = x_feat.astype(jnp.bfloat16).reshape(B, HW, C)
    if B_pad != B or HW_pad != HW:
        x = jnp.pad(x, ((0, B_pad - B), (0, HW_pad - HW), (0, 0)))

    w1, b1 = folded["w1"], folded["b1"]
    w2, b2 = folded["w2"], folded["b2"]
    w3, b3 = folded["w3"], folded["b3"]

    flops = (2 * B_pad * (D_IN * D_H1 + D_H1 * D_H2 + D_H2 * OUT_PAD)
             + B_pad * HW_pad * C)
    bytes_accessed = ((w1.size + w2.size + w3.size) * 2      # bf16 weights
                      + (b1.size + b2.size + b3.size) * 4    # f32 biases
                      + B_pad * HW_pad * C * 2               # bf16 input
                      + B_pad * OUT_PAD * 4)                 # f32 output

    def weight_spec(shape):
        # Constant index_map -> parameters stay resident across grid steps.
        return pl.BlockSpec(shape, lambda i, k: (0, 0))

    kernel = functools.partial(head_kernel, inv_hw=1.0 / HW)

    out = pl.pallas_call(
        kernel,
        out_shape=jax.ShapeDtypeStruct((B_pad, OUT_PAD), jnp.float32),
        grid_spec=pltpu.PrefetchScalarGridSpec(
            num_scalar_prefetch=0,
            grid=(n_tiles, n_hw),
            in_specs=[
                pl.BlockSpec((TB, THW, C), lambda i, k: (i, k, 0)),
                weight_spec((D_IN, D_H1)), weight_spec((1, D_H1)),
                weight_spec((D_H1, D_H2)), weight_spec((1, D_H2)),
                weight_spec((D_H2, OUT_PAD)), weight_spec((1, OUT_PAD)),
            ],
            out_specs=pl.BlockSpec((TB, OUT_PAD), lambda i, k: (i, 0)),
            scratch_shapes=[pltpu.VMEM((TB, D_IN), jnp.float32)],
        ),
        compiler_params=pltpu.CompilerParams(
            dimension_semantics=("parallel", "arbitrary")),
        cost_estimate=pl.CostEstimate(
            flops=flops, transcendentals=0, bytes_accessed=bytes_accessed),
    )(x, w1, b1, w2, b2, w3, b3)

    return out[:B, :CLASSES]


# --------------------------------------------------------------------------
# Parameter construction: raw (PyTorch-equivalent) params + eval-BN folding
# --------------------------------------------------------------------------
def init_params(key):
    ks = jax.random.split(key, 14)

    def lin(kw, kb, fan_in, fan_out):
        bound = 1.0 / jnp.sqrt(fan_in)
        w = jax.random.uniform(kw, (fan_in, fan_out), jnp.float32, -bound, bound)
        b = jax.random.uniform(kb, (1, fan_out), jnp.float32, -bound, bound)
        return w, b

    w1, b1 = lin(ks[0], ks[1], D_IN, D_H1)
    w2, b2 = lin(ks[2], ks[3], D_H1, D_H2)
    w3, b3 = lin(ks[4], ks[5], D_H2, CLASSES)

    def bn(kg, kb, km, kv, n):
        g = 1.0 + 0.1 * jax.random.normal(kg, (1, n), jnp.float32)
        be = 0.1 * jax.random.normal(kb, (1, n), jnp.float32)
        rm = 0.1 * jax.random.normal(km, (1, n), jnp.float32)
        rv = jax.random.uniform(kv, (1, n), jnp.float32, 0.5, 1.5)
        return g, be, rm, rv

    g1, be1, rm1, rv1 = bn(ks[6], ks[7], ks[8], ks[9], D_H1)
    g2, be2, rm2, rv2 = bn(ks[10], ks[11], ks[12], ks[13], D_H2)

    return dict(w1=w1, b1=b1, g1=g1, be1=be1, rm1=rm1, rv1=rv1,
                w2=w2, b2=b2, g2=g2, be2=be2, rm2=rm2, rv2=rv2,
                w3=w3, b3=b3)


def fold_params(p):
    """One-time constant transform: fold eval BN into linear weights/biases,
    cast weights to bf16, pad the classifier to 128 lane-dense columns."""
    s1 = p["g1"] * jax.lax.rsqrt(p["rv1"] + EPS)          # (1, 640)
    s2 = p["g2"] * jax.lax.rsqrt(p["rv2"] + EPS)          # (1, 1024)

    w1 = (p["w1"] * s1).astype(jnp.bfloat16)
    b1 = (p["b1"] - p["rm1"]) * s1 + p["be1"]

    w2 = (p["w2"] * s2).astype(jnp.bfloat16)
    b2 = (p["b2"] - p["rm2"]) * s2 + p["be2"]

    w3 = jnp.zeros((D_H2, OUT_PAD), jnp.float32).at[:, :CLASSES].set(p["w3"])
    w3 = w3.astype(jnp.bfloat16)
    b3 = jnp.zeros((1, OUT_PAD), jnp.float32).at[:, :CLASSES].set(p["b3"])

    return dict(w1=w1, b1=b1, w2=w2, b2=b2, w3=w3, b3=b3)


# --------------------------------------------------------------------------
# References
# --------------------------------------------------------------------------
def reference_f32(x_feat, p):
    """Original module semantics (f32, explicit eval BN), channels-last input."""
    pooled = jnp.mean(x_feat, axis=(1, 2))
    h1 = pooled @ p["w1"] + p["b1"]
    h1 = (h1 - p["rm1"]) * (p["g1"] * jax.lax.rsqrt(p["rv1"] + EPS)) + p["be1"]
    h1 = jnp.maximum(h1, 0.0)
    h2 = h1 @ p["w2"] + p["b2"]
    h2 = (h2 - p["rm2"]) * (p["g2"] * jax.lax.rsqrt(p["rv2"] + EPS)) + p["be2"]
    h2 = jnp.maximum(h2, 0.0)
    return h2 @ p["w3"] + p["b3"]


def reference_folded(x_feat, f):
    """Same numerics as the kernel (bf16 input, f32 pooled sum, folded BN)."""
    B, H, W, C = x_feat.shape
    x = x_feat.astype(jnp.bfloat16).astype(jnp.float32)
    pooled = (jnp.sum(x, axis=(1, 2)) * (1.0 / (H * W))).astype(jnp.bfloat16)
    h1 = jnp.dot(pooled, f["w1"], preferred_element_type=jnp.float32) + f["b1"]
    h1 = jnp.maximum(h1, 0.0)
    h2 = jnp.dot(h1.astype(jnp.bfloat16), f["w2"],
                 preferred_element_type=jnp.float32) + f["b2"]
    h2 = jnp.maximum(h2, 0.0)
    out = jnp.dot(h2.astype(jnp.bfloat16), f["w3"],
                  preferred_element_type=jnp.float32) + f["b3"]
    return out[:, :CLASSES]


if __name__ == "__main__":
    key = jax.random.PRNGKey(0)
    k_x, k_p = jax.random.split(key)

    # Backbone (ResNet34[:-3]) output feature map, channels-last: (B, H, W, 256)
    B, H, W, C = 2, 8, 8, 256
    x_feat = jax.random.normal(k_x, (B, H, W, C), jnp.float32)

    raw_params = init_params(k_p)
    folded = fold_params(raw_params)

    out = jax.block_until_ready(net_student_head(x_feat, folded))
    assert out.shape == (B, CLASSES)

    # Tight check against the bf16/folded reference (same numerics).
    ref_b = reference_folded(x_feat, folded)
    assert jnp.allclose(out, ref_b, atol=2e-3, rtol=2e-3), \
        float(jnp.max(jnp.abs(out - ref_b)))

    # Loose semantic check against the original f32 (un-folded) forward pass.
    ref_f = reference_f32(x_feat, raw_params)
    assert jnp.allclose(out, ref_f, atol=5e-2, rtol=5e-2), \
        float(jnp.max(jnp.abs(out - ref_f)))

    print("KERNEL_OK")
</pallas_src>

<mosaic_0001>
module attributes {stable_mosaic.version = 11 : i64} {
  func.func @head_kernel(%arg0: i32, %arg1: i32, %arg2: memref<8x64x256xbf16, #tpu.memory_space<vmem>>, %arg3: memref<256x640xbf16, #tpu.memory_space<vmem>>, %arg4: memref<1x640xf32, #tpu.memory_space<vmem>>, %arg5: memref<640x1024xbf16, #tpu.memory_space<vmem>>, %arg6: memref<1x1024xf32, #tpu.memory_space<vmem>>, %arg7: memref<1024x128xbf16, #tpu.memory_space<vmem>>, %arg8: memref<1x128xf32, #tpu.memory_space<vmem>>, %arg9: memref<8x128xf32, #tpu.memory_space<vmem>>, %arg10: memref<8x256xf32, #tpu.memory_space<vmem>>) attributes {dimension_semantics = [#tpu.dimension_semantics<parallel>, #tpu.dimension_semantics<arbitrary>], iteration_bounds = array<i64: 1, 1>, scalar_prefetch = 0 : i64, scratch_operands = 1 : i64, tpu.core_type = #tpu.core_type<tc>, window_params = [{transform_indices = @transform_0, window_bounds = array<i64: 8, 64, 256>}, {pipeline_mode = #tpu.pipeline_mode<synchronous>, transform_indices = @transform_1, window_bounds = array<i64: 256, 640>}, {pipeline_mode = #tpu.pipeline_mode<synchronous>, transform_indices = @transform_2, window_bounds = array<i64: 1, 640>}, {pipeline_mode = #tpu.pipeline_mode<synchronous>, transform_indices = @transform_3, window_bounds = array<i64: 640, 1024>}, {pipeline_mode = #tpu.pipeline_mode<synchronous>, transform_indices = @transform_4, window_bounds = array<i64: 1, 1024>}, {pipeline_mode = #tpu.pipeline_mode<synchronous>, transform_indices = @transform_5, window_bounds = array<i64: 1024, 128>}, {pipeline_mode = #tpu.pipeline_mode<synchronous>, transform_indices = @transform_6, window_bounds = array<i64: 1, 128>}, {transform_indices = @transform_7, window_bounds = array<i64: 8, 128>}]} {
    %c0_i32 = arith.constant 0 : i32
    %0 = arith.cmpi eq, %arg1, %c0_i32 : i32
    %1 = arith.extui %0 : i1 to i32
    %c0_i32_0 = arith.constant 0 : i32
    %2 = arith.cmpi ne, %1, %c0_i32_0 : i32
    scf.if %2 {
      %cst_9 = arith.constant 0.000000e+00 : f32
      %12 = vector.broadcast %cst_9 : f32 to vector<8x256xf32>
      %c0_10 = arith.constant 0 : index
      %c0_11 = arith.constant 0 : index
      %13 = vector.load %arg10[%c0_10, %c0_11] : memref<8x256xf32, #tpu.memory_space<vmem>>, vector<8x256xf32>
      tpu.vector_store %arg10[%c0_10, %c0_11], %12 {strides = array<i32>} : memref<8x256xf32, #tpu.memory_space<vmem>>, vector<8x256xf32>,
    } else {
    }
    %c0 = arith.constant 0 : index
    %c0_1 = arith.constant 0 : index
    %3 = vector.load %arg10[%c0, %c0_1] : memref<8x256xf32, #tpu.memory_space<vmem>>, vector<8x256xf32>
    %c0_2 = arith.constant 0 : index
    %c0_3 = arith.constant 0 : index
    %c0_4 = arith.constant 0 : index
    %4 = vector.load %arg2[%c0_2, %c0_3, %c0_4] : memref<8x64x256xbf16, #tpu.memory_space<vmem>>, vector<8x64x256xbf16>
    %5 = arith.extf %4 : vector<8x64x256xbf16> to vector<8x64x256xf32>
    %cst = arith.constant dense<0.000000e+00> : vector<8x256xf32>
    %6 = vector.multi_reduction <add>, %5, %cst [1] : vector<8x64x256xf32> to vector<8x256xf32>
    %7 = arith.addf %3, %6 : vector<8x256xf32>
    %c0_5 = arith.constant 0 : index
    %c0_6 = arith.constant 0 : index
    %8 = vector.load %arg10[%c0_5, %c0_6] : memref<8x256xf32, #tpu.memory_space<vmem>>, vector<8x256xf32>
    tpu.vector_store %arg10[%c0_5, %c0_6], %7 {strides = array<i32>} : memref<8x256xf32, #tpu.memory_space<vmem>>, vector<8x256xf32>,
    %c0_i32_7 = arith.constant 0 : i32
    %9 = arith.cmpi eq, %arg1, %c0_i32_7 : i32
    %10 = arith.extui %9 : i1 to i32
    %c0_i32_8 = arith.constant 0 : i32
    %11 = arith.cmpi ne, %10, %c0_i32_8 : i32
    scf.if %11 {
      %c0_9 = arith.constant 0 : index
      %c0_10 = arith.constant 0 : index
      %12 = vector.load %arg10[%c0_9, %c0_10] : memref<8x256xf32, #tpu.memory_space<vmem>>, vector<8x256xf32>
      %cst_11 = arith.constant 1.562500e-02 : f32
      %13 = vector.broadcast %cst_11 : f32 to vector<8x256xf32>
      %14 = arith.mulf %12, %13 : vector<8x256xf32>
      %15 = arith.truncf %14 : vector<8x256xf32> to vector<8x256xbf16>
      %c0_12 = arith.constant 0 : index
      %c0_13 = arith.constant 0 : index
      %16 = vector.load %arg3[%c0_12, %c0_13] : memref<256x640xbf16, #tpu.memory_space<vmem>>, vector<256x640xbf16>
      %cst_14 = arith.constant dense<0.000000e+00> : vector<8x640xf32>
      %17 = tpu.matmul %15, %16, %cst_14 {dimension_numbers = #tpu.dot_dimension_numbers<[1], [0], [0], [1], [0, 0, 1, 1], [], []>} : vector<8x256xbf16>, vector<256x640xbf16>, vector<8x640xf32> -> vector<8x640xf32>
      %c0_15 = arith.constant 0 : index
      %c0_16 = arith.constant 0 : index
      %18 = vector.load %arg4[%c0_15, %c0_16] : memref<1x640xf32, #tpu.memory_space<vmem>>, vector<1x640xf32>
      %19 = vector.broadcast %18 : vector<1x640xf32> to vector<8x640xf32>
      %20 = arith.addf %17, %19 : vector<8x640xf32>
      %cst_17 = arith.constant 0.000000e+00 : f32
      %21 = vector.broadcast %cst_17 : f32 to vector<8x640xf32>
      %22 = arith.maximumf %20, %21 : vector<8x640xf32>
      %23 = arith.truncf %22 : vector<8x640xf32> to vector<8x640xbf16>
      %c0_18 = arith.constant 0 : index
      %c0_19 = arith.constant 0 : index
      %24 = vector.load %arg5[%c0_18, %c0_19] : memref<640x1024xbf16, #tpu.memory_space<vmem>>, vector<640x1024xbf16>
      %cst_20 = arith.constant dense<0.000000e+00> : vector<8x1024xf32>
      %25 = tpu.matmul %23, %24, %cst_20 {dimension_numbers = #tpu.dot_dimension_numbers<[1], [0], [0], [1], [0, 0, 1, 1], [], []>} : vector<8x640xbf16>, vector<640x1024xbf16>, vector<8x1024xf32> -> vector<8x1024xf32>
      %c0_21 = arith.constant 0 : index
      %c0_22 = arith.constant 0 : index
      %26 = vector.load %arg6[%c0_21, %c0_22] : memref<1x1024xf32, #tpu.memory_space<vmem>>, vector<1x1024xf32>
      %27 = vector.broadcast %26 : vector<1x1024xf32> to vector<8x1024xf32>
      %28 = arith.addf %25, %27 : vector<8x1024xf32>
      %cst_23 = arith.constant 0.000000e+00 : f32
      %29 = vector.broadcast %cst_23 : f32 to vector<8x1024xf32>
      %30 = arith.maximumf %28, %29 : vector<8x1024xf32>
      %31 = arith.truncf %30 : vector<8x1024xf32> to vector<8x1024xbf16>
      %c0_24 = arith.constant 0 : index
      %c0_25 = arith.constant 0 : index
      %32 = vector.load %arg7[%c0_24, %c0_25] : memref<1024x128xbf16, #tpu.memory_space<vmem>>, vector<1024x128xbf16>
      %cst_26 = arith.constant dense<0.000000e+00> : vector<8x128xf32>
      %33 = tpu.matmul %31, %32, %cst_26 {dimension_numbers = #tpu.dot_dimension_numbers<[1], [0], [0], [1], [0, 0, 1, 1], [], []>} : vector<8x1024xbf16>, vector<1024x128xbf16>, vector<8x128xf32> -> vector<8x128xf32>
      %c0_27 = arith.constant 0 : index
      %c0_28 = arith.constant 0 : index
      %34 = vector.load %arg8[%c0_27, %c0_28] : memref<1x128xf32, #tpu.memory_space<vmem>>, vector<1x128xf32>
      %35 = vector.broadcast %34 : vector<1x128xf32> to vector<8x128xf32>
      %36 = arith.addf %33, %35 : vector<8x128xf32>
      %c0_29 = arith.constant 0 : index
      %c0_30 = arith.constant 0 : index
      %37 = vector.load %arg9[%c0_29, %c0_30] : memref<8x128xf32, #tpu.memory_space<vmem>>, vector<8x128xf32>
      tpu.vector_store %arg9[%c0_29, %c0_30], %36 {strides = array<i32>} : memref<8x128xf32, #tpu.memory_space<vmem>>, vector<8x128xf32>,
    } else {
    }
    return
  }
  func.func @transform_0(%arg0: i32, %arg1: i32) -> (i32, i32, i32) {
    %c0_i32 = arith.constant 0 : i32
    %c0_i32_0 = arith.constant 0 : i32
    return %arg0, %arg1, %c0_i32 : i32, i32, i32
  }
  func.func @transform_1(%arg0: i32, %arg1: i32) -> (i32, i32) {
    %c0_i32 = arith.constant 0 : i32
    %c0_i32_0 = arith.constant 0 : i32
    %c0_i32_1 = arith.constant 0 : i32
    return %c0_i32, %c0_i32_0 : i32, i32
  }
  func.func @transform_2(%arg0: i32, %arg1: i32) -> (i32, i32) {
    %c0_i32 = arith.constant 0 : i32
    %c0_i32_0 = arith.constant 0 : i32
    %c0_i32_1 = arith.constant 0 : i32
    return %c0_i32, %c0_i32_0 : i32, i32
  }
  func.func @transform_3(%arg0: i32, %arg1: i32) -> (i32, i32) {
    %c0_i32 = arith.constant 0 : i32
    %c0_i32_0 = arith.constant 0 : i32
    %c0_i32_1 = arith.constant 0 : i32
    return %c0_i32, %c0_i32_0 : i32, i32
  }
  func.func @transform_4(%arg0: i32, %arg1: i32) -> (i32, i32) {
    %c0_i32 = arith.constant 0 : i32
    %c0_i32_0 = arith.constant 0 : i32
    %c0_i32_1 = arith.constant 0 : i32
    return %c0_i32, %c0_i32_0 : i32, i32
  }
  func.func @transform_5(%arg0: i32, %arg1: i32) -> (i32, i32) {
    %c0_i32 = arith.constant 0 : i32
    %c0_i32_0 = arith.constant 0 : i32
    %c0_i32_1 = arith.constant 0 : i32
    return %c0_i32, %c0_i32_0 : i32, i32
  }
  func.func @transform_6(%arg0: i32, %arg1: i32) -> (i32, i32) {
    %c0_i32 = arith.constant 0 : i32
    %c0_i32_0 = arith.constant 0 : i32
    %c0_i32_1 = arith.constant 0 : i32
    return %c0_i32, %c0_i32_0 : i32, i32
  }
  func.func @transform_7(%arg0: i32, %arg1: i32) -> (i32, i32) {
    %c0_i32 = arith.constant 0 : i32
    %c0_i32_0 = arith.constant 0 : i32
    return %arg0, %c0_i32 : i32, i32
  }
}

</mosaic_0001>

<llo_original>
// kernel: tpu_custom_call.1
$region0: #{tpu_custom_call.1}
  #allocation0 [shape = 'u32[]', space=smem, size = 0x4, offset = 0x4, fixed_abs, tag = 'smem constant byte address 0x4 - core index']
  #allocation1 [shape = 'u32[144,128]{1,0:T(1,128)}', space=vmem, size = 0x12000, scoped, tag = 'internal scratch']
  #allocation2 [shape = 'f32[8,256]{1,0:T(8,128)}', space=vmem, size = 0x2000, scoped, tag = 'scratch operand']
  %s0 = inlined_call_operand.hbm [shape: bf16[8,64,256], index: 0, kind: input, shape index: {}]
  %s1 = inlined_call_operand.hbm [shape: bf16[256,640], index: 1, kind: input, shape index: {}]
  %s2 = inlined_call_operand.hbm [shape: f32[1,640], index: 2, kind: input, shape index: {}]
  %s3 = inlined_call_operand.hbm [shape: bf16[640,1024], index: 3, kind: input, shape index: {}]
  %s4 = inlined_call_operand.hbm [shape: f32[1,1024], index: 4, kind: input, shape index: {}]
  %s5 = inlined_call_operand.hbm [shape: bf16[1024,128], index: 5, kind: input, shape index: {}]
  %s6 = inlined_call_operand.hbm [shape: f32[1,128], index: 6, kind: input, shape index: {}]
  %s7 = inlined_call_operand.hbm [shape: f32[8,128], index: 7, kind: output, shape index: {}]
  %s8 = sld [smem:[#allocation0]]
  $region74: #{tpu_custom_call.1} parent=0
    _
  %s10 = ssub.s32 1, %s8
  %s11 = scalar_select 0, %s10, %s8
  $region1: #{tpu_custom_call.1} parent=0
    #allocation3 [shape = 'u8[262144]{0}', space=vmem, size = 0x40000, scoped, tag = 'input window, operand 0, single buffered']
    #allocation4 [shape = 's32[1]{0}', space=sflag, size = 0x4, scoped, tag = 'scoped memory for tpu_custom_call.1']
    #allocation5 [shape = 's32[1]{0}', space=sflag, size = 0x4, scoped, tag = 'scoped memory for tpu_custom_call.1']
    #allocation6 [shape = 'u8[327680]{0}', space=vmem, size = 0x50000, scoped, tag = 'input window, operand 1, single buffered']
    #allocation7 [shape = 's32[1]{0}', space=sflag, size = 0x4, scoped, tag = 'scoped memory for tpu_custom_call.1']
    #allocation8 [shape = 'u8[2560]{0}', space=vmem, size = 0xc00, scoped, tag = 'input window, operand 2, single buffered']
    #allocation9 [shape = 'u8[1310720]{0}', space=vmem, size = 0x140000, scoped, tag = 'input window, operand 3, single buffered']
    #allocation10 [shape = 's32[1]{0}', space=sflag, size = 0x4, scoped, tag = 'scoped memory for tpu_custom_call.1']
    #allocation11 [shape = 'u8[4096]{0}', space=vmem, size = 0x1000, scoped, tag = 'input window, operand 4, single buffered']
    #allocation12 [shape = 'u8[262144]{0}', space=vmem, size = 0x40000, scoped, tag = 'input window, operand 5, single buffered']
    #allocation13 [shape = 's32[1]{0}', space=sflag, size = 0x4, scoped, tag = 'scoped memory for tpu_custom_call.1']
    #allocation14 [shape = 'u8[512]{0}', space=vmem, size = 0x400, scoped, tag = 'input window, operand 6, single buffered']
    #allocation15 [shape = 'u8[4096]{0}', space=vmem, size = 0x1000, scoped, tag = 'output window, operand 0, single buffered']
    %12 = vsyncpa [#allocation4], 0
    %13 = vsyncpa [#allocation7], 0
    %14 = vsyncpa [#allocation10], 0
    %15 = vsyncpa [#allocation13], 0
    %16 = vsyncpa [#allocation5], 0
    // Predicated region
    $region2: #{tpu_custom_call.1} parent=1 // pred_check
      _
    $region3: #{tpu_custom_call.1} parent=1 // pred_check_branch
      %18 = sbr.rel (0) target = $region5
    $region4: #{tpu_custom_call.1} parent=1 // pred_region
      %s20 = ssub.s32 8192, 8192
      %21 = vsyncadd [#allocation4], %s20
      %s22 = sshll.u32 [#allocation3], 4
      %s23 = int_to_ptr.vmem [resolvable:$true] %s22
      %28 = dma.hbm_to_vmem [thread:$0]  %s0, 8192, %s23, [#allocation4], 128, 128, 8
    $region5: #{tpu_custom_call.1} parent=1 // pred_fallthru
      _
    // Predicated region
    $region6: #{tpu_custom_call.1} parent=1 // pred_check
      _
    $region7: #{tpu_custom_call.1} parent=1 // pred_check_branch
      %30 = sbr.rel (0) target = $region9
    $region8: #{tpu_custom_call.1} parent=1 // pred_region
      %s32 = ssub.s32 10240, 10240
      %33 = vsyncadd [#allocation7], %s32
      %s34 = sshll.u32 [#allocation6], 4
      %s35 = int_to_ptr.vmem [resolvable:$true] %s34
      %40 = dma.hbm_to_vmem [thread:$0]  %s1, 10240, %s35, [#allocation7], 320, 320, 20
    $region9: #{tpu_custom_call.1} parent=1 // pred_fallthru
      _
    // Predicated region
    $region10: #{tpu_custom_call.1} parent=1 // pred_check
      _
    $region11: #{tpu_custom_call.1} parent=1 // pred_check_branch
      %42 = sbr.rel (0) target = $region13
    $region12: #{tpu_custom_call.1} parent=1 // pred_region
      %s44 = ssub.s32 80, 80
      %45 = vsyncadd [#allocation7], %s44
      %s47 = sshll.u32 [#allocation8], 4
      %s48 = int_to_ptr.vmem [resolvable:$true] %s47
      %50 = dma.hbm_to_vmem [thread:$0]  %s2, 80, %s48, [#allocation7]
    $region13: #{tpu_custom_call.1} parent=1 // pred_fallthru
      _
    // Predicated region
    $region14: #{tpu_custom_call.1} parent=1 // pred_check
      _
    $region15: #{tpu_custom_call.1} parent=1 // pred_check_branch
      %52 = sbr.rel (0) target = $region17
    $region16: #{tpu_custom_call.1} parent=1 // pred_region
      %s54 = ssub.s32 40960, 40960
      %55 = vsyncadd [#allocation10], %s54
      %s56 = sshll.u32 [#allocation9], 4
      %s57 = int_to_ptr.vmem [resolvable:$true] %s56
      %62 = dma.hbm_to_vmem [thread:$0]  %s3, 40960, %s57, [#allocation10], 512, 512, 32
    $region17: #{tpu_custom_call.1} parent=1 // pred_fallthru
      _
    // Predicated region
    $region18: #{tpu_custom_call.1} parent=1 // pred_check
      _
    $region19: #{tpu_custom_call.1} parent=1 // pred_check_branch
      %64 = sbr.rel (0) target = $region21
    $region20: #{tpu_custom_call.1} parent=1 // pred_region
      %s66 = ssub.s32 128, 128
      %67 = vsyncadd [#allocation10], %s66
      %s69 = sshll.u32 [#allocation11], 4
      %s70 = int_to_ptr.vmem [resolvable:$true] %s69
      %72 = dma.hbm_to_vmem [thread:$0]  %s4, 128, %s70, [#allocation10]
    $region21: #{tpu_custom_call.1} parent=1 // pred_fallthru
      _
    // Predicated region
    $region22: #{tpu_custom_call.1} parent=1 // pred_check
      _
    $region23: #{tpu_custom_call.1} parent=1 // pred_check_branch
      %74 = sbr.rel (0) target = $region25
    $region24: #{tpu_custom_call.1} parent=1 // pred_region
      %s76 = ssub.s32 8192, 8192
      %77 = vsyncadd [#allocation13], %s76
      %s78 = sshll.u32 [#allocation12], 4
      %s79 = int_to_ptr.vmem [resolvable:$true] %s78
      %84 = dma.hbm_to_vmem [thread:$0]  %s5, 8192, %s79, [#allocation13], 64, 64, 4
    $region25: #{tpu_custom_call.1} parent=1 // pred_fallthru
      _
    // Predicated region
    $region26: #{tpu_custom_call.1} parent=1 // pred_check
      _
    $region27: #{tpu_custom_call.1} parent=1 // pred_check_branch
      %86 = sbr.rel (0) target = $region29
    $region28: #{tpu_custom_call.1} parent=1 // pred_region
      %s88 = ssub.s32 16, 16
      %89 = vsyncadd [#allocation13], %s88
      %s91 = sshll.u32 [#allocation14], 4
      %s92 = int_to_ptr.vmem [resolvable:$true] %s91
      %94 = dma.hbm_to_vmem [thread:$0]  %s6, 16, %s92, [#allocation13]
    $region29: #{tpu_custom_call.1} parent=1 // pred_fallthru
      _
    // Predicated region
    $region30: #{tpu_custom_call.1} parent=1 // pred_check
      _
    $region31: #{tpu_custom_call.1} parent=1 // pred_check_branch
      %96 = sbr.rel (0) target = $region33
    $region32: #{tpu_custom_call.1} parent=1 // pred_region
      %97 = dma.done [#allocation4], 8192
    $region33: #{tpu_custom_call.1} parent=1 // pred_fallthru
      _
    // Predicated region
    $region34: #{tpu_custom_call.1} parent=1 // pred_check
      _
    $region35: #{tpu_custom_call.1} parent=1 // pred_check_branch
      %99 = sbr.rel (0) target = $region37
    $region36: #{tpu_custom_call.1} parent=1 // pred_region
      %100 = dma.done [#allocation7], 10240
    $region37: #{tpu_custom_call.1} parent=1 // pred_fallthru
      _
    // Predicated region
    $region38: #{tpu_custom_call.1} parent=1 // pred_check
      _
    $region39: #{tpu_custom_call.1} parent=1 // pred_check_branch
      %102 = sbr.rel (0) target = $region41
    $region40: #{tpu_custom_call.1} parent=1 // pred_region
      %103 = dma.done [#allocation7], 80
    $region41: #{tpu_custom_call.1} parent=1 // pred_fallthru
      _
    // Predicated region
    $region42: #{tpu_custom_call.1} parent=1 // pred_check
      _
    $region43: #{tpu_custom_call.1} parent=1 // pred_check_branch
      %105 = sbr.rel (0) target = $region45
    $region44: #{tpu_custom_call.1} parent=1 // pred_region
      %106 = dma.done [#allocation10], 40960
    $region45: #{tpu_custom_call.1} parent=1 // pred_fallthru
      _
    // Predicated region
    $region46: #{tpu_custom_call.1} parent=1 // pred_check
      _
    $region47: #{tpu_custom_call.1} parent=1 // pred_check_branch
      %108 = sbr.rel (0) target = $region49
    $region48: #{tpu_custom_call.1} parent=1 // pred_region
      %109 = dma.done [#allocation10], 128
    $region49: #{tpu_custom_call.1} parent=1 // pred_fallthru
      _
    // Predicated region
    $region50: #{tpu_custom_call.1} parent=1 // pred_check
      _
    $region51: #{tpu_custom_call.1} parent=1 // pred_check_branch
      %111 = sbr.rel (0) target = $region53
    $region52: #{tpu_custom_call.1} parent=1 // pred_region
      %112 = dma.done [#allocation13], 8192
    $region53: #{tpu_custom_call.1} parent=1 // pred_fallthru
      _
    // Predicated region
    $region54: #{tpu_custom_call.1} parent=1 // pred_check
      _
    $region55: #{tpu_custom_call.1} parent=1 // pred_check_branch
      %114 = sbr.rel (0) target = $region57
    $region56: #{tpu_custom_call.1} parent=1 // pred_region
      %115 = dma.done [#allocation13], 16
    $region57: #{tpu_custom_call.1} parent=1 // pred_fallthru
      _
    %p117 = scmp.eq.s32.totalorder 0, 0
    // Predicated region
    $region58: #{tpu_custom_call.1} parent=1 // pred_check
      %p118 = pneg %p117
    $region59: #{tpu_custom_call.1} parent=1 // pred_check_branch
      %120 = sbr.rel (%p118) target = $region61
    $region60: #{tpu_custom_call.1} parent=1 // pred_region
      %121 = vst [vmem:[#allocation2] sm:$0xff] 0.0
      %122 = vst [vmem:[#allocation2 + $0x8] sm:$0xff] 0.0
    $region61: #{tpu_custom_call.1} parent=1 // pred_fallthru
      _
    %v123 = vld [vmem:[#allocation2] sm:$0xff]
    %v124 = vld [vmem:[#allocation2 + $0x8] sm:$0xff]
    %v125 = vld [vmem:[#allocation3] sm:$0xff]
    %v126 = vld [vmem:[#allocation3 + $0x8] sm:$0xff]
    %v127 = vld [vmem:[#allocation3 + $0x10] sm:$0xff]
    %v128 = vld [vmem:[#allocation3 + $0x18] sm:$0xff]
    %v129 = vld [vmem:[#allocation3 + $0x20] sm:$0xff]
    %v130 = vld [vmem:[#allocation3 + $0x28] sm:$0xff]
    %v131 = vld [vmem:[#allocation3 + $0x30] sm:$0xff]
    %v132 = vld [vmem:[#allocation3 + $0x38] sm:$0xff]
    %v133 = vld [vmem:[#allocation3 + $0x40] sm:$0xff]
    %v134 = vld [vmem:[#allocation3 + $0x48] sm:$0xff]
    %v135 = vld [vmem:[#allocation3 + $0x50] sm:$0xff]
    %v136 = vld [vmem:[#allocation3 + $0x58] sm:$0xff]
    %v137 = vld [vmem:[#allocation3 + $0x60] sm:$0xff]
    %v138 = vld [vmem:[#allocation3 + $0x68] sm:$0xff]
    %v139 = vld [vmem:[#allocation3 + $0x70] sm:$0xff]
    %v140 = vld [vmem:[#allocation3 + $0x78] sm:$0xff]
    %v141 = vld [vmem:[#allocation3 + $0x80] sm:$0xff]
    %v142 = vld [vmem:[#allocation3 + $0x88] sm:$0xff]
    %v143 = vld [vmem:[#allocation3 + $0x90] sm:$0xff]
    %v144 = vld [vmem:[#allocation3 + $0x98] sm:$0xff]
    %v145 = vld [vmem:[#allocation3 + $0xa0] sm:$0xff]
    %v146 = vld [vmem:[#allocation3 + $0xa8] sm:$0xff]
    %v147 = vld [vmem:[#allocation3 + $0xb0] sm:$0xff]
    %v148 = vld [vmem:[#allocation3 + $0xb8] sm:$0xff]
    %v149 = vld [vmem:[#allocation3 + $0xc0] sm:$0xff]
    %v150 = vld [vmem:[#allocation3 + $0xc8] sm:$0xff]
    %v151 = vld [vmem:[#allocation3 + $0xd0] sm:$0xff]
    %v152 = vld [vmem:[#allocation3 + $0xd8] sm:$0xff]
    %v153 = vld [vmem:[#allocation3 + $0xe0] sm:$0xff]
    %v154 = vld [vmem:[#allocation3 + $0xe8] sm:$0xff]
    %v155 = vld [vmem:[#allocation3 + $0xf0] sm:$0xff]
    %v156 = vld [vmem:[#allocation3 + $0xf8] sm:$0xff]
    %v157 = vld [vmem:[#allocation3 + $0x100] sm:$0xff]
    %v158 = vld [vmem:[#allocation3 + $0x108] sm:$0xff]
    %v159 = vld [vmem:[#allocation3 + $0x110] sm:$0xff]
    %v160 = vld [vmem:[#allocation3 + $0x118] sm:$0xff]
    %v161 = vld [vmem:[#allocation3 + $0x120] sm:$0xff]
    %v162 = vld [vmem:[#allocation3 + $0x128] sm:$0xff]
    %v163 = vld [vmem:[#allocation3 + $0x130] sm:$0xff]
    %v164 = vld [vmem:[#allocation3 + $0x138] sm:$0xff]
    %v165 = vld [vmem:[#allocation3 + $0x140] sm:$0xff]
    %v166 = vld [vmem:[#allocation3 + $0x148] sm:$0xff]
    %v167 = vld [vmem:[#allocation3 + $0x150] sm:$0xff]
    %v168 = vld [vmem:[#allocation3 + $0x158] sm:$0xff]
    %v169 = vld [vmem:[#allocation3 + $0x160] sm:$0xff]
    %v170 = vld [vmem:[#allocation3 + $0x168] sm:$0xff]
    %v171 = vld [vmem:[#allocation3 + $0x170] sm:$0xff]
    %v172 = vld [vmem:[#allocation3 + $0x178] sm:$0xff]
    %v173 = vld [vmem:[#allocation3 + $0x180] sm:$0xff]
    %v174 = vld [vmem:[#allocation3 + $0x188] sm:$0xff]
    %v175 = vld [vmem:[#allocation3 + $0x190] sm:$0xff]
    %v176 = vld [vmem:[#allocation3 + $0x198] sm:$0xff]
    %v177 = vld [vmem:[#allocation3 + $0x1a0] sm:$0xff]
    %v178 = vld [vmem:[#allocation3 + $0x1a8] sm:$0xff]
    %v179 = vld [vmem:[#allocation3 + $0x1b0] sm:$0xff]
    %v180 = vld [vmem:[#allocation3 + $0x1b8] sm:$0xff]
    %v181 = vld [vmem:[#allocation3 + $0x1c0] sm:$0xff]
    %v182 = vld [vmem:[#allocation3 + $0x1c8] sm:$0xff]
    %v183 = vld [vmem:[#allocation3 + $0x1d0] sm:$0xff]
    %v184 = vld [vmem:[#allocation3 + $0x1d8] sm:$0xff]
    %v185 = vld [vmem:[#allocation3 + $0x1e0] sm:$0xff]
    %v186 = vld [vmem:[#allocation3 + $0x1e8] sm:$0xff]
    %v187 = vld [vmem:[#allocation3 + $0x1f0] sm:$0xff]
    %v188 = vld [vmem:[#allocation3 + $0x1f8] sm:$0xff]
    %v189 = vunpack.c.l.bf16 %v125
    %v190 = vunpack.c.h.bf16 %v125
    %v191 = vunpack.c.l.bf16 %v126
    %v192 = vunpack.c.h.bf16 %v126
    %v193 = vunpack.c.l.bf16 %v127
    %v194 = vunpack.c.h.bf16 %v127
    %v195 = vunpack.c.l.bf16 %v128
    %v196 = vunpack.c.h.bf16 %v128
    %v197 = vunpack.c.l.bf16 %v129
    %v198 = vunpack.c.h.bf16 %v129
    %v199 = vunpack.c.l.bf16 %v130
    %v200 = vunpack.c.h.bf16 %v130
    %v201 = vunpack.c.l.bf16 %v131
    %v202 = vunpack.c.h.bf16 %v131
    %v203 = vunpack.c.l.bf16 %v132
    %v204 = vunpack.c.h.bf16 %v132
    %v205 = vunpack.c.l.bf16 %v133
    %v206 = vunpack.c.h.bf16 %v133
    %v207 = vunpack.c.l.bf16 %v134
    %v208 = vunpack.c.h.bf16 %v134
    %v209 = vunpack.c.l.bf16 %v135
    %v210 = vunpack.c.h.bf16 %v135
    %v211 = vunpack.c.l.bf16 %v136
    %v212 = vunpack.c.h.bf16 %v136
    %v213 = vunpack.c.l.bf16 %v137
    %v214 = vunpack.c.h.bf16 %v137
    %v215 = vunpack.c.l.bf16 %v138
    %v216 = vunpack.c.h.bf16 %v138
    %v217 = vunpack.c.l.bf16 %v139
    %v218 = vunpack.c.h.bf16 %v139
    %v219 = vunpack.c.l.bf16 %v140
    %v220 = vunpack.c.h.bf16 %v140
    %v221 = vunpack.c.l.bf16 %v141
    %v222 = vunpack.c.h.bf16 %v141
    %v223 = vunpack.c.l.bf16 %v142
    %v224 = vunpack.c.h.bf16 %v142
    %v225 = vunpack.c.l.bf16 %v143
    %v226 = vunpack.c.h.bf16 %v143
    %v227 = vunpack.c.l.bf16 %v144
    %v228 = vunpack.c.h.bf16 %v144
    %v229 = vunpack.c.l.bf16 %v145
    %v230 = vunpack.c.h.bf16 %v145
    %v231 = vunpack.c.l.bf16 %v146
    %v232 = vunpack.c.h.bf16 %v146
    %v233 = vunpack.c.l.bf16 %v147
    %v234 = vunpack.c.h.bf16 %v147
    %v235 = vunpack.c.l.bf16 %v148
    %v236 = vunpack.c.h.bf16 %v148
    %v237 = vunpack.c.l.bf16 %v149
    %v238 = vunpack.c.h.bf16 %v149
    %v239 = vunpack.c.l.bf16 %v150
    %v240 = vunpack.c.h.bf16 %v150
    %v241 = vunpack.c.l.bf16 %v151
    %v242 = vunpack.c.h.bf16 %v151
    %v243 = vunpack.c.l.bf16 %v152
    %v244 = vunpack.c.h.bf16 %v152
    %v245 = vunpack.c.l.bf16 %v153
    %v246 = vunpack.c.h.bf16 %v153
    %v247 = vunpack.c.l.bf16 %v154
    %v248 = vunpack.c.h.bf16 %v154
    %v249 = vunpack.c.l.bf16 %v155
    %v250 = vunpack.c.h.bf16 %v155
    %v251 = vunpack.c.l.bf16 %v156
    %v252 = vunpack.c.h.bf16 %v156
    %v253 = vunpack.c.l.bf16 %v157
    %v254 = vunpack.c.h.bf16 %v157
    %v255 = vunpack.c.l.bf16 %v158
    %v256 = vunpack.c.h.bf16 %v158
    %v257 = vunpack.c.l.bf16 %v159
    %v258 = vunpack.c.h.bf16 %v159
    %v259 = vunpack.c.l.bf16 %v160
    %v260 = vunpack.c.h.bf16 %v160
    %v261 = vunpack.c.l.bf16 %v161
    %v262 = vunpack.c.h.bf16 %v161
    %v263 = vunpack.c.l.bf16 %v162
    %v264 = vunpack.c.h.bf16 %v162
    %v265 = vunpack.c.l.bf16 %v163
    %v266 = vunpack.c.h.bf16 %v163
    %v267 = vunpack.c.l.bf16 %v164
    %v268 = vunpack.c.h.bf16 %v164
    %v269 = vunpack.c.l.bf16 %v165
    %v270 = vunpack.c.h.bf16 %v165
    %v271 = vunpack.c.l.bf16 %v166
    %v272 = vunpack.c.h.bf16 %v166
    %v273 = vunpack.c.l.bf16 %v167
    %v274 = vunpack.c.h.bf16 %v167
    %v275 = vunpack.c.l.bf16 %v168
    %v276 = vunpack.c.h.bf16 %v168
    %v277 = vunpack.c.l.bf16 %v169
    %v278 = vunpack.c.h.bf16 %v169
    %v279 = vunpack.c.l.bf16 %v170
    %v280 = vunpack.c.h.bf16 %v170
    %v281 = vunpack.c.l.bf16 %v171
    %v282 = vunpack.c.h.bf16 %v171
    %v283 = vunpack.c.l.bf16 %v172
    %v284 = vunpack.c.h.bf16 %v172
    %v285 = vunpack.c.l.bf16 %v173
    %v286 = vunpack.c.h.bf16 %v173
    %v287 = vunpack.c.l.bf16 %v174
    %v288 = vunpack.c.h.bf16 %v174
    %v289 = vunpack.c.l.bf16 %v175
    %v290 = vunpack.c.h.bf16 %v175
    %v291 = vunpack.c.l.bf16 %v176
    %v292 = vunpack.c.h.bf16 %v176
    %v293 = vunpack.c.l.bf16 %v177
    %v294 = vunpack.c.h.bf16 %v177
    %v295 = vunpack.c.l.bf16 %v178
    %v296 = vunpack.c.h.bf16 %v178
    %v297 = vunpack.c.l.bf16 %v179
    %v298 = vunpack.c.h.bf16 %v179
    %v299 = vunpack.c.l.bf16 %v180
    %v300 = vunpack.c.h.bf16 %v180
    %v301 = vunpack.c.l.bf16 %v181
    %v302 = vunpack.c.h.bf16 %v181
    %v303 = vunpack.c.l.bf16 %v182
    %v304 = vunpack.c.h.bf16 %v182
    %v305 = vunpack.c.l.bf16 %v183
    %v306 = vunpack.c.h.bf16 %v183
    %v307 = vunpack.c.l.bf16 %v184
    %v308 = vunpack.c.h.bf16 %v184
    %v309 = vunpack.c.l.bf16 %v185
    %v310 = vunpack.c.h.bf16 %v185
    %v311 = vunpack.c.l.bf16 %v186
    %v312 = vunpack.c.h.bf16 %v186
    %v313 = vunpack.c.l.bf16 %v187
    %v314 = vunpack.c.h.bf16 %v187
    %v315 = vunpack.c.l.bf16 %v188
    %v316 = vunpack.c.h.bf16 %v188
    %v317 = vadd.f32 %v189, %v191
    %v318 = vadd.f32 %v317, %v193
    %v319 = vadd.f32 %v318, %v195
    %v320 = vadd.f32 %v319, %v197
    %v321 = vadd.f32 %v320, %v199
    %v322 = vadd.f32 %v321, %v201
    %v323 = vadd.f32 %v322, %v203
    %v324 = vrot.slane %v323, 4
    %v325 = vadd.f32 %v323, %v324
    %v326 = vrot.slane %v325, 2
    %v327 = vadd.f32 %v325, %v326
    %v328 = vrot.slane %v327, 1
    %v329 = vadd.f32 %v327, %v328
    %v330 = vadd.f32 %v190, %v192
    %v331 = vadd.f32 %v330, %v194
    %v332 = vadd.f32 %v331, %v196
    %v333 = vadd.f32 %v332, %v198
    %v334 = vadd.f32 %v333, %v200
    %v335 = vadd.f32 %v334, %v202
    %v336 = vadd.f32 %v335, %v204
    %v337 = vrot.slane %v336, 4
    %v338 = vadd.f32 %v336, %v337
    %v339 = vrot.slane %v338, 2
    %v340 = vadd.f32 %v338, %v339
    %v341 = vrot.slane %v340, 1
    %v342 = vadd.f32 %v340, %v341
    %v343 = vadd.f32 %v205, %v207
    %v344 = vadd.f32 %v343, %v209
    %v345 = vadd.f32 %v344, %v211
    %v346 = vadd.f32 %v345, %v213
    %v347 = vadd.f32 %v346, %v215
    %v348 = vadd.f32 %v347, %v217
    %v349 = vadd.f32 %v348, %v219
    %v350 = vrot.slane %v349, 4
    %v351 = vadd.f32 %v349, %v350
    %v352 = vrot.slane %v351, 2
    %v353 = vadd.f32 %v351, %v352
    %v354 = vrot.slane %v353, 1
    %v355 = vadd.f32 %v353, %v354
    %v356 = vadd.f32 %v206, %v208
    %v357 = vadd.f32 %v356, %v210
    %v358 = vadd.f32 %v357, %v212
    %v359 = vadd.f32 %v358, %v214
    %v360 = vadd.f32 %v359, %v216
    %v361 = vadd.f32 %v360, %v218
    %v362 = vadd.f32 %v361, %v220
    %v363 = vrot.slane %v362, 4
    %v364 = vadd.f32 %v362, %v363
    %v365 = vrot.slane %v364, 2
    %v366 = vadd.f32 %v364, %v365
    %v367 = vrot.slane %v366, 1
    %v368 = vadd.f32 %v366, %v367
    %v369 = vadd.f32 %v221, %v223
    %v370 = vadd.f32 %v369, %v225
    %v371 = vadd.f32 %v370, %v227
    %v372 = vadd.f32 %v371, %v229
    %v373 = vadd.f32 %v372, %v231
    %v374 = vadd.f32 %v373, %v233
    %v375 = vadd.f32 %v374, %v235
    %v376 = vrot.slane %v375, 4
    %v377 = vadd.f32 %v375, %v376
    %v378 = vrot.slane %v377, 2
    %v379 = vadd.f32 %v377, %v378
    %v380 = vrot.slane %v379, 1
    %v381 = vadd.f32 %v379, %v380
    %v382 = vadd.f32 %v222, %v224
    %v383 = vadd.f32 %v382, %v226
    %v384 = vadd.f32 %v383, %v228
    %v385 = vadd.f32 %v384, %v230
    %v386 = vadd.f32 %v385, %v232
    %v387 = vadd.f32 %v386, %v234
    %v388 = vadd.f32 %v387, %v236
    %v389 = vrot.slane %v388, 4
    %v390 = vadd.f32 %v388, %v389
    %v391 = vrot.slane %v390, 2
    %v392 = vadd.f32 %v390, %v391
    %v393 = vrot.slane %v392, 1
    %v394 = vadd.f32 %v392, %v393
    %v395 = vadd.f32 %v237, %v239
    %v396 = vadd.f32 %v395, %v241
    %v397 = vadd.f32 %v396, %v243
    %v398 = vadd.f32 %v397, %v245
    %v399 = vadd.f32 %v398, %v247
    %v400 = vadd.f32 %v399, %v249
    %v401 = vadd.f32 %v400, %v251
    %v402 = vrot.slane %v401, 4
    %v403 = vadd.f32 %v401, %v402
    %v404 = vrot.slane %v403, 2
    %v405 = vadd.f32 %v403, %v404
    %v406 = vrot.slane %v405, 1
    %v407 = vadd.f32 %v405, %v406
    %v408 = vadd.f32 %v238, %v240
    %v409 = vadd.f32 %v408, %v242
    %v410 = vadd.f32 %v409, %v244
    %v411 = vadd.f32 %v410, %v246
    %v412 = vadd.f32 %v411, %v248
    %v413 = vadd.f32 %v412, %v250
    %v414 = vadd.f32 %v413, %v252
    %v415 = vrot.slane %v414, 4
    %v416 = vadd.f32 %v414, %v415
    %v417 = vrot.slane %v416, 2
    %v418 = vadd.f32 %v416, %v417
    %v419 = vrot.slane %v418, 1
    %v420 = vadd.f32 %v418, %v419
    %v421 = vadd.f32 %v253, %v255
    %v422 = vadd.f32 %v421, %v257
    %v423 = vadd.f32 %v422, %v259
    %v424 = vadd.f32 %v423, %v261
    %v425 = vadd.f32 %v424, %v263
    %v426 = vadd.f32 %v425, %v265
    %v427 = vadd.f32 %v426, %v267
    %v428 = vrot.slane %v427, 4
    %v429 = vadd.f32 %v427, %v428
    %v430 = vrot.slane %v429, 2
    %v431 = vadd.f32 %v429, %v430
    %v432 = vrot.slane %v431, 1
    %v433 = vadd.f32 %v431, %v432
    %v434 = vadd.f32 %v254, %v256
    %v435 = vadd.f32 %v434, %v258
    %v436 = vadd.f32 %v435, %v260
    %v437 = vadd.f32 %v436, %v262
    %v438 = vadd.f32 %v437, %v264
    %v439 = vadd.f32 %v438, %v266
    %v440 = vadd.f32 %v439, %v268
    %v441 = vrot.slane %v440, 4
    %v442 = vadd.f32 %v440, %v441
    %v443 = vrot.slane %v442, 2
    %v444 = vadd.f32 %v442, %v443
    %v445 = vrot.slane %v444, 1
    %v446 = vadd.f32 %v444, %v445
    %v447 = vadd.f32 %v269, %v271
    %v448 = vadd.f32 %v447, %v273
    %v449 = vadd.f32 %v448, %v275
    %v450 = vadd.f32 %v449, %v277
    %v451 = vadd.f32 %v450, %v279
    %v452 = vadd.f32 %v451, %v281
    %v453 = vadd.f32 %v452, %v283
    %v454 = vrot.slane %v453, 4
    %v455 = vadd.f32 %v453, %v454
    %v456 = vrot.slane %v455, 2
    %v457 = vadd.f32 %v455, %v456
    %v458 = vrot.slane %v457, 1
    %v459 = vadd.f32 %v457, %v458
    %v460 = vadd.f32 %v270, %v272
    %v461 = vadd.f32 %v460, %v274
    %v462 = vadd.f32 %v461, %v276
    %v463 = vadd.f32 %v462, %v278
    %v464 = vadd.f32 %v463, %v280
    %v465 = vadd.f32 %v464, %v282
    %v466 = vadd.f32 %v465, %v284
    %v467 = vrot.slane %v466, 4
    %v468 = vadd.f32 %v466, %v467
    %v469 = vrot.slane %v468, 2
    %v470 = vadd.f32 %v468, %v469
    %v471 = vrot.slane %v470, 1
    %v472 = vadd.f32 %v470, %v471
    %v473 = vadd.f32 %v285, %v287
    %v474 = vadd.f32 %v473, %v289
    %v475 = vadd.f32 %v474, %v291
    %v476 = vadd.f32 %v475, %v293
    %v477 = vadd.f32 %v476, %v295
    %v478 = vadd.f32 %v477, %v297
    %v479 = vadd.f32 %v478, %v299
    %v480 = vrot.slane %v479, 4
    %v481 = vadd.f32 %v479, %v480
    %v482 = vrot.slane %v481, 2
    %v483 = vadd.f32 %v481, %v482
    %v484 = vrot.slane %v483, 1
    %v485 = vadd.f32 %v483, %v484
    %v486 = vadd.f32 %v286, %v288
    %v487 = vadd.f32 %v486, %v290
    %v488 = vadd.f32 %v487, %v292
    %v489 = vadd.f32 %v488, %v294
    %v490 = vadd.f32 %v489, %v296
    %v491 = vadd.f32 %v490, %v298
    %v492 = vadd.f32 %v491, %v300
    %v493 = vrot.slane %v492, 4
    %v494 = vadd.f32 %v492, %v493
    %v495 = vrot.slane %v494, 2
    %v496 = vadd.f32 %v494, %v495
    %v497 = vrot.slane %v496, 1
    %v498 = vadd.f32 %v496, %v497
    %v499 = vadd.f32 %v301, %v303
    %v500 = vadd.f32 %v499, %v305
    %v501 = vadd.f32 %v500, %v307
    %v502 = vadd.f32 %v501, %v309
    %v503 = vadd.f32 %v502, %v311
    %v504 = vadd.f32 %v503, %v313
    %v505 = vadd.f32 %v504, %v315
    %v506 = vrot.slane %v505, 4
    %v507 = vadd.f32 %v505, %v506
    %v508 = vrot.slane %v507, 2
    %v509 = vadd.f32 %v507, %v508
    %v510 = vrot.slane %v509, 1
    %v511 = vadd.f32 %v509, %v510
    %v512 = vadd.f32 %v302, %v304
    %v513 = vadd.f32 %v512, %v306
    %v514 = vadd.f32 %v513, %v308
    %v515 = vadd.f32 %v514, %v310
    %v516 = vadd.f32 %v515, %v312
    %v517 = vadd.f32 %v516, %v314
    %v518 = vadd.f32 %v517, %v316
    %v519 = vrot.slane %v518, 4
    %v520 = vadd.f32 %v518, %v519
    %v521 = vrot.slane %v520, 2
    %v522 = vadd.f32 %v520, %v521
    %v523 = vrot.slane %v522, 1
    %v524 = vadd.f32 %v522, %v523
    %vm541 = vcmask 1041409
    %v542 = vsel %vm541, %v355, %v329
    %vm543 = vcmask 1042434
    %v544 = vsel %vm543, %v381, %v542
    %vm545 = vcmask 1043459
    %v546 = vsel %vm545, %v407, %v544
    %vm547 = vcmask 1044484
    %v548 = vsel %vm547, %v433, %v546
    %vm549 = vcmask 1045509
    %v550 = vsel %vm549, %v459, %v548
    %vm551 = vcmask 1046534
    %v552 = vsel %vm551, %v485, %v550
    %vm553 = vcmask 1047559
    %v554 = vsel %vm553, %v511, %v552
    %v555 = vsel %vm541, %v368, %v342
    %v556 = vsel %vm543, %v394, %v555
    %v557 = vsel %vm545, %v420, %v556
    %v558 = vsel %vm547, %v446, %v557
    %v559 = vsel %vm549, %v472, %v558
    %v560 = vsel %vm551, %v498, %v559
    %v561 = vsel %vm553, %v524, %v560
    %v564 = vadd.f32 %v123, %v554
    %v565 = vadd.f32 %v124, %v561
    %566 = vst [vmem:[#allocation2] sm:$0xff] %v564
    %567 = vst [vmem:[#allocation2 + $0x8] sm:$0xff] %v565
    // Predicated region
    $region62: #{tpu_custom_call.1} parent=1 // pred_check
      %p568 = pneg %p117
    $region63: #{tpu_custom_call.1} parent=1 // pred_check_branch
      %570 = sbr.rel (%p568) target = $region65
    $region64: #{tpu_custom_call.1} parent=1 // pred_region
      %v571 = vld [vmem:[#allocation2] sm:$0xff]
      %v572 = vld [vmem:[#allocation2 + $0x8] sm:$0xff]
      %v573 = vmul.f32 %v571, 0.015625
      %v574 = vmul.f32 %v572, 0.015625
      %v575 = vpack.c.bf16 %v573, %v573
      %v576 = vpack.c.bf16 %v574, %v574
      %v577 = vld [vmem:[#allocation6] sm:$0xff]
      %v578 = vld [vmem:[#allocation6 + $0x8] sm:$0xff]
      %v579 = vld [vmem:[#allocation6 + $0x10] sm:$0xf]
      %v580 = vld [vmem:[#allocation6 + $0x14] sm:$0xff]
      %v581 = vld [vmem:[#allocation6 + $0x1c] sm:$0xff]
      %v582 = vld [vmem:[#allocation6 + $0x24] sm:$0xf]
      %v583 = vld [vmem:[#allocation6 + $0x28] sm:$0xff]
      %v584 = vld [vmem:[#allocation6 + $0x30] sm:$0xff]
      %v585 = vld [vmem:[#allocation6 + $0x38] sm:$0xf]
      %v586 = vld [vmem:[#allocation6 + $0x3c] sm:$0xff]
      %v587 = vld [vmem:[#allocation6 + $0x44] sm:$0xff]
      %v588 = vld [vmem:[#allocation6 + $0x4c] sm:$0xf]
      %v589 = vld [vmem:[#allocation6 + $0x50] sm:$0xff]
      %v590 = vld [vmem:[#allocation6 + $0x58] sm:$0xff]
      %v591 = vld [vmem:[#allocation6 + $0x60] sm:$0xf]
      %v592 = vld [vmem:[#allocation6 + $0x64] sm:$0xff]
      %v593 = vld [vmem:[#allocation6 + $0x6c] sm:$0xff]
      %v594 = vld [vmem:[#allocation6 + $0x74] sm:$0xf]
      %v595 = vld [vmem:[#allocation6 + $0x78] sm:$0xff]
      %v596 = vld [vmem:[#allocation6 + $0x80] sm:$0xff]
      %v597 = vld [vmem:[#allocation6 + $0x88] sm:$0xf]
      %v598 = vld [vmem:[#allocation6 + $0x8c] sm:$0xff]
      %v599 = vld [vmem:[#allocation6 + $0x94] sm:$0xff]
      %v600 = vld [vmem:[#allocation6 + $0x9c] sm:$0xf]
      %v601 = vld [vmem:[#allocation6 + $0xa0] sm:$0xff]
      %v602 = vld [vmem:[#allocation6 + $0xa8] sm:$0xff]
      %v603 = vld [vmem:[#allocation6 + $0xb0] sm:$0xf]
      %v604 = vld [vmem:[#allocation6 + $0xb4] sm:$0xff]
      %v605 = vld [vmem:[#allocation6 + $0xbc] sm:$0xff]
      %v606 = vld [vmem:[#allocation6 + $0xc4] sm:$0xf]
      %v607 = vld [vmem:[#allocation6 + $0xc8] sm:$0xff]
      %v608 = vld [vmem:[#allocation6 + $0xd0] sm:$0xff]
      %v609 = vld [vmem:[#allocation6 + $0xd8] sm:$0xf]
      %v610 = vld [vmem:[#allocation6 + $0xdc] sm:$0xff]
      %v611 = vld [vmem:[#allocation6 + $0xe4] sm:$0xff]
      %v612 = vld [vmem:[#allocation6 + $0xec] sm:$0xf]
      %v613 = vld [vmem:[#allocation6 + $0xf0] sm:$0xff]
      %v614 = vld [vmem:[#allocation6 + $0xf8] sm:$0xff]
      %v615 = vld [vmem:[#allocation6 + $0x100] sm:$0xf]
      %v616 = vld [vmem:[#allocation6 + $0x104] sm:$0xff]
      %v617 = vld [vmem:[#allocation6 + $0x10c] sm:$0xff]
      %v618 = vld [vmem:[#allocation6 + $0x114] sm:$0xf]
      %v619 = vld [vmem:[#allocation6 + $0x118] sm:$0xff]
      %v620 = vld [vmem:[#allocation6 + $0x120] sm:$0xff]
      %v621 = vld [vmem:[#allocation6 + $0x128] sm:$0xf]
      %v622 = vld [vmem:[#allocation6 + $0x12c] sm:$0xff]
      %v623 = vld [vmem:[#allocation6 + $0x134] sm:$0xff]
      %v624 = vld [vmem:[#allocation6 + $0x13c] sm:$0xf]
      %v625 = vld [vmem:[#allocation6 + $0x140] sm:$0xff]
      %v626 = vld [vmem:[#allocation6 + $0x148] sm:$0xff]
      %v627 = vld [vmem:[#allocation6 + $0x150] sm:$0xf]
      %v628 = vld [vmem:[#allocation6 + $0x154] sm:$0xff]
      %v629 = vld [vmem:[#allocation6 + $0x15c] sm:$0xff]
      %v630 = vld [vmem:[#allocation6 + $0x164] sm:$0xf]
      %v631 = vld [vmem:[#allocation6 + $0x168] sm:$0xff]
      %v632 = vld [vmem:[#allocation6 + $0x170] sm:$0xff]
      %v633 = vld [vmem:[#allocation6 + $0x178] sm:$0xf]
      %v634 = vld [vmem:[#allocation6 + $0x17c] sm:$0xff]
      %v635 = vld [vmem:[#allocation6 + $0x184] sm:$0xff]
      %v636 = vld [vmem:[#allocation6 + $0x18c] sm:$0xf]
      %v637 = vld [vmem:[#allocation6 + $0x190] sm:$0xff]
      %v638 = vld [vmem:[#allocation6 + $0x198] sm:$0xff]
      %v639 = vld [vmem:[#allocation6 + $0x1a0] sm:$0xf]
      %v640 = vld [vmem:[#allocation6 + $0x1a4] sm:$0xff]
      %v641 = vld [vmem:[#allocation6 + $0x1ac] sm:$0xff]
      %v642 = vld [vmem:[#allocation6 + $0x1b4] sm:$0xf]
      %v643 = vld [vmem:[#allocation6 + $0x1b8] sm:$0xff]
      %v644 = vld [vmem:[#allocation6 + $0x1c0] sm:$0xff]
      %v645 = vld [vmem:[#allocation6 + $0x1c8] sm:$0xf]
      %v646 = vld [vmem:[#allocation6 + $0x1cc] sm:$0xff]
      %v647 = vld [vmem:[#allocation6 + $0x1d4] sm:$0xff]
      %v648 = vld [vmem:[#allocation6 + $0x1dc] sm:$0xf]
      %v649 = vld [vmem:[#allocation6 + $0x1e0] sm:$0xff]
      %v650 = vld [vmem:[#allocation6 + $0x1e8] sm:$0xff]
      %v651 = vld [vmem:[#allocation6 + $0x1f0] sm:$0xf]
      %v652 = vld [vmem:[#allocation6 + $0x1f4] sm:$0xff]
      %v653 = vld [vmem:[#allocation6 + $0x1fc] sm:$0xff]
      %v654 = vld [vmem:[#allocation6 + $0x204] sm:$0xf]
      %v655 = vld [vmem:[#allocation6 + $0x208] sm:$0xff]
      %v656 = vld [vmem:[#allocation6 + $0x210] sm:$0xff]
      %v657 = vld [vmem:[#allocation6 + $0x218] sm:$0xf]
      %v658 = vld [vmem:[#allocation6 + $0x21c] sm:$0xff]
      %v659 = vld [vmem:[#allocation6 + $0x224] sm:$0xff]
      %v660 = vld [vmem:[#allocation6 + $0x22c] sm:$0xf]
      %v661 = vld [vmem:[#allocation6 + $0x230] sm:$0xff]
      %v662 = vld [vmem:[#allocation6 + $0x238] sm:$0xff]
      %v663 = vld [vmem:[#allocation6 + $0x240] sm:$0xf]
      %v664 = vld [vmem:[#allocation6 + $0x244] sm:$0xff]
      %v665 = vld [vmem:[#allocation6 + $0x24c] sm:$0xff]
      %v666 = vld [vmem:[#allocation6 + $0x254] sm:$0xf]
      %v667 = vld [vmem:[#allocation6 + $0x258] sm:$0xff]
      %v668 = vld [vmem:[#allocation6 + $0x260] sm:$0xff]
      %v669 = vld [vmem:[#allocation6 + $0x268] sm:$0xf]
      %v670 = vld [vmem:[#allocation6 + $0x26c] sm:$0xff]
      %v671 = vld [vmem:[#allocation6 + $0x274] sm:$0xff]
      %v672 = vld [vmem:[#allocation6 + $0x27c] sm:$0xf]
      %v673 = vld [vmem:[#allocation8] sm:$0x1f]
      %v675 = vlaneseq
      %v676 = vshrl.u32 %v675, 7
      %v677 = vsub.s32 0, %v676
      %v678 = vrot.slane %v673, %v677
      %v679 = vlaneseq
      %v680 = vshrl.u32 %v679, 7
      %v681 = vsub.s32 1, %v680
      %v682 = vrot.slane %v673, %v681
      %v683 = vlaneseq
      %v684 = vshrl.u32 %v683, 7
      %v685 = vsub.s32 2, %v684
      %v686 = vrot.slane %v673, %v685
      %v687 = vlaneseq
      %v688 = vshrl.u32 %v687, 7
      %v689 = vsub.s32 3, %v688
      %v690 = vrot.slane %v673, %v689
      %v691 = vlaneseq
      %v692 = vshrl.u32 %v691, 7
      %v693 = vsub.s32 4, %v692
      %v694 = vrot.slane %v673, %v693
      %v796 = vunpack.c.l.b16 %v577
      %v797 = vunpack.c.h.b16 %v577
      %v798 = vunpack.c.l.b16 %v578
      %v799 = vunpack.c.h.b16 %v578
      %v800 = vunpack.c.l.b16 %v579
      %v801 = vunpack.c.l.b16 %v580
      %v802 = vunpack.c.h.b16 %v580
      %v803 = vunpack.c.l.b16 %v581
      %v804 = vunpack.c.h.b16 %v581
      %v805 = vunpack.c.l.b16 %v582
      %v806 = vunpack.c.l.b16 %v583
      %v807 = vunpack.c.h.b16 %v583
      %v808 = vunpack.c.l.b16 %v584
      %v809 = vunpack.c.h.b16 %v584
      %v810 = vunpack.c.l.b16 %v585
      %v811 = vunpack.c.l.b16 %v586
      %v812 = vunpack.c.h.b16 %v586
      %v813 = vunpack.c.l.b16 %v587
      %v814 = vunpack.c.h.b16 %v587
      %v815 = vunpack.c.l.b16 %v588
      %v816 = vunpack.c.l.b16 %v589
      %v817 = vunpack.c.h.b16 %v589
      %v818 = vunpack.c.l.b16 %v590
      %v819 = vunpack.c.h.b16 %v590
      %v820 = vunpack.c.l.b16 %v591
      %v821 = vunpack.c.l.b16 %v592
      %v822 = vunpack.c.h.b16 %v592
      %v823 = vunpack.c.l.b16 %v593
      %v824 = vunpack.c.h.b16 %v593
      %v825 = vunpack.c.l.b16 %v594
      %v826 = vunpack.c.l.b16 %v595
      %v827 = vunpack.c.h.b16 %v595
      %v828 = vunpack.c.l.b16 %v596
      %v829 = vunpack.c.h.b16 %v596
      %v830 = vunpack.c.l.b16 %v597
      %v831 = vunpack.c.l.b16 %v598
      %v832 = vunpack.c.h.b16 %v598
      %v833 = vunpack.c.l.b16 %v599
      %v834 = vunpack.c.h.b16 %v599
      %v835 = vunpack.c.l.b16 %v600
      %v836 = vunpack.c.l.b16 %v601
      %v837 = vunpack.c.h.b16 %v601
      %v838 = vunpack.c.l.b16 %v602
      %v839 = vunpack.c.h.b16 %v602
      %v840 = vunpack.c.l.b16 %v603
      %v841 = vunpack.c.l.b16 %v604
      %v842 = vunpack.c.h.b16 %v604
      %v843 = vunpack.c.l.b16 %v605
      %v844 = vunpack.c.h.b16 %v605
      %v845 = vunpack.c.l.b16 %v606
      %v846 = vunpack.c.l.b16 %v607
      %v847 = vunpack.c.h.b16 %v607
      %v848 = vunpack.c.l.b16 %v608
      %v849 = vunpack.c.h.b16 %v608
      %v850 = vunpack.c.l.b16 %v609
      %v851 = vunpack.c.l.b16 %v610
      %v852 = vunpack.c.h.b16 %v610
      %v853 = vunpack.c.l.b16 %v611
      %v854 = vunpack.c.h.b16 %v611
      %v855 = vunpack.c.l.b16 %v612
      %v856 = vunpack.c.l.b16 %v613
      %v857 = vunpack.c.h.b16 %v613
      %v858 = vunpack.c.l.b16 %v614
      %v859 = vunpack.c.h.b16 %v614
      %v860 = vunpack.c.l.b16 %v615
      %v861 = vunpack.c.l.b16 %v616
      %v862 = vunpack.c.h.b16 %v616
      %v863 = vunpack.c.l.b16 %v617
      %v864 = vunpack.c.h.b16 %v617
      %v865 = vunpack.c.l.b16 %v618
      %v866 = vunpack.c.l.b16 %v619
      %v867 = vunpack.c.h.b16 %v619
      %v868 = vunpack.c.l.b16 %v620
      %v869 = vunpack.c.h.b16 %v620
      %v870 = vunpack.c.l.b16 %v621
      %v871 = vunpack.c.l.b16 %v622
      %v872 = vunpack.c.h.b16 %v622
      %v873 = vunpack.c.l.b16 %v623
      %v874 = vunpack.c.h.b16 %v623
      %v875 = vunpack.c.l.b16 %v624
      %v876 = vunpack.c.l.b16 %v625
      %v877 = vunpack.c.h.b16 %v625
      %v878 = vunpack.c.l.b16 %v626
      %v879 = vunpack.c.h.b16 %v626
      %v880 = vunpack.c.l.b16 %v627
      %v881 = vunpack.c.l.b16 %v628
      %v882 = vunpack.c.h.b16 %v628
      %v883 = vunpack.c.l.b16 %v629
      %v884 = vunpack.c.h.b16 %v629
      %v885 = vunpack.c.l.b16 %v630
      %v886 = vunpack.c.l.b16 %v631
      %v887 = vunpack.c.h.b16 %v631
      %v888 = vunpack.c.l.b16 %v632
      %v889 = vunpack.c.h.b16 %v632
      %v890 = vunpack.c.l.b16 %v633
      %v891 = vunpack.c.l.b16 %v634
      %v892 = vunpack.c.h.b16 %v634
      %v893 = vunpack.c.l.b16 %v635
      %v894 = vunpack.c.h.b16 %v635
      %v895 = vunpack.c.l.b16 %v636
      %v896 = vunpack.c.l.b16 %v637
      %v897 = vunpack.c.h.b16 %v637
      %v898 = vunpack.c.l.b16 %v638
      %v899 = vunpack.c.h.b16 %v638
      %v900 = vunpack.c.l.b16 %v639
      %v901 = vunpack.c.l.b16 %v640
      %v902 = vunpack.c.h.b16 %v640
      %v903 = vunpack.c.l.b16 %v641
      %v904 = vunpack.c.h.b16 %v641
      %v905 = vunpack.c.l.b16 %v642
      %v906 = vunpack.c.l.b16 %v643
      %v907 = vunpack.c.h.b16 %v643
      %v908 = vunpack.c.l.b16 %v644
      %v909 = vunpack.c.h.b16 %v644
      %v910 = vunpack.c.l.b16 %v645
      %v911 = vunpack.c.l.b16 %v646
      %v912 = vunpack.c.h.b16 %v646
      %v913 = vunpack.c.l.b16 %v647
      %v914 = vunpack.c.h.b16 %v647
      %v915 = vunpack.c.l.b16 %v648
      %v916 = vunpack.c.l.b16 %v649
      %v917 = vunpack.c.h.b16 %v649
      %v918 = vunpack.c.l.b16 %v650
      %v919 = vunpack.c.h.b16 %v650
      %v920 = vunpack.c.l.b16 %v651
      %v921 = vunpack.c.l.b16 %v652
      %v922 = vunpack.c.h.b16 %v652
      %v923 = vunpack.c.l.b16 %v653
      %v924 = vunpack.c.h.b16 %v653
      %v925 = vunpack.c.l.b16 %v654
      %v926 = vunpack.c.l.b16 %v655
      %v927 = vunpack.c.h.b16 %v655
      %v928 = vunpack.c.l.b16 %v656
      %v929 = vunpack.c.h.b16 %v656
      %v930 = vunpack.c.l.b16 %v657
      %v931 = vunpack.c.l.b16 %v658
      %v932 = vunpack.c.h.b16 %v658
      %v933 = vunpack.c.l.b16 %v659
      %v934 = vunpack.c.h.b16 %v659
      %v935 = vunpack.c.l.b16 %v660
      %v936 = vunpack.c.l.b16 %v661
      %v937 = vunpack.c.h.b16 %v661
      %v938 = vunpack.c.l.b16 %v662
      %v939 = vunpack.c.h.b16 %v662
      %v940 = vunpack.c.l.b16 %v663
      %v941 = vunpack.c.l.b16 %v664
      %v942 = vunpack.c.h.b16 %v664
      %v943 = vunpack.c.l.b16 %v665
      %v944 = vunpack.c.h.b16 %v665
      %v945 = vunpack.c.l.b16 %v666
      %v946 = vunpack.c.l.b16 %v667
      %v947 = vunpack.c.h.b16 %v667
      %v948 = vunpack.c.l.b16 %v668
      %v949 = vunpack.c.h.b16 %v668
      %v950 = vunpack.c.l.b16 %v669
      %v951 = vunpack.c.l.b16 %v670
      %v952 = vunpack.c.h.b16 %v670
      %v953 = vunpack.c.l.b16 %v671
      %v954 = vunpack.c.h.b16 %v671
      %v955 = vunpack.c.l.b16 %v672
      %v956 = vpack.c.b16 %v801, %v796
      %v957 = vpack.c.b16 %v802, %v797
      %v958 = vpack.c.b16 %v803, %v798
      %v959 = vpack.c.b16 %v804, %v799
      %v960 = vpack.c.b16 %v805, %v800
      %v961 = vpack.c.b16 %v811, %v806
      %v962 = vpack.c.b16 %v812, %v807
      %v963 = vpack.c.b16 %v813, %v808
      %v964 = vpack.c.b16 %v814, %v809
      %v965 = vpack.c.b16 %v815, %v810
      %v966 = vpack.c.b16 %v821, %v816
      %v967 = vpack.c.b16 %v822, %v817
      %v968 = vpack.c.b16 %v823, %v818
      %v969 = vpack.c.b16 %v824, %v819
      %v970 = vpack.c.b16 %v825, %v820
      %v971 = vpack.c.b16 %v831, %v826
      %v972 = vpack.c.b16 %v832, %v827
      %v973 = vpack.c.b16 %v833, %v828
      %v974 = vpack.c.b16 %v834, %v829
      %v975 = vpack.c.b16 %v835, %v830
      %v976 = vpack.c.b16 %v841, %v836
      %v977 = vpack.c.b16 %v842, %v837
      %v978 = vpack.c.b16 %v843, %v838
      %v979 = vpack.c.b16 %v844, %v839
      %v980 = vpack.c.b16 %v845, %v840
      %v981 = vpack.c.b16 %v851, %v846
      %v982 = vpack.c.b16 %v852, %v847
      %v983 = vpack.c.b16 %v853, %v848
      %v984 = vpack.c.b16 %v854, %v849
      %v985 = vpack.c.b16 %v855, %v850
      %v986 = vpack.c.b16 %v861, %v856
      %v987 = vpack.c.b16 %v862, %v857
      %v988 = vpack.c.b16 %v863, %v858
      %v989 = vpack.c.b16 %v864, %v859
      %v990 = vpack.c.b16 %v865, %v860
      %v991 = vpack.c.b16 %v871, %v866
      %v992 = vpack.c.b16 %v872, %v867
      %v993 = vpack.c.b16 %v873, %v868
      %v994 = vpack.c.b16 %v874, %v869
      %v995 = vpack.c.b16 %v875, %v870
      %v996 = vpack.c.b16 %v881, %v876
      %v997 = vpack.c.b16 %v882, %v877
      %v998 = vpack.c.b16 %v883, %v878
      %v999 = vpack.c.b16 %v884, %v879
      %v1000 = vpack.c.b16 %v885, %v880
      %v1001 = vpack.c.b16 %v891, %v886
      %v1002 = vpack.c.b16 %v892, %v887
      %v1003 = vpack.c.b16 %v893, %v888
      %v1004 = vpack.c.b16 %v894, %v889
      %v1005 = vpack.c.b16 %v895, %v890
      %v1006 = vpack.c.b16 %v901, %v896
      %v1007 = vpack.c.b16 %v902, %v897
      %v1008 = vpack.c.b16 %v903, %v898
      %v1009 = vpack.c.b16 %v904, %v899
      %v1010 = vpack.c.b16 %v905, %v900
      %v1011 = vpack.c.b16 %v911, %v906
      %v1012 = vpack.c.b16 %v912, %v907
      %v1013 = vpack.c.b16 %v913, %v908
      %v1014 = vpack.c.b16 %v914, %v909
      %v1015 = vpack.c.b16 %v915, %v910
      %v1016 = vpack.c.b16 %v921, %v916
      %v1017 = vpack.c.b16 %v922, %v917
      %v1018 = vpack.c.b16 %v923, %v918
      %v1019 = vpack.c.b16 %v924, %v919
      %v1020 = vpack.c.b16 %v925, %v920
      %v1021 = vpack.c.b16 %v931, %v926
      %v1022 = vpack.c.b16 %v932, %v927
      %v1023 = vpack.c.b16 %v933, %v928
      %v1024 = vpack.c.b16 %v934, %v929
      %v1025 = vpack.c.b16 %v935, %v930
      %v1026 = vpack.c.b16 %v941, %v936
      %v1027 = vpack.c.b16 %v942, %v937
      %v1028 = vpack.c.b16 %v943, %v938
      %v1029 = vpack.c.b16 %v944, %v939
      %v1030 = vpack.c.b16 %v945, %v940
      %v1031 = vpack.c.b16 %v951, %v946
      %v1032 = vpack.c.b16 %v952, %v947
      %v1033 = vpack.c.b16 %v953, %v948
      %v1034 = vpack.c.b16 %v954, %v949
      %v1035 = vpack.c.b16 %v955, %v950
      %1116 = vmatprep.subr.bf16.mxu0 %v957
      %1117 = vmatpush1.bf16.msra.mxu0 %v956
      %1118 = vmatprep.subr.bf16.mxu0 %v962
      %1119 = vmatpush1.bf16.msra.mxu0 %v961
      %1120 = vmatprep.subr.bf16.mxu0 %v967
      %1121 = vmatpush1.bf16.msra.mxu0 %v966
      %1122 = vmatprep.subr.bf16.mxu0 %v972
      %1123 = vmatpush1.bf16.msra.mxu0 %v971
      %1124 = vmatprep.subr.bf16.mxu0 %v977
      %1125 = vmatpush1.bf16.msra.mxu0 %v976
      %1126 = vmatprep.subr.bf16.mxu0 %v982
      %1127 = vmatpush1.bf16.msra.mxu0 %v981
      %1128 = vmatprep.subr.bf16.mxu0 %v987
      %1129 = vmatpush1.bf16.msra.mxu0 %v986
      %1130 = vmatprep.subr.bf16.mxu0 %v992
      %1131 = vmatpush1.bf16.msra.mxu0 %v991
      %1132 = vmatprep.subr.bf16.mxu0 %v997
      %1133 = vmatpush1.bf16.msra.mxu0 %v996
      %1134 = vmatprep.subr.bf16.mxu0 %v1002
      %1135 = vmatpush1.bf16.msra.mxu0 %v1001
      %1136 = vmatprep.subr.bf16.mxu0 %v1007
      %1137 = vmatpush1.bf16.msra.mxu0 %v1006
      %1138 = vmatprep.subr.bf16.mxu0 %v1012
      %1139 = vmatpush1.bf16.msra.mxu0 %v1011
      %1140 = vmatprep.subr.bf16.mxu0 %v1017
      %1141 = vmatpush1.bf16.msra.mxu0 %v1016
      %1142 = vmatprep.subr.bf16.mxu0 %v1022
      %1143 = vmatpush1.bf16.msra.mxu0 %v1021
      %1144 = vmatprep.subr.bf16.mxu0 %v1027
      %1145 = vmatpush1.bf16.msra.mxu0 %v1026
      %1146 = vmatprep.subr.bf16.mxu0 %v1032
      %1147 = vmatpush1.bf16.msra.mxu0 %v1031
      %1148 = vmatprep.mubr.bf16.mxu0 %v576
      %1149 = vmatmul.mubr.bf16.gmra.mrb[0].mxu0 %v575
      %v1150 = vpop.f32.mrb[0].mxu0
      %v1151 = vadd.f32 %v678, %v1150
      %v1152 = vpop.f32.mrb[0].mxu0
      %v1153 = vadd.f32 %v682, %v1152
      %v1154 = vpop.f32.mrb[0].mxu0
      %v1155 = vpop.f32.mrb[0].mxu0
      %1156 = vdwg.mxu0
      %1157 = vmatprep.subr.bf16.mxu0 %v959
      %1158 = vmatpush1.bf16.msra.mxu0 %v958
      %1159 = vmatprep.subr.bf16.mxu0 %v964
      %1160 = vmatpush1.bf16.msra.mxu0 %v963
      %1161 = vmatprep.subr.bf16.mxu0 %v969
      %1162 = vmatpush1.bf16.msra.mxu0 %v968
      %1163 = vmatprep.subr.bf16.mxu0 %v974
      %1164 = vmatpush1.bf16.msra.mxu0 %v973
      %1165 = vmatprep.subr.bf16.mxu0 %v979
      %1166 = vmatpush1.bf16.msra.mxu0 %v978
      %1167 = vmatprep.subr.bf16.mxu0 %v984
      %1168 = vmatpush1.bf16.msra.mxu0 %v983
      %1169 = vmatprep.subr.bf16.mxu0 %v989
      %1170 = vmatpush1.bf16.msra.mxu0 %v988
      %1171 = vmatprep.subr.bf16.mxu0 %v994
      %1172 = vmatpush1.bf16.msra.mxu0 %v993
      %1173 = vmatprep.subr.bf16.mxu0 %v999
      %1174 = vmatpush1.bf16.msra.mxu0 %v998
      %1175 = vmatprep.subr.bf16.mxu0 %v1004
      %1176 = vmatpush1.bf16.msra.mxu0 %v1003
      %1177 = vmatprep.subr.bf16.mxu0 %v1009
      %1178 = vmatpush1.bf16.msra.mxu0 %v1008
      %1179 = vmatprep.subr.bf16.mxu0 %v1014
      %1180 = vmatpush1.bf16.msra.mxu0 %v1013
      %1181 = vmatprep.subr.bf16.mxu0 %v1019
      %1182 = vmatpush1.bf16.msra.mxu0 %v1018
      %1183 = vmatprep.subr.bf16.mxu0 %v1024
      %1184 = vmatpush1.bf16.msra.mxu0 %v1023
      %1185 = vmatprep.subr.bf16.mxu0 %v1029
      %1186 = vmatpush1.bf16.msra.mxu0 %v1028
      %1187 = vmatprep.subr.bf16.mxu0 %v1034
      %1188 = vmatpush1.bf16.msra.mxu0 %v1033
      %1189 = vmatprep.mubr.bf16.mxu0 %v576
      %1190 = vmatmul.mubr.bf16.gmra.mrb[0].mxu0 %v575
      %v1191 = vpop.f32.mrb[0].mxu0
      %v1192 = vadd.f32 %v686, %v1191
      %v1193 = vpop.f32.mrb[0].mxu0
      %v1194 = vadd.f32 %v690, %v1193
      %v1195 = vpop.f32.mrb[0].mxu0
      %v1196 = vpop.f32.mrb[0].mxu0
      %1197 = vdwg.mxu0
      %1198 = vmatprep.subr.bf16.mxu0 0
      %1199 = vmatpush1.bf16.msra.mxu0 %v960
      %1200 = vmatprep.subr.bf16.mxu0 0
      %1201 = vmatpush1.bf16.msra.mxu0 %v965
      %1202 = vmatprep.subr.bf16.mxu0 0
      %1203 = vmatpush1.bf16.msra.mxu0 %v970
      %1204 = vmatprep.subr.bf16.mxu0 0
      %1205 = vmatpush1.bf16.msra.mxu0 %v975
      %1206 = vmatprep.subr.bf16.mxu0 0
      %1207 = vmatpush1.bf16.msra.mxu0 %v980
      %1208 = vmatprep.subr.bf16.mxu0 0
      %1209 = vmatpush1.bf16.msra.mxu0 %v985
      %1210 = vmatprep.subr.bf16.mxu0 0
      %1211 = vmatpush1.bf16.msra.mxu0 %v990
      %1212 = vmatprep.subr.bf16.mxu0 0
      %1213 = vmatpush1.bf16.msra.mxu0 %v995
      %1214 = vmatprep.subr.bf16.mxu0 0
      %1215 = vmatpush1.bf16.msra.mxu0 %v1000
      %1216 = vmatprep.subr.bf16.mxu0 0
      %1217 = vmatpush1.bf16.msra.mxu0 %v1005
      %1218 = vmatprep.subr.bf16.mxu0 0
      %1219 = vmatpush1.bf16.msra.mxu0 %v1010
      %1220 = vmatprep.subr.bf16.mxu0 0
      %1221 = vmatpush1.bf16.msra.mxu0 %v1015
      %1222 = vmatprep.subr.bf16.mxu0 0
      %1223 = vmatpush1.bf16.msra.mxu0 %v1020
      %1224 = vmatprep.subr.bf16.mxu0 0
      %1225 = vmatpush1.bf16.msra.mxu0 %v1025
      %1226 = vmatprep.subr.bf16.mxu0 0
      %1227 = vmatpush1.bf16.msra.mxu0 %v1030
      %1228 = vmatprep.subr.bf16.mxu0 0
      %1229 = vmatpush1.bf16.msra.mxu0 %v1035
      %1230 = vmatprep.mubr.bf16.mxu0 %v576
      %1231 = vmatmul.mubr.bf16.gmra.mrb[0].mxu0 %v575
      %v1232 = vpop.f32.mrb[0].mxu0
      %v1233 = vadd.f32 %v694, %v1232
      %v1234 = vpop.f32.mrb[0].mxu0
      %v1235 = vpop.f32.mrb[0].mxu0
      %v1236 = vpop.f32.mrb[0].mxu0
      %1237 = vdwg.mxu0
      %v1238 = vmax.f32 %v1151, 0.0
      %v1239 = vmax.f32 %v1153, 0.0
      %v1240 = vmax.f32 %v1192, 0.0
      %v1241 = vmax.f32 %v1194, 0.0
      %v1242 = vmax.f32 %v1233, 0.0
      %v1243 = vpack.c.bf16 %v1238, %v1238
      %v1244 = vpack.c.bf16 %v1239, %v1239
      %v1245 = vpack.c.bf16 %v1240, %v1240
      %v1246 = vpack.c.bf16 %v1241, %v1241
      %v1247 = vpack.c.bf16 %v1242, %v1242
      %v1248 = vld [vmem:[#allocation9] sm:$0xff]
      %v1249 = vld [vmem:[#allocation9 + $0x8] sm:$0xff]
      %v1250 = vld [vmem:[#allocation9 + $0x10] sm:$0xff]
      %v1251 = vld [vmem:[#allocation9 + $0x18] sm:$0xff]
      %v1252 = vld [vmem:[#allocation9 + $0x20] sm:$0xff]
      %v1253 = vld [vmem:[#allocation9 + $0x28] sm:$0xff]
      %v1254 = vld [vmem:[#allocation9 + $0x30] sm:$0xff]
      %v1255 = vld [vmem:[#allocation9 + $0x38] sm:$0xff]
      %v1256 = vld [vmem:[#allocation9 + $0x40] sm:$0xff]
      %v1257 = vld [vmem:[#allocation9 + $0x48] sm:$0xff]
      %v1258 = vld [vmem:[#allocation9 + $0x50] sm:$0xff]
      %v1259 = vld [vmem:[#allocation9 + $0x58] sm:$0xff]
      %v1260 = vld [vmem:[#allocation9 + $0x60] sm:$0xff]
      %v1261 = vld [vmem:[#allocation9 + $0x68] sm:$0xff]
      %v1262 = vld [vmem:[#allocation9 + $0x70] sm:$0xff]
      %v1263 = vld [vmem:[#allocation9 + $0x78] sm:$0xff]
      %v1264 = vld [vmem:[#allocation9 + $0x80] sm:$0xff]
      %v1265 = vld [vmem:[#allocation9 + $0x88] sm:$0xff]
      %v1266 = vld [vmem:[#allocation9 + $0x90] sm:$0xff]
      %v1267 = vld [vmem:[#allocation9 + $0x98] sm:$0xff]
      %v1268 = vld [vmem:[#allocation9 + $0xa0] sm:$0xff]
      %v1269 = vld [vmem:[#allocation9 + $0xa8] sm:$0xff]
      %v1270 = vld [vmem:[#allocation9 + $0xb0] sm:$0xff]
      %v1271 = vld [vmem:[#allocation9 + $0xb8] sm:$0xff]
      %v1272 = vld [vmem:[#allocation9 + $0xc0] sm:$0xff]
      %v1273 = vld [vmem:[#allocation9 + $0xc8] sm:$0xff]
      %v1274 = vld [vmem:[#allocation9 + $0xd0] sm:$0xff]
      %v1275 = vld [vmem:[#allocation9 + $0xd8] sm:$0xff]
      %v1276 = vld [vmem:[#allocation9 + $0xe0] sm:$0xff]
      %v1277 = vld [vmem:[#allocation9 + $0xe8] sm:$0xff]
      %v1278 = vld [vmem:[#allocation9 + $0xf0] sm:$0xff]
      %v1279 = vld [vmem:[#allocation9 + $0xf8] sm:$0xff]
      %v1280 = vld [vmem:[#allocation9 + $0x100] sm:$0xff]
      %v1281 = vld [vmem:[#allocation9 + $0x108] sm:$0xff]
      %v1282 = vld [vmem:[#allocation9 + $0x110] sm:$0xff]
      %v1283 = vld [vmem:[#allocation9 + $0x118] sm:$0xff]
      %v1284 = vld [vmem:[#allocation9 + $0x120] sm:$0xff]
      %v1285 = vld [vmem:[#allocation9 + $0x128] sm:$0xff]
      %v1286 = vld [vmem:[#allocation9 + $0x130] sm:$0xff]
      %v1287 = vld [vmem:[#allocation9 + $0x138] sm:$0xff]
      %v1288 = vld [vmem:[#allocation9 + $0x140] sm:$0xff]
      %v1289 = vld [vmem:[#allocation9 + $0x148] sm:$0xff]
      %v1290 = vld [vmem:[#allocation9 + $0x150] sm:$0xff]
      %v1291 = vld [vmem:[#allocation9 + $0x158] sm:$0xff]
      %v1292 = vld [vmem:[#allocation9 + $0x160] sm:$0xff]
      %v1293 = vld [vmem:[#allocation9 + $0x168] sm:$0xff]
      %v1294 = vld [vmem:[#allocation9 + $0x170] sm:$0xff]
      %v1295 = vld [vmem:[#allocation9 + $0x178] sm:$0xff]
      %v1296 = vld [vmem:[#allocation9 + $0x180] sm:$0xff]
      %v1297 = vld [vmem:[#allocation9 + $0x188] sm:$0xff]
      %v1298 = vld [vmem:[#allocation9 + $0x190] sm:$0xff]
      %v1299 = vld [vmem:[#allocation9 + $0x198] sm:$0xff]
      %v1300 = vld [vmem:[#allocation9 + $0x1a0] sm:$0xff]
      %v1301 = vld [vmem:[#allocation9 + $0x1a8] sm:$0xff]
      %v1302 = vld [vmem:[#allocation9 + $0x1b0] sm:$0xff]
      %v1303 = vld [vmem:[#allocation9 + $0x1b8] sm:$0xff]
      %v1304 = vld [vmem:[#allocation9 + $0x1c0] sm:$0xff]
      %v1305 = vld [vmem:[#allocation9 + $0x1c8] sm:$0xff]
      %v1306 = vld [vmem:[#allocation9 + $0x1d0] sm:$0xff]
      %v1307 = vld [vmem:[#allocation9 + $0x1d8] sm:$0xff]
      %v1308 = vld [vmem:[#allocation9 + $0x1e0] sm:$0xff]
      %v1309 = vld [vmem:[#allocation9 + $0x1e8] sm:$0xff]
      %v1310 = vld [vmem:[#allocation9 + $0x1f0] sm:$0xff]
      %v1311 = vld [vmem:[#allocation9 + $0x1f8] sm:$0xff]
      %v1312 = vld [vmem:[#allocation9 + $0x200] sm:$0xff]
      %v1313 = vld [vmem:[#allocation9 + $0x208] sm:$0xff]
      %v1314 = vld [vmem:[#allocation9 + $0x210] sm:$0xff]
      %v1315 = vld [vmem:[#allocation9 + $0x218] sm:$0xff]
      %v1316 = vld [vmem:[#allocation9 + $0x220] sm:$0xff]
      %v1317 = vld [vmem:[#allocation9 + $0x228] sm:$0xff]
      %v1318 = vld [vmem:[#allocation9 + $0x230] sm:$0xff]
      %v1319 = vld [vmem:[#allocation9 + $0x238] sm:$0xff]
      %v1320 = vld [vmem:[#allocation9 + $0x240] sm:$0xff]
      %v1321 = vld [vmem:[#allocation9 + $0x248] sm:$0xff]
      %v1322 = vld [vmem:[#allocation9 + $0x250] sm:$0xff]
      %v1323 = vld [vmem:[#allocation9 + $0x258] sm:$0xff]
      %v1324 = vld [vmem:[#allocation9 + $0x260] sm:$0xff]
      %v1325 = vld [vmem:[#allocation9 + $0x268] sm:$0xff]
      %v1326 = vld [vmem:[#allocation9 + $0x270] sm:$0xff]
      %v1327 = vld [vmem:[#allocation9 + $0x278] sm:$0xff]
      %v1328 = vld [vmem:[#allocation9 + $0x280] sm:$0xff]
      %v1329 = vld [vmem:[#allocation9 + $0x288] sm:$0xff]
      %v1330 = vld [vmem:[#allocation9 + $0x290] sm:$0xff]
      %v1331 = vld [vmem:[#allocation9 + $0x298] sm:$0xff]
      %v1332 = vld [vmem:[#allocation9 + $0x2a0] sm:$0xff]
      %v1333 = vld [vmem:[#allocation9 + $0x2a8] sm:$0xff]
      %v1334 = vld [vmem:[#allocation9 + $0x2b0] sm:$0xff]
      %v1335 = vld [vmem:[#allocation9 + $0x2b8] sm:$0xff]
      %v1336 = vld [vmem:[#allocation9 + $0x2c0] sm:$0xff]
      %v1337 = vld [vmem:[#allocation9 + $0x2c8] sm:$0xff]
      %v1338 = vld [vmem:[#allocation9 + $0x2d0] sm:$0xff]
      %v1339 = vld [vmem:[#allocation9 + $0x2d8] sm:$0xff]
      %v1340 = vld [vmem:[#allocation9 + $0x2e0] sm:$0xff]
      %v1341 = vld [vmem:[#allocation9 + $0x2e8] sm:$0xff]
      %v1342 = vld [vmem:[#allocation9 + $0x2f0] sm:$0xff]
      %v1343 = vld [vmem:[#allocation9 + $0x2f8] sm:$0xff]
      %v1344 = vld [vmem:[#allocation9 + $0x300] sm:$0xff]
      %v1345 = vld [vmem:[#allocation9 + $0x308] sm:$0xff]
      %v1346 = vld [vmem:[#allocation9 + $0x310] sm:$0xff]
      %v1347 = vld [vmem:[#allocation9 + $0x318] sm:$0xff]
      %v1348 = vld [vmem:[#allocation9 + $0x320] sm:$0xff]
      %v1349 = vld [vmem:[#allocation9 + $0x328] sm:$0xff]
      %v1350 = vld [vmem:[#allocation9 + $0x330] sm:$0xff]
      %v1351 = vld [vmem:[#allocation9 + $0x338] sm:$0xff]
      %v1352 = vld [vmem:[#allocation9 + $0x340] sm:$0xff]
      %v1353 = vld [vmem:[#allocation9 + $0x348] sm:$0xff]
      %v1354 = vld [vmem:[#allocation9 + $0x350] sm:$0xff]
      %v1355 = vld [vmem:[#allocation9 + $0x358] sm:$0xff]
      %v1356 = vld [vmem:[#allocation9 + $0x360] sm:$0xff]
      %v1357 = vld [vmem:[#allocation9 + $0x368] sm:$0xff]
      %v1358 = vld [vmem:[#allocation9 + $0x370] sm:$0xff]
      %v1359 = vld [vmem:[#allocation9 + $0x378] sm:$0xff]
      %v1360 = vld [vmem:[#allocation9 + $0x380] sm:$0xff]
      %v1361 = vld [vmem:[#allocation9 + $0x388] sm:$0xff]
      %v1362 = vld [vmem:[#allocation9 + $0x390] sm:$0xff]
      %v1363 = vld [vmem:[#allocation9 + $0x398] sm:$0xff]
      %v1364 = vld [vmem:[#allocation9 + $0x3a0] sm:$0xff]
      %v1365 = vld [vmem:[#allocation9 + $0x3a8] sm:$0xff]
      %v1366 = vld [vmem:[#allocation9 + $0x3b0] sm:$0xff]
      %v1367 = vld [vmem:[#allocation9 + $0x3b8] sm:$0xff]
      %v1368 = vld [vmem:[#allocation9 + $0x3c0] sm:$0xff]
      %v1369 = vld [vmem:[#allocation9 + $0x3c8] sm:$0xff]
      %v1370 = vld [vmem:[#allocation9 + $0x3d0] sm:$0xff]
      %v1371 = vld [vmem:[#allocation9 + $0x3d8] sm:$0xff]
      %v1372 = vld [vmem:[#allocation9 + $0x3e0] sm:$0xff]
      %v1373 = vld [vmem:[#allocation9 + $0x3e8] sm:$0xff]
      %v1374 = vld [vmem:[#allocation9 + $0x3f0] sm:$0xff]
      %v1375 = vld [vmem:[#allocation9 + $0x3f8] sm:$0xff]
      %v1376 = vld [vmem:[#allocation9 + $0x400] sm:$0xff]
      %v1377 = vld [vmem:[#allocation9 + $0x408] sm:$0xff]
      %v1378 = vld [vmem:[#allocation9 + $0x410] sm:$0xff]
      %v1379 = vld [vmem:[#allocation9 + $0x418] sm:$0xff]
      %v1380 = vld [vmem:[#allocation9 + $0x420] sm:$0xff]
      %v1381 = vld [vmem:[#allocation9 + $0x428] sm:$0xff]
      %v1382 = vld [vmem:[#allocation9 + $0x430] sm:$0xff]
      %v1383 = vld [vmem:[#allocation9 + $0x438] sm:$0xff]
      %v1384 = vld [vmem:[#allocation9 + $0x440] sm:$0xff]
      %v1385 = vld [vmem:[#allocation9 + $0x448] sm:$0xff]
      %v1386 = vld [vmem:[#allocation9 + $0x450] sm:$0xff]
      %v1387 = vld [vmem:[#allocation9 + $0x458] sm:$0xff]
      %v1388 = vld [vmem:[#allocation9 + $0x460] sm:$0xff]
      %v1389 = vld [vmem:[#allocation9 + $0x468] sm:$0xff]
      %v1390 = vld [vmem:[#allocation9 + $0x470] sm:$0xff]
      %v1391 = vld [vmem:[#allocation9 + $0x478] sm:$0xff]
      %v1392 = vld [vmem:[#allocation9 + $0x480] sm:$0xff]
      %v1393 = vld [vmem:[#allocation9 + $0x488] sm:$0xff]
      %v1394 = vld [vmem:[#allocation9 + $0x490] sm:$0xff]
      %v1395 = vld [vmem:[#allocation9 + $0x498] sm:$0xff]
      %v1396 = vld [vmem:[#allocation9 + $0x4a0] sm:$0xff]
      %v1397 = vld [vmem:[#allocation9 + $0x4a8] sm:$0xff]
      %v1398 = vld [vmem:[#allocation9 + $0x4b0] sm:$0xff]
      %v1399 = vld [vmem:[#allocation9 + $0x4b8] sm:$0xff]
      %v1400 = vld [vmem:[#allocation9 + $0x4c0] sm:$0xff]
      %v1401 = vld [vmem:[#allocation9 + $0x4c8] sm:$0xff]
      %v1402 = vld [vmem:[#allocation9 + $0x4d0] sm:$0xff]
      %v1403 = vld [vmem:[#allocation9 + $0x4d8] sm:$0xff]
      %v1404 = vld [vmem:[#allocation9 + $0x4e0] sm:$0xff]
      %v1405 = vld [vmem:[#allocation9 + $0x4e8] sm:$0xff]
      %v1406 = vld [vmem:[#allocation9 + $0x4f0] sm:$0xff]
      %v1407 = vld [vmem:[#allocation9 + $0x4f8] sm:$0xff]
      %v1408 = vld [vmem:[#allocation9 + $0x500] sm:$0xff]
      %v1409 = vld [vmem:[#allocation9 + $0x508] sm:$0xff]
      %v1410 = vld [vmem:[#allocation9 + $0x510] sm:$0xff]
      %v1411 = vld [vmem:[#allocation9 + $0x518] sm:$0xff]
      %v1412 = vld [vmem:[#allocation9 + $0x520] sm:$0xff]
      %v1413 = vld [vmem:[#allocation9 + $0x528] sm:$0xff]
      %v1414 = vld [vmem:[#allocation9 + $0x530] sm:$0xff]
      %v1415 = vld [vmem:[#allocation9 + $0x538] sm:$0xff]
      %v1416 = vld [vmem:[#allocation9 + $0x540] sm:$0xff]
      %v1417 = vld [vmem:[#allocation9 + $0x548] sm:$0xff]
      %v1418 = vld [vmem:[#allocation9 + $0x550] sm:$0xff]
      %v1419 = vld [vmem:[#allocation9 + $0x558] sm:$0xff]
      %v1420 = vld [vmem:[#allocation9 + $0x560] sm:$0xff]
      %v1421 = vld [vmem:[#allocation9 + $0x568] sm:$0xff]
      %v1422 = vld [vmem:[#allocation9 + $0x570] sm:$0xff]
      %v1423 = vld [vmem:[#allocation9 + $0x578] sm:$0xff]
      %v1424 = vld [vmem:[#allocation9 + $0x580] sm:$0xff]
      %v1425 = vld [vmem:[#allocation9 + $0x588] sm:$0xff]
      %v1426 = vld [vmem:[#allocation9 + $0x590] sm:$0xff]
      %v1427 = vld [vmem:[#allocation9 + $0x598] sm:$0xff]
      %v1428 = vld [vmem:[#allocation9 + $0x5a0] sm:$0xff]
      %v1429 = vld [vmem:[#allocation9 + $0x5a8] sm:$0xff]
      %v1430 = vld [vmem:[#allocation9 + $0x5b0] sm:$0xff]
      %v1431 = vld [vmem:[#allocation9 + $0x5b8] sm:$0xff]
      %v1432 = vld [vmem:[#allocation9 + $0x5c0] sm:$0xff]
      %v1433 = vld [vmem:[#allocation9 + $0x5c8] sm:$0xff]
      %v1434 = vld [vmem:[#allocation9 + $0x5d0] sm:$0xff]
      %v1435 = vld [vmem:[#allocation9 + $0x5d8] sm:$0xff]
      %v1436 = vld [vmem:[#allocation9 + $0x5e0] sm:$0xff]
      %v1437 = vld [vmem:[#allocation9 + $0x5e8] sm:$0xff]
      %v1438 = vld [vmem:[#allocation9 + $0x5f0] sm:$0xff]
      %v1439 = vld [vmem:[#allocation9 + $0x5f8] sm:$0xff]
      %v1440 = vld [vmem:[#allocation9 + $0x600] sm:$0xff]
      %v1441 = vld [vmem:[#allocation9 + $0x608] sm:$0xff]
      %v1442 = vld [vmem:[#allocation9 + $0x610] sm:$0xff]
      %v1443 = vld [vmem:[#allocation9 + $0x618] sm:$0xff]
      %v1444 = vld [vmem:[#allocation9 + $0x620] sm:$0xff]
      %v1445 = vld [vmem:[#allocation9 + $0x628] sm:$0xff]
      %v1446 = vld [vmem:[#allocation9 + $0x630] sm:$0xff]
      %v1447 = vld [vmem:[#allocation9 + $0x638] sm:$0xff]
      %v1448 = vld [vmem:[#allocation9 + $0x640] sm:$0xff]
      %v1449 = vld [vmem:[#allocation9 + $0x648] sm:$0xff]
      %v1450 = vld [vmem:[#allocation9 + $0x650] sm:$0xff]
      %v1451 = vld [vmem:[#allocation9 + $0x658] sm:$0xff]
      %v1452 = vld [vmem:[#allocation9 + $0x660] sm:$0xff]
      %v1453 = vld [vmem:[#allocation9 + $0x668] sm:$0xff]
      %v1454 = vld [vmem:[#allocation9 + $0x670] sm:$0xff]
      %v1455 = vld [vmem:[#allocation9 + $0x678] sm:$0xff]
      %v1456 = vld [vmem:[#allocation9 + $0x680] sm:$0xff]
      %v1457 = vld [vmem:[#allocation9 + $0x688] sm:$0xff]
      %v1458 = vld [vmem:[#allocation9 + $0x690] sm:$0xff]
      %v1459 = vld [vmem:[#allocation9 + $0x698] sm:$0xff]
      %v1460 = vld [vmem:[#allocation9 + $0x6a0] sm:$0xff]
      %v1461 = vld [vmem:[#allocation9 + $0x6a8] sm:$0xff]
      %v1462 = vld [vmem:[#allocation9 + $0x6b0] sm:$0xff]
      %v1463 = vld [vmem:[#allocation9 + $0x6b8] sm:$0xff]
      %v1464 = vld [vmem:[#allocation9 + $0x6c0] sm:$0xff]
      %v1465 = vld [vmem:[#allocation9 + $0x6c8] sm:$0xff]
      %v1466 = vld [vmem:[#allocation9 + $0x6d0] sm:$0xff]
      %v1467 = vld [vmem:[#allocation9 + $0x6d8] sm:$0xff]
      %v1468 = vld [vmem:[#allocation9 + $0x6e0] sm:$0xff]
      %v1469 = vld [vmem:[#allocation9 + $0x6e8] sm:$0xff]
      %v1470 = vld [vmem:[#allocation9 + $0x6f0] sm:$0xff]
      %v1471 = vld [vmem:[#allocation9 + $0x6f8] sm:$0xff]
      %v1472 = vld [vmem:[#allocation9 + $0x700] sm:$0xff]
      %v1473 = vld [vmem:[#allocation9 + $0x708] sm:$0xff]
      %v1474 = vld [vmem:[#allocation9 + $0x710] sm:$0xff]
      %v1475 = vld [vmem:[#allocation9 + $0x718] sm:$0xff]
      %v1476 = vld [vmem:[#allocation9 + $0x720] sm:$0xff]
      %v1477 = vld [vmem:[#allocation9 + $0x728] sm:$0xff]
      %v1478 = vld [vmem:[#allocation9 + $0x730] sm:$0xff]
      %v1479 = vld [vmem:[#allocation9 + $0x738] sm:$0xff]
      %v1480 = vld [vmem:[#allocation9 + $0x740] sm:$0xff]
      %v1481 = vld [vmem:[#allocation9 + $0x748] sm:$0xff]
      %v1482 = vld [vmem:[#allocation9 + $0x750] sm:$0xff]
      %v1483 = vld [vmem:[#allocation9 + $0x758] sm:$0xff]
      %v1484 = vld [vmem:[#allocation9 + $0x760] sm:$0xff]
      %v1485 = vld [vmem:[#allocation9 + $0x768] sm:$0xff]
      %v1486 = vld [vmem:[#allocation9 + $0x770] sm:$0xff]
      %v1487 = vld [vmem:[#allocation9 + $0x778] sm:$0xff]
      %v1488 = vld [vmem:[#allocation9 + $0x780] sm:$0xff]
      %v1489 = vld [vmem:[#allocation9 + $0x788] sm:$0xff]
      %v1490 = vld [vmem:[#allocation9 + $0x790] sm:$0xff]
      %v1491 = vld [vmem:[#allocation9 + $0x798] sm:$0xff]
      %v1492 = vld [vmem:[#allocation9 + $0x7a0] sm:$0xff]
      %v1493 = vld [vmem:[#allocation9 + $0x7a8] sm:$0xff]
      %v1494 = vld [vmem:[#allocation9 + $0x7b0] sm:$0xff]
      %v1495 = vld [vmem:[#allocation9 + $0x7b8] sm:$0xff]
      %v1496 = vld [vmem:[#allocation9 + $0x7c0] sm:$0xff]
      %v1497 = vld [vmem:[#allocation9 + $0x7c8] sm:$0xff]
      %v1498 = vld [vmem:[#allocation9 + $0x7d0] sm:$0xff]
      %v1499 = vld [vmem:[#allocation9 + $0x7d8] sm:$0xff]
      %v1500 = vld [vmem:[#allocation9 + $0x7e0] sm:$0xff]
      %v1501 = vld [vmem:[#allocation9 + $0x7e8] sm:$0xff]
      %v1502 = vld [vmem:[#allocation9 + $0x7f0] sm:$0xff]
      %v1503 = vld [vmem:[#allocation9 + $0x7f8] sm:$0xff]
      %v1504 = vld [vmem:[#allocation9 + $0x800] sm:$0xff]
      %v1505 = vld [vmem:[#allocation9 + $0x808] sm:$0xff]
      %v1506 = vld [vmem:[#allocation9 + $0x810] sm:$0xff]
      %v1507 = vld [vmem:[#allocation9 + $0x818] sm:$0xff]
      %v1508 = vld [vmem:[#allocation9 + $0x820] sm:$0xff]
      %v1509 = vld [vmem:[#allocation9 + $0x828] sm:$0xff]
      %v1510 = vld [vmem:[#allocation9 + $0x830] sm:$0xff]
      %v1511 = vld [vmem:[#allocation9 + $0x838] sm:$0xff]
      %v1512 = vld [vmem:[#allocation9 + $0x840] sm:$0xff]
      %v1513 = vld [vmem:[#allocation9 + $0x848] sm:$0xff]
      %v1514 = vld [vmem:[#allocation9 + $0x850] sm:$0xff]
      %v1515 = vld [vmem:[#allocation9 + $0x858] sm:$0xff]
      %v1516 = vld [vmem:[#allocation9 + $0x860] sm:$0xff]
      %v1517 = vld [vmem:[#allocation9 + $0x868] sm:$0xff]
      %v1518 = vld [vmem:[#allocation9 + $0x870] sm:$0xff]
      %v1519 = vld [vmem:[#allocation9 + $0x878] sm:$0xff]
      %v1520 = vld [vmem:[#allocation9 + $0x880] sm:$0xff]
      %v1521 = vld [vmem:[#allocation9 + $0x888] sm:$0xff]
      %v1522 = vld [vmem:[#allocation9 + $0x890] sm:$0xff]
      %v1523 = vld [vmem:[#allocation9 + $0x898] sm:$0xff]
      %v1524 = vld [vmem:[#allocation9 + $0x8a0] sm:$0xff]
      %v1525 = vld [vmem:[#allocation9 + $0x8a8] sm:$0xff]
      %v1526 = vld [vmem:[#allocation9 + $0x8b0] sm:$0xff]
      %v1527 = vld [vmem:[#allocation9 + $0x8b8] sm:$0xff]
      %v1528 = vld [vmem:[#allocation9 + $0x8c0] sm:$0xff]
      %v1529 = vld [vmem:[#allocation9 + $0x8c8] sm:$0xff]
      %v1530 = vld [vmem:[#allocation9 + $0x8d0] sm:$0xff]
      %v1531 = vld [vmem:[#allocation9 + $0x8d8] sm:$0xff]
      %v1532 = vld [vmem:[#allocation9 + $0x8e0] sm:$0xff]
      %v1533 = vld [vmem:[#allocation9 + $0x8e8] sm:$0xff]
      %v1534 = vld [vmem:[#allocation9 + $0x8f0] sm:$0xff]
      %v1535 = vld [vmem:[#allocation9 + $0x8f8] sm:$0xff]
      %v1536 = vld [vmem:[#allocation9 + $0x900] sm:$0xff]
      %v1537 = vld [vmem:[#allocation9 + $0x908] sm:$0xff]
      %v1538 = vld [vmem:[#allocation9 + $0x910] sm:$0xff]
      %v1539 = vld [vmem:[#allocation9 + $0x918] sm:$0xff]
      %v1540 = vld [vmem:[#allocation9 + $0x920] sm:$0xff]
      %v1541 = vld [vmem:[#allocation9 + $0x928] sm:$0xff]
      %v1542 = vld [vmem:[#allocation9 + $0x930] sm:$0xff]
      %v1543 = vld [vmem:[#allocation9 + $0x938] sm:$0xff]
      %v1544 = vld [vmem:[#allocation9 + $0x940] sm:$0xff]
      %v1545 = vld [vmem:[#allocation9 + $0x948] sm:$0xff]
      %v1546 = vld [vmem:[#allocation9 + $0x950] sm:$0xff]
      %v1547 = vld [vmem:[#allocation9 + $0x958] sm:$0xff]
      %v1548 = vld [vmem:[#allocation9 + $0x960] sm:$0xff]
      %v1549 = vld [vmem:[#allocation9 + $0x968] sm:$0xff]
      %v1550 = vld [vmem:[#allocation9 + $0x970] sm:$0xff]
      %v1551 = vld [vmem:[#allocation9 + $0x978] sm:$0xff]
      %v1552 = vld [vmem:[#allocation9 + $0x980] sm:$0xff]
      %v1553 = vld [vmem:[#allocation9 + $0x988] sm:$0xff]
      %v1554 = vld [vmem:[#allocation9 + $0x990] sm:$0xff]
      %v1555 = vld [vmem:[#allocation9 + $0x998] sm:$0xff]
      %v1556 = vld [vmem:[#allocation9 + $0x9a0] sm:$0xff]
      %v1557 = vld [vmem:[#allocation9 + $0x9a8] sm:$0xff]
      %v1558 = vld [vmem:[#allocation9 + $0x9b0] sm:$0xff]
      %v1559 = vld [vmem:[#allocation9 + $0x9b8] sm:$0xff]
      %v1560 = vld [vmem:[#allocation9 + $0x9c0] sm:$0xff]
      %v1561 = vld [vmem:[#allocation9 + $0x9c8] sm:$0xff]
      %v1562 = vld [vmem:[#allocation9 + $0x9d0] sm:$0xff]
      %v1563 = vld [vmem:[#allocation9 + $0x9d8] sm:$0xff]
      %v1564 = vld [vmem:[#allocation9 + $0x9e0] sm:$0xff]
      %v1565 = vld [vmem:[#allocation9 + $0x9e8] sm:$0xff]
      %v1566 = vld [vmem:[#allocation9 + $0x9f0] sm:$0xff]
      %v1567 = vld [vmem:[#allocation9 + $0x9f8] sm:$0xff]
      %v1568 = vld [vmem:[#allocation11] sm:$0xff]
      %v1570 = vlaneseq
      %v1571 = vshrl.u32 %v1570, 7
      %v1572 = vsub.s32 0, %v1571
      %v1573 = vrot.slane %v1568, %v1572
      %v1574 = vlaneseq
      %v1575 = vshrl.u32 %v1574, 7
      %v1576 = vsub.s32 1, %v1575
      %v1577 = vrot.slane %v1568, %v1576
      %v1578 = vlaneseq
      %v1579 = vshrl.u32 %v1578, 7
      %v1580 = vsub.s32 2, %v1579
      %v1581 = vrot.slane %v1568, %v1580
      %v1582 = vlaneseq
      %v1583 = vshrl.u32 %v1582, 7
      %v1584 = vsub.s32 3, %v1583
      %v1585 = vrot.slane %v1568, %v1584
      %v1586 = vlaneseq
      %v1587 = vshrl.u32 %v1586, 7
      %v1588 = vsub.s32 4, %v1587
      %v1589 = vrot.slane %v1568, %v1588
      %v1590 = vlaneseq
      %v1591 = vshrl.u32 %v1590, 7
      %v1592 = vsub.s32 5, %v1591
      %v1593 = vrot.slane %v1568, %v1592
      %v1594 = vlaneseq
      %v1595 = vshrl.u32 %v1594, 7
      %v1596 = vsub.s32 6, %v1595
      %v1597 = vrot.slane %v1568, %v1596
      %v1598 = vlaneseq
      %v1599 = vshrl.u32 %v1598, 7
      %v1600 = vsub.s32 7, %v1599
      %v1601 = vrot.slane %v1568, %v1600
      %v1930 = vunpack.c.l.b16 %v1248
      %v1931 = vunpack.c.h.b16 %v1248
      %v1932 = vunpack.c.l.b16 %v1249
      %v1933 = vunpack.c.h.b16 %v1249
      %v1934 = vunpack.c.l.b16 %v1250
      %v1935 = vunpack.c.h.b16 %v1250
      %v1936 = vunpack.c.l.b16 %v1251
      %v1937 = vunpack.c.h.b16 %v1251
      %v1938 = vunpack.c.l.b16 %v1252
      %v1939 = vunpack.c.h.b16 %v1252
      %v1940 = vunpack.c.l.b16 %v1253
      %v1941 = vunpack.c.h.b16 %v1253
      %v1942 = vunpack.c.l.b16 %v1254
      %v1943 = vunpack.c.h.b16 %v1254
      %v1944 = vunpack.c.l.b16 %v1255
      %v1945 = vunpack.c.h.b16 %v1255
      %v1946 = vunpack.c.l.b16 %v1256
      %v1947 = vunpack.c.h.b16 %v1256
      %v1948 = vunpack.c.l.b16 %v1257
      %v1949 = vunpack.c.h.b16 %v1257
      %v1950 = vunpack.c.l.b16 %v1258
      %v1951 = vunpack.c.h.b16 %v1258
      %v1952 = vunpack.c.l.b16 %v1259
      %v1953 = vunpack.c.h.b16 %v1259
      %v1954 = vunpack.c.l.b16 %v1260
      %v1955 = vunpack.c.h.b16 %v1260
      %v1956 = vunpack.c.l.b16 %v1261
      %v1957 = vunpack.c.h.b16 %v1261
      %v1958 = vunpack.c.l.b16 %v1262
      %v1959 = vunpack.c.h.b16 %v1262
      %v1960 = vunpack.c.l.b16 %v1263
      %v1961 = vunpack.c.h.b16 %v1263
      %v1962 = vunpack.c.l.b16 %v1264
      %v1963 = vunpack.c.h.b16 %v1264
      %v1964 = vunpack.c.l.b16 %v1265
      %v1965 = vunpack.c.h.b16 %v1265
      %v1966 = vunpack.c.l.b16 %v1266
      %v1967 = vunpack.c.h.b16 %v1266
      %v1968 = vunpack.c.l.b16 %v1267
      %v1969 = vunpack.c.h.b16 %v1267
      %v1970 = vunpack.c.l.b16 %v1268
      %v1971 = vunpack.c.h.b16 %v1268
      %v1972 = vunpack.c.l.b16 %v1269
      %v1973 = vunpack.c.h.b16 %v1269
      %v1974 = vunpack.c.l.b16 %v1270
      %v1975 = vunpack.c.h.b16 %v1270
      %v1976 = vunpack.c.l.b16 %v1271
      %v1977 = vunpack.c.h.b16 %v1271
      %v1978 = vunpack.c.l.b16 %v1272
      %v1979 = vunpack.c.h.b16 %v1272
      %v1980 = vunpack.c.l.b16 %v1273
      %v1981 = vunpack.c.h.b16 %v1273
      %v1982 = vunpack.c.l.b16 %v1274
      %v1983 = vunpack.c.h.b16 %v1274
      %v1984 = vunpack.c.l.b16 %v1275
      %v1985 = vunpack.c.h.b16 %v1275
      %v1986 = vunpack.c.l.b16 %v1276
      %v1987 = vunpack.c.h.b16 %v1276
      %v1988 = vunpack.c.l.b16 %v1277
      %v1989 = vunpack.c.h.b16 %v1277
      %v1990 = vunpack.c.l.b16 %v1278
      %v1991 = vunpack.c.h.b16 %v1278
      %v1992 = vunpack.c.l.b16 %v1279
      %v1993 = vunpack.c.h.b16 %v1279
      %v1994 = vunpack.c.l.b16 %v1280
      %v1995 = vunpack.c.h.b16 %v1280
      %v1996 = vunpack.c.l.b16 %v1281
      %v1997 = vunpack.c.h.b16 %v1281
      %v1998 = vunpack.c.l.b16 %v1282
      %v1999 = vunpack.c.h.b16 %v1282
      %v2000 = vunpack.c.l.b16 %v1283
      %v2001 = vunpack.c.h.b16 %v1283
      %v2002 = vunpack.c.l.b16 %v1284
      %v2003 = vunpack.c.h.b16 %v1284
      %v2004 = vunpack.c.l.b16 %v1285
      %v2005 = vunpack.c.h.b16 %v1285
      %v2006 = vunpack.c.l.b16 %v1286
      %v2007 = vunpack.c.h.b16 %v1286
      %v2008 = vunpack.c.l.b16 %v1287
      %v2009 = vunpack.c.h.b16 %v1287
      %v2010 = vunpack.c.l.b16 %v1288
      %v2011 = vunpack.c.h.b16 %v1288
      %v2012 = vunpack.c.l.b16 %v1289
      %v2013 = vunpack.c.h.b16 %v1289
      %v2014 = vunpack.c.l.b16 %v1290
      %v2015 = vunpack.c.h.b16 %v1290
      %v2016 = vunpack.c.l.b16 %v1291
      %v2017 = vunpack.c.h.b16 %v1291
      %v2018 = vunpack.c.l.b16 %v1292
      %v2019 = vunpack.c.h.b16 %v1292
      %v2020 = vunpack.c.l.b16 %v1293
      %v2021 = vunpack.c.h.b16 %v1293
      %v2022 = vunpack.c.l.b16 %v1294
      %v2023 = vunpack.c.h.b16 %v1294
      %v2024 = vunpack.c.l.b16 %v1295
      %v2025 = vunpack.c.h.b16 %v1295
      %v2026 = vunpack.c.l.b16 %v1296
      %v2027 = vunpack.c.h.b16 %v1296
      %v2028 = vunpack.c.l.b16 %v1297
      %v2029 = vunpack.c.h.b16 %v1297
      %v2030 = vunpack.c.l.b16 %v1298
      %v2031 = vunpack.c.h.b16 %v1298
      %v2032 = vunpack.c.l.b16 %v1299
      %v2033 = vunpack.c.h.b16 %v1299
      %v2034 = vunpack.c.l.b16 %v1300
      %v2035 = vunpack.c.h.b16 %v1300
      %v2036 = vunpack.c.l.b16 %v1301
      %v2037 = vunpack.c.h.b16 %v1301
      %v2038 = vunpack.c.l.b16 %v1302
      %v2039 = vunpack.c.h.b16 %v1302
      %v2040 = vunpack.c.l.b16 %v1303
      %v2041 = vunpack.c.h.b16 %v1303
      %v2042 = vunpack.c.l.b16 %v1304
      %v2043 = vunpack.c.h.b16 %v1304
      %v2044 = vunpack.c.l.b16 %v1305
      %v2045 = vunpack.c.h.b16 %v1305
      %v2046 = vunpack.c.l.b16 %v1306
      %v2047 = vunpack.c.h.b16 %v1306
      %v2048 = vunpack.c.l.b16 %v1307
      %v2049 = vunpack.c.h.b16 %v1307
      %v2050 = vunpack.c.l.b16 %v1308
      %v2051 = vunpack.c.h.b16 %v1308
      %v2052 = vunpack.c.l.b16 %v1309
      %v2053 = vunpack.c.h.b16 %v1309
      %v2054 = vunpack.c.l.b16 %v1310
      %v2055 = vunpack.c.h.b16 %v1310
      %v2056 = vunpack.c.l.b16 %v1311
      %v2057 = vunpack.c.h.b16 %v1311
      %v2058 = vunpack.c.l.b16 %v1312
      %v2059 = vunpack.c.h.b16 %v1312
      %v2060 = vunpack.c.l.b16 %v1313
      %v2061 = vunpack.c.h.b16 %v1313
      %v2062 = vunpack.c.l.b16 %v1314
      %v2063 = vunpack.c.h.b16 %v1314
      %v2064 = vunpack.c.l.b16 %v1315
      %v2065 = vunpack.c.h.b16 %v1315
      %v2066 = vunpack.c.l.b16 %v1316
      %v2067 = vunpack.c.h.b16 %v1316
      %v2068 = vunpack.c.l.b16 %v1317
      %v2069 = vunpack.c.h.b16 %v1317
      %v2070 = vunpack.c.l.b16 %v1318
      %v2071 = vunpack.c.h.b16 %v1318
      %v2072 = vunpack.c.l.b16 %v1319
      %v2073 = vunpack.c.h.b16 %v1319
      %v2074 = vunpack.c.l.b16 %v1320
      %v2075 = vunpack.c.h.b16 %v1320
      %v2076 = vunpack.c.l.b16 %v1321
      %v2077 = vunpack.c.h.b16 %v1321
      %v2078 = vunpack.c.l.b16 %v1322
      %v2079 = vunpack.c.h.b16 %v1322
      %v2080 = vunpack.c.l.b16 %v1323
      %v2081 = vunpack.c.h.b16 %v1323
      %v2082 = vunpack.c.l.b16 %v1324
      %v2083 = vunpack.c.h.b16 %v1324
      %v2084 = vunpack.c.l.b16 %v1325
      %v2085 = vunpack.c.h.b16 %v1325
      %v2086 = vunpack.c.l.b16 %v1326
      %v2087 = vunpack.c.h.b16 %v1326
      %v2088 = vunpack.c.l.b16 %v1327
      %v2089 = vunpack.c.h.b16 %v1327
      %v2090 = vunpack.c.l.b16 %v1328
      %v2091 = vunpack.c.h.b16 %v1328
      %v2092 = vunpack.c.l.b16 %v1329
      %v2093 = vunpack.c.h.b16 %v1329
      %v2094 = vunpack.c.l.b16 %v1330
      %v2095 = vunpack.c.h.b16 %v1330
      %v2096 = vunpack.c.l.b16 %v1331
      %v2097 = vunpack.c.h.b16 %v1331
      %v2098 = vunpack.c.l.b16 %v1332
      %v2099 = vunpack.c.h.b16 %v1332
      %v2100 = vunpack.c.l.b16 %v1333
      %v2101 = vunpack.c.h.b16 %v1333
      %v2102 = vunpack.c.l.b16 %v1334
      %v2103 = vunpack.c.h.b16 %v1334
      %v2104 = vunpack.c.l.b16 %v1335
      %v2105 = vunpack.c.h.b16 %v1335
      %v2106 = vunpack.c.l.b16 %v1336
      %v2107 = vunpack.c.h.b16 %v1336
      %v2108 = vunpack.c.l.b16 %v1337
      %v2109 = vunpack.c.h.b16 %v1337
      %v2110 = vunpack.c.l.b16 %v1338
      %v2111 = vunpack.c.h.b16 %v1338
      %v2112 = vunpack.c.l.b16 %v1339
      %v2113 = vunpack.c.h.b16 %v1339
      %v2114 = vunpack.c.l.b16 %v1340
      %v2115 = vunpack.c.h.b16 %v1340
      %v2116 = vunpack.c.l.b16 %v1341
      %v2117 = vunpack.c.h.b16 %v1341
      %v2118 = vunpack.c.l.b16 %v1342
      %v2119 = vunpack.c.h.b16 %v1342
      %v2120 = vunpack.c.l.b16 %v1343
      %v2121 = vunpack.c.h.b16 %v1343
      %v2122 = vunpack.c.l.b16 %v1344
      %v2123 = vunpack.c.h.b16 %v1344
      %v2124 = vunpack.c.l.b16 %v1345
      %v2125 = vunpack.c.h.b16 %v1345
      %v2126 = vunpack.c.l.b16 %v1346
      %v2127 = vunpack.c.h.b16 %v1346
      %v2128 = vunpack.c.l.b16 %v1347
      %v2129 = vunpack.c.h.b16 %v1347
      %v2130 = vunpack.c.l.b16 %v1348
      %v2131 = vunpack.c.h.b16 %v1348
      %v2132 = vunpack.c.l.b16 %v1349
      %v2133 = vunpack.c.h.b16 %v1349
      %v2134 = vunpack.c.l.b16 %v1350
      %v2135 = vunpack.c.h.b16 %v1350
      %v2136 = vunpack.c.l.b16 %v1351
      %v2137 = vunpack.c.h.b16 %v1351
      %v2138 = vunpack.c.l.b16 %v1352
      %v2139 = vunpack.c.h.b16 %v1352
      %v2140 = vunpack.c.l.b16 %v1353
      %v2141 = vunpack.c.h.b16 %v1353
      %v2142 = vunpack.c.l.b16 %v1354
      %v2143 = vunpack.c.h.b16 %v1354
      %v2144 = vunpack.c.l.b16 %v1355
      %v2145 = vunpack.c.h.b16 %v1355
      %v2146 = vunpack.c.l.b16 %v1356
      %v2147 = vunpack.c.h.b16 %v1356
      %v2148 = vunpack.c.l.b16 %v1357
      %v2149 = vunpack.c.h.b16 %v1357
      %v2150 = vunpack.c.l.b16 %v1358
      %v2151 = vunpack.c.h.b16 %v1358
      %v2152 = vunpack.c.l.b16 %v1359
      %v2153 = vunpack.c.h.b16 %v1359
      %v2154 = vunpack.c.l.b16 %v1360
      %v2155 = vunpack.c.h.b16 %v1360
      %v2156 = vunpack.c.l.b16 %v1361
      %v2157 = vunpack.c.h.b16 %v1361
      %v2158 = vunpack.c.l.b16 %v1362
      %v2159 = vunpack.c.h.b16 %v1362
      %v2160 = vunpack.c.l.b16 %v1363
      %v2161 = vunpack.c.h.b16 %v1363
      %v2162 = vunpack.c.l.b16 %v1364
      %v2163 = vunpack.c.h.b16 %v1364
      %v2164 = vunpack.c.l.b16 %v1365
      %v2165 = vunpack.c.h.b16 %v1365
      %v2166 = vunpack.c.l.b16 %v1366
      %v2167 = vunpack.c.h.b16 %v1366
      %v2168 = vunpack.c.l.b16 %v1367
      %v2169 = vunpack.c.h.b16 %v1367
      %v2170 = vunpack.c.l.b16 %v1368
      %v2171 = vunpack.c.h.b16 %v1368
      %v2172 = vunpack.c.l.b16 %v1369
      %v2173 = vunpack.c.h.b16 %v1369
      %v2174 = vunpack.c.l.b16 %v1370
      %v2175 = vunpack.c.h.b16 %v1370
      %v2176 = vunpack.c.l.b16 %v1371
      %v2177 = vunpack.c.h.b16 %v1371
      %v2178 = vunpack.c.l.b16 %v1372
      %v2179 = vunpack.c.h.b16 %v1372
      %v2180 = vunpack.c.l.b16 %v1373
      %v2181 = vunpack.c.h.b16 %v1373
      %v2182 = vunpack.c.l.b16 %v1374
      %v2183 = vunpack.c.h.b16 %v1374
      %v2184 = vunpack.c.l.b16 %v1375
      %v2185 = vunpack.c.h.b16 %v1375
      %v2186 = vunpack.c.l.b16 %v1376
      %v2187 = vunpack.c.h.b16 %v1376
      %v2188 = vunpack.c.l.b16 %v1377
      %v2189 = vunpack.c.h.b16 %v1377
      %v2190 = vunpack.c.l.b16 %v1378
      %v2191 = vunpack.c.h.b16 %v1378
      %v2192 = vunpack.c.l.b16 %v1379
      %v2193 = vunpack.c.h.b16 %v1379
      %v2194 = vunpack.c.l.b16 %v1380
      %v2195 = vunpack.c.h.b16 %v1380
      %v2196 = vunpack.c.l.b16 %v1381
      %v2197 = vunpack.c.h.b16 %v1381
      %v2198 = vunpack.c.l.b16 %v1382
      %v2199 = vunpack.c.h.b16 %v1382
      %v2200 = vunpack.c.l.b16 %v1383
      %v2201 = vunpack.c.h.b16 %v1383
      %v2202 = vunpack.c.l.b16 %v1384
      %v2203 = vunpack.c.h.b16 %v1384
      %v2204 = vunpack.c.l.b16 %v1385
      %v2205 = vunpack.c.h.b16 %v1385
      %v2206 = vunpack.c.l.b16 %v1386
      %v2207 = vunpack.c.h.b16 %v1386
      %v2208 = vunpack.c.l.b16 %v1387
      %v2209 = vunpack.c.h.b16 %v1387
      %v2210 = vunpack.c.l.b16 %v1388
      %v2211 = vunpack.c.h.b16 %v1388
      %v2212 = vunpack.c.l.b16 %v1389
      %v2213 = vunpack.c.h.b16 %v1389
      %v2214 = vunpack.c.l.b16 %v1390
      %v2215 = vunpack.c.h.b16 %v1390
      %v2216 = vunpack.c.l.b16 %v1391
      %v2217 = vunpack.c.h.b16 %v1391
      %v2218 = vunpack.c.l.b16 %v1392
      %v2219 = vunpack.c.h.b16 %v1392
      %v2220 = vunpack.c.l.b16 %v1393
      %v2221 = vunpack.c.h.b16 %v1393
      %v2222 = vunpack.c.l.b16 %v1394
      %v2223 = vunpack.c.h.b16 %v1394
      %v2224 = vunpack.c.l.b16 %v1395
      %v2225 = vunpack.c.h.b16 %v1395
      %v2226 = vunpack.c.l.b16 %v1396
      %v2227 = vunpack.c.h.b16 %v1396
      %v2228 = vunpack.c.l.b16 %v1397
      %v2229 = vunpack.c.h.b16 %v1397
      %v2230 = vunpack.c.l.b16 %v1398
      %v2231 = vunpack.c.h.b16 %v1398
      %v2232 = vunpack.c.l.b16 %v1399
      %v2233 = vunpack.c.h.b16 %v1399
      %v2234 = vunpack.c.l.b16 %v1400
      %v2235 = vunpack.c.h.b16 %v1400
      %v2236 = vunpack.c.l.b16 %v1401
      %v2237 = vunpack.c.h.b16 %v1401
      %v2238 = vunpack.c.l.b16 %v1402
      %v2239 = vunpack.c.h.b16 %v1402
      %v2240 = vunpack.c.l.b16 %v1403
      %v2241 = vunpack.c.h.b16 %v1403
      %v2242 = vunpack.c.l.b16 %v1404
      %v2243 = vunpack.c.h.b16 %v1404
      %v2244 = vunpack.c.l.b16 %v1405
      %v2245 = vunpack.c.h.b16 %v1405
      %v2246 = vunpack.c.l.b16 %v1406
      %v2247 = vunpack.c.h.b16 %v1406
      %v2248 = vunpack.c.l.b16 %v1407
      %v2249 = vunpack.c.h.b16 %v1407
      %v2250 = vunpack.c.l.b16 %v1408
      %v2251 = vunpack.c.h.b16 %v1408
      %v2252 = vunpack.c.l.b16 %v1409
      %v2253 = vunpack.c.h.b16 %v1409
      %v2254 = vunpack.c.l.b16 %v1410
      %v2255 = vunpack.c.h.b16 %v1410
      %v2256 = vunpack.c.l.b16 %v1411
      %v2257 = vunpack.c.h.b16 %v1411
      %v2258 = vunpack.c.l.b16 %v1412
      %v2259 = vunpack.c.h.b16 %v1412
      %v2260 = vunpack.c.l.b16 %v1413
      %v2261 = vunpack.c.h.b16 %v1413
      %v2262 = vunpack.c.l.b16 %v1414
      %v2263 = vunpack.c.h.b16 %v1414
      %v2264 = vunpack.c.l.b16 %v1415
      %v2265 = vunpack.c.h.b16 %v1415
      %v2266 = vunpack.c.l.b16 %v1416
      %v2267 = vunpack.c.h.b16 %v1416
      %v2268 = vunpack.c.l.b16 %v1417
      %v2269 = vunpack.c.h.b16 %v1417
      %v2270 = vunpack.c.l.b16 %v1418
      %v2271 = vunpack.c.h.b16 %v1418
      %v2272 = vunpack.c.l.b16 %v1419
      %v2273 = vunpack.c.h.b16 %v1419
      %v2274 = vunpack.c.l.b16 %v1420
      %v2275 = vunpack.c.h.b16 %v1420
      %v2276 = vunpack.c.l.b16 %v1421
      %v2277 = vunpack.c.h.b16 %v1421
      %v2278 = vunpack.c.l.b16 %v1422
      %v2279 = vunpack.c.h.b16 %v1422
      %v2280 = vunpack.c.l.b16 %v1423
      %v2281 = vunpack.c.h.b16 %v1423
      %v2282 = vunpack.c.l.b16 %v1424
      %v2283 = vunpack.c.h.b16 %v1424
      %v2284 = vunpack.c.l.b16 %v1425
      %v2285 = vunpack.c.h.b16 %v1425
      %v2286 = vunpack.c.l.b16 %v1426
      %v2287 = vunpack.c.h.b16 %v1426
      %v2288 = vunpack.c.l.b16 %v1427
      %v2289 = vunpack.c.h.b16 %v1427
      %v2290 = vunpack.c.l.b16 %v1428
      %v2291 = vunpack.c.h.b16 %v1428
      %v2292 = vunpack.c.l.b16 %v1429
      %v2293 = vunpack.c.h.b16 %v1429
      %v2294 = vunpack.c.l.b16 %v1430
      %v2295 = vunpack.c.h.b16 %v1430
      %v2296 = vunpack.c.l.b16 %v1431
      %v2297 = vunpack.c.h.b16 %v1431
      %v2298 = vunpack.c.l.b16 %v1432
      %v2299 = vunpack.c.h.b16 %v1432
      %v2300 = vunpack.c.l.b16 %v1433
      %v2301 = vunpack.c.h.b16 %v1433
      %v2302 = vunpack.c.l.b16 %v1434
      %v2303 = vunpack.c.h.b16 %v1434
      %v2304 = vunpack.c.l.b16 %v1435
      %v2305 = vunpack.c.h.b16 %v1435
      %v2306 = vunpack.c.l.b16 %v1436
      %v2307 = vunpack.c.h.b16 %v1436
      %v2308 = vunpack.c.l.b16 %v1437
      %v2309 = vunpack.c.h.b16 %v1437
      %v2310 = vunpack.c.l.b16 %v1438
      %v2311 = vunpack.c.h.b16 %v1438
      %v2312 = vunpack.c.l.b16 %v1439
      %v2313 = vunpack.c.h.b16 %v1439
      %v2314 = vunpack.c.l.b16 %v1440
      %v2315 = vunpack.c.h.b16 %v1440
      %v2316 = vunpack.c.l.b16 %v1441
      %v2317 = vunpack.c.h.b16 %v1441
      %v2318 = vunpack.c.l.b16 %v1442
      %v2319 = vunpack.c.h.b16 %v1442
      %v2320 = vunpack.c.l.b16 %v1443
      %v2321 = vunpack.c.h.b16 %v1443
      %v2322 = vunpack.c.l.b16 %v1444
      %v2323 = vunpack.c.h.b16 %v1444
      %v2324 = vunpack.c.l.b16 %v1445
      %v2325 = vunpack.c.h.b16 %v1445
      %v2326 = vunpack.c.l.b16 %v1446
      %v2327 = vunpack.c.h.b16 %v1446
      %v2328 = vunpack.c.l.b16 %v1447
      %v2329 = vunpack.c.h.b16 %v1447
      %v2330 = vunpack.c.l.b16 %v1448
      %v2331 = vunpack.c.h.b16 %v1448
      %v2332 = vunpack.c.l.b16 %v1449
      %v2333 = vunpack.c.h.b16 %v1449
      %v2334 = vunpack.c.l.b16 %v1450
      %v2335 = vunpack.c.h.b16 %v1450
      %v2336 = vunpack.c.l.b16 %v1451
      %v2337 = vunpack.c.h.b16 %v1451
      %v2338 = vunpack.c.l.b16 %v1452
      %v2339 = vunpack.c.h.b16 %v1452
      %v2340 = vunpack.c.l.b16 %v1453
      %v2341 = vunpack.c.h.b16 %v1453
      %v2342 = vunpack.c.l.b16 %v1454
      %v2343 = vunpack.c.h.b16 %v1454
      %v2344 = vunpack.c.l.b16 %v1455
      %v2345 = vunpack.c.h.b16 %v1455
      %v2346 = vunpack.c.l.b16 %v1456
      %v2347 = vunpack.c.h.b16 %v1456
      %v2348 = vunpack.c.l.b16 %v1457
      %v2349 = vunpack.c.h.b16 %v1457
      %v2350 = vunpack.c.l.b16 %v1458
      %v2351 = vunpack.c.h.b16 %v1458
      %v2352 = vunpack.c.l.b16 %v1459
      %v2353 = vunpack.c.h.b16 %v1459
      %v2354 = vunpack.c.l.b16 %v1460
      %v2355 = vunpack.c.h.b16 %v1460
      %v2356 = vunpack.c.l.b16 %v1461
      %v2357 = vunpack.c.h.b16 %v1461
      %v2358 = vunpack.c.l.b16 %v1462
      %v2359 = vunpack.c.h.b16 %v1462
      %v2360 = vunpack.c.l.b16 %v1463
      %v2361 = vunpack.c.h.b16 %v1463
      %v2362 = vunpack.c.l.b16 %v1464
      %v2363 = vunpack.c.h.b16 %v1464
      %v2364 = vunpack.c.l.b16 %v1465
      %v2365 = vunpack.c.h.b16 %v1465
      %v2366 = vunpack.c.l.b16 %v1466
      %v2367 = vunpack.c.h.b16 %v1466
      %v2368 = vunpack.c.l.b16 %v1467
      %v2369 = vunpack.c.h.b16 %v1467
      %v2370 = vunpack.c.l.b16 %v1468
      %v2371 = vunpack.c.h.b16 %v1468
      %v2372 = vunpack.c.l.b16 %v1469
      %v2373 = vunpack.c.h.b16 %v1469
      %v2374 = vunpack.c.l.b16 %v1470
      %v2375 = vunpack.c.h.b16 %v1470
      %v2376 = vunpack.c.l.b16 %v1471
      %v2377 = vunpack.c.h.b16 %v1471
      %v2378 = vunpack.c.l.b16 %v1472
      %v2379 = vunpack.c.h.b16 %v1472
      %v2380 = vunpack.c.l.b16 %v1473
      %v2381 = vunpack.c.h.b16 %v1473
      %v2382 = vunpack.c.l.b16 %v1474
      %v2383 = vunpack.c.h.b16 %v1474
      %v2384 = vunpack.c.l.b16 %v1475
      %v2385 = vunpack.c.h.b16 %v1475
      %v2386 = vunpack.c.l.b16 %v1476
      %v2387 = vunpack.c.h.b16 %v1476
      %v2388 = vunpack.c.l.b16 %v1477
      %v2389 = vunpack.c.h.b16 %v1477
      %v2390 = vunpack.c.l.b16 %v1478
      %v2391 = vunpack.c.h.b16 %v1478
      %v2392 = vunpack.c.l.b16 %v1479
      %v2393 = vunpack.c.h.b16 %v1479
      %v2394 = vunpack.c.l.b16 %v1480
      %v2395 = vunpack.c.h.b16 %v1480
      %v2396 = vunpack.c.l.b16 %v1481
      %v2397 = vunpack.c.h.b16 %v1481
      %v2398 = vunpack.c.l.b16 %v1482
      %v2399 = vunpack.c.h.b16 %v1482
      %v2400 = vunpack.c.l.b16 %v1483
      %v2401 = vunpack.c.h.b16 %v1483
      %v2402 = vunpack.c.l.b16 %v1484
      %v2403 = vunpack.c.h.b16 %v1484
      %v2404 = vunpack.c.l.b16 %v1485
      %v2405 = vunpack.c.h.b16 %v1485
      %v2406 = vunpack.c.l.b16 %v1486
      %v2407 = vunpack.c.h.b16 %v1486
      %v2408 = vunpack.c.l.b16 %v1487
      %v2409 = vunpack.c.h.b16 %v1487
      %v2410 = vunpack.c.l.b16 %v1488
      %v2411 = vunpack.c.h.b16 %v1488
      %v2412 = vunpack.c.l.b16 %v1489
      %v2413 = vunpack.c.h.b16 %v1489
      %v2414 = vunpack.c.l.b16 %v1490
      %v2415 = vunpack.c.h.b16 %v1490
      %v2416 = vunpack.c.l.b16 %v1491
      %v2417 = vunpack.c.h.b16 %v1491
      %v2418 = vunpack.c.l.b16 %v1492
      %v2419 = vunpack.c.h.b16 %v1492
      %v2420 = vunpack.c.l.b16 %v1493
      %v2421 = vunpack.c.h.b16 %v1493
      %v2422 = vunpack.c.l.b16 %v1494
      %v2423 = vunpack.c.h.b16 %v1494
      %v2424 = vunpack.c.l.b16 %v1495
      %v2425 = vunpack.c.h.b16 %v1495
      %v2426 = vunpack.c.l.b16 %v1496
      %v2427 = vunpack.c.h.b16 %v1496
      %v2428 = vunpack.c.l.b16 %v1497
      %v2429 = vunpack.c.h.b16 %v1497
      %v2430 = vunpack.c.l.b16 %v1498
      %v2431 = vunpack.c.h.b16 %v1498
      %v2432 = vunpack.c.l.b16 %v1499
      %v2433 = vunpack.c.h.b16 %v1499
      %v2434 = vunpack.c.l.b16 %v1500
      %v2435 = vunpack.c.h.b16 %v1500
      %v2436 = vunpack.c.l.b16 %v1501
      %v2437 = vunpack.c.h.b16 %v1501
      %v2438 = vunpack.c.l.b16 %v1502
      %v2439 = vunpack.c.h.b16 %v1502
      %v2440 = vunpack.c.l.b16 %v1503
      %v2441 = vunpack.c.h.b16 %v1503
      %v2442 = vunpack.c.l.b16 %v1504
      %v2443 = vunpack.c.h.b16 %v1504
      %v2444 = vunpack.c.l.b16 %v1505
      %v2445 = vunpack.c.h.b16 %v1505
      %v2446 = vunpack.c.l.b16 %v1506
      %v2447 = vunpack.c.h.b16 %v1506
      %v2448 = vunpack.c.l.b16 %v1507
      %v2449 = vunpack.c.h.b16 %v1507
      %v2450 = vunpack.c.l.b16 %v1508
      %v2451 = vunpack.c.h.b16 %v1508
      %v2452 = vunpack.c.l.b16 %v1509
      %v2453 = vunpack.c.h.b16 %v1509
      %v2454 = vunpack.c.l.b16 %v1510
      %v2455 = vunpack.c.h.b16 %v1510
      %v2456 = vunpack.c.l.b16 %v1511
      %v2457 = vunpack.c.h.b16 %v1511
      %v2458 = vunpack.c.l.b16 %v1512
      %v2459 = vunpack.c.h.b16 %v1512
      %v2460 = vunpack.c.l.b16 %v1513
      %v2461 = vunpack.c.h.b16 %v1513
      %v2462 = vunpack.c.l.b16 %v1514
      %v2463 = vunpack.c.h.b16 %v1514
      %v2464 = vunpack.c.l.b16 %v1515
      %v2465 = vunpack.c.h.b16 %v1515
      %v2466 = vunpack.c.l.b16 %v1516
      %v2467 = vunpack.c.h.b16 %v1516
      %v2468 = vunpack.c.l.b16 %v1517
      %v2469 = vunpack.c.h.b16 %v1517
      %v2470 = vunpack.c.l.b16 %v1518
      %v2471 = vunpack.c.h.b16 %v1518
      %v2472 = vunpack.c.l.b16 %v1519
      %v2473 = vunpack.c.h.b16 %v1519
      %v2474 = vunpack.c.l.b16 %v1520
      %v2475 = vunpack.c.h.b16 %v1520
      %v2476 = vunpack.c.l.b16 %v1521
      %v2477 = vunpack.c.h.b16 %v1521
      %v2478 = vunpack.c.l.b16 %v1522
      %v2479 = vunpack.c.h.b16 %v1522
      %v2480 = vunpack.c.l.b16 %v1523
      %v2481 = vunpack.c.h.b16 %v1523
      %v2482 = vunpack.c.l.b16 %v1524
      %v2483 = vunpack.c.h.b16 %v1524
      %v2484 = vunpack.c.l.b16 %v1525
      %v2485 = vunpack.c.h.b16 %v1525
      %v2486 = vunpack.c.l.b16 %v1526
      %v2487 = vunpack.c.h.b16 %v1526
      %v2488 = vunpack.c.l.b16 %v1527
      %v2489 = vunpack.c.h.b16 %v1527
      %v2490 = vunpack.c.l.b16 %v1528
      %v2491 = vunpack.c.h.b16 %v1528
      %v2492 = vunpack.c.l.b16 %v1529
      %v2493 = vunpack.c.h.b16 %v1529
      %v2494 = vunpack.c.l.b16 %v1530
      %v2495 = vunpack.c.h.b16 %v1530
      %v2496 = vunpack.c.l.b16 %v1531
      %v2497 = vunpack.c.h.b16 %v1531
      %v2498 = vunpack.c.l.b16 %v1532
      %v2499 = vunpack.c.h.b16 %v1532
      %v2500 = vunpack.c.l.b16 %v1533
      %v2501 = vunpack.c.h.b16 %v1533
      %v2502 = vunpack.c.l.b16 %v1534
      %v2503 = vunpack.c.h.b16 %v1534
      %v2504 = vunpack.c.l.b16 %v1535
      %v2505 = vunpack.c.h.b16 %v1535
      %v2506 = vunpack.c.l.b16 %v1536
      %v2507 = vunpack.c.h.b16 %v1536
      %v2508 = vunpack.c.l.b16 %v1537
      %v2509 = vunpack.c.h.b16 %v1537
      %v2510 = vunpack.c.l.b16 %v1538
      %v2511 = vunpack.c.h.b16 %v1538
      %v2512 = vunpack.c.l.b16 %v1539
      %v2513 = vunpack.c.h.b16 %v1539
      %v2514 = vunpack.c.l.b16 %v1540
      %v2515 = vunpack.c.h.b16 %v1540
      %v2516 = vunpack.c.l.b16 %v1541
      %v2517 = vunpack.c.h.b16 %v1541
      %v2518 = vunpack.c.l.b16 %v1542
      %v2519 = vunpack.c.h.b16 %v1542
      %v2520 = vunpack.c.l.b16 %v1543
      %v2521 = vunpack.c.h.b16 %v1543
      %v2522 = vunpack.c.l.b16 %v1544
      %v2523 = vunpack.c.h.b16 %v1544
      %v2524 = vunpack.c.l.b16 %v1545
      %v2525 = vunpack.c.h.b16 %v1545
      %v2526 = vunpack.c.l.b16 %v1546
      %v2527 = vunpack.c.h.b16 %v1546
      %v2528 = vunpack.c.l.b16 %v1547
      %v2529 = vunpack.c.h.b16 %v1547
      %v2530 = vunpack.c.l.b16 %v1548
      %v2531 = vunpack.c.h.b16 %v1548
      %v2532 = vunpack.c.l.b16 %v1549
      %v2533 = vunpack.c.h.b16 %v1549
      %v2534 = vunpack.c.l.b16 %v1550
      %v2535 = vunpack.c.h.b16 %v1550
      %v2536 = vunpack.c.l.b16 %v1551
      %v2537 = vunpack.c.h.b16 %v1551
      %v2538 = vunpack.c.l.b16 %v1552
      %v2539 = vunpack.c.h.b16 %v1552
      %v2540 = vunpack.c.l.b16 %v1553
      %v2541 = vunpack.c.h.b16 %v1553
      %v2542 = vunpack.c.l.b16 %v1554
      %v2543 = vunpack.c.h.b16 %v1554
      %v2544 = vunpack.c.l.b16 %v1555
      %v2545 = vunpack.c.h.b16 %v1555
      %v2546 = vunpack.c.l.b16 %v1556
      %v2547 = vunpack.c.h.b16 %v1556
      %v2548 = vunpack.c.l.b16 %v1557
      %v2549 = vunpack.c.h.b16 %v1557
      %v2550 = vunpack.c.l.b16 %v1558
      %v2551 = vunpack.c.h.b16 %v1558
      %v2552 = vunpack.c.l.b16 %v1559
      %v2553 = vunpack.c.h.b16 %v1559
      %v2554 = vunpack.c.l.b16 %v1560
      %v2555 = vunpack.c.h.b16 %v1560
      %v2556 = vunpack.c.l.b16 %v1561
      %v2557 = vunpack.c.h.b16 %v1561
      %v2558 = vunpack.c.l.b16 %v1562
      %v2559 = vunpack.c.h.b16 %v1562
      %v2560 = vunpack.c.l.b16 %v1563
      %v2561 = vunpack.c.h.b16 %v1563
      %v2562 = vunpack.c.l.b16 %v1564
      %v2563 = vunpack.c.h.b16 %v1564
      %v2564 = vunpack.c.l.b16 %v1565
      %v2565 = vunpack.c.h.b16 %v1565
      %v2566 = vunpack.c.l.b16 %v1566
      %v2567 = vunpack.c.h.b16 %v1566
      %v2568 = vunpack.c.l.b16 %v1567
      %v2569 = vunpack.c.h.b16 %v1567
      %v2570 = vpack.c.b16 %v1938, %v1930
      %v2571 = vpack.c.b16 %v1939, %v1931
      %v2572 = vpack.c.b16 %v1940, %v1932
      %v2573 = vpack.c.b16 %v1941, %v1933
      %v2574 = vpack.c.b16 %v1942, %v1934
      %v2575 = vpack.c.b16 %v1943, %v1935
      %v2576 = vpack.c.b16 %v1944, %v1936
      %v2577 = vpack.c.b16 %v1945, %v1937
      %v2578 = vpack.c.b16 %v1954, %v1946
      %v2579 = vpack.c.b16 %v1955, %v1947
      %v2580 = vpack.c.b16 %v1956, %v1948
      %v2581 = vpack.c.b16 %v1957, %v1949
      %v2582 = vpack.c.b16 %v1958, %v1950
      %v2583 = vpack.c.b16 %v1959, %v1951
      %v2584 = vpack.c.b16 %v1960, %v1952
      %v2585 = vpack.c.b16 %v1961, %v1953
      %v2586 = vpack.c.b16 %v1970, %v1962
      %v2587 = vpack.c.b16 %v1971, %v1963
      %v2588 = vpack.c.b16 %v1972, %v1964
      %v2589 = vpack.c.b16 %v1973, %v1965
      %v2590 = vpack.c.b16 %v1974, %v1966
      %v2591 = vpack.c.b16 %v1975, %v1967
      %v2592 = vpack.c.b16 %v1976, %v1968
      %v2593 = vpack.c.b16 %v1977, %v1969
      %v2594 = vpack.c.b16 %v1986, %v1978
      %v2595 = vpack.c.b16 %v1987, %v1979
      %v2596 = vpack.c.b16 %v1988, %v1980
      %v2597 = vpack.c.b16 %v1989, %v1981
      %v2598 = vpack.c.b16 %v1990, %v1982
      %v2599 = vpack.c.b16 %v1991, %v1983
      %v2600 = vpack.c.b16 %v1992, %v1984
      %v2601 = vpack.c.b16 %v1993, %v1985
      %v2602 = vpack.c.b16 %v2002, %v1994
      %v2603 = vpack.c.b16 %v2003, %v1995
      %v2604 = vpack.c.b16 %v2004, %v1996
      %v2605 = vpack.c.b16 %v2005, %v1997
      %v2606 = vpack.c.b16 %v2006, %v1998
      %v2607 = vpack.c.b16 %v2007, %v1999
      %v2608 = vpack.c.b16 %v2008, %v2000
      %v2609 = vpack.c.b16 %v2009, %v2001
      %v2610 = vpack.c.b16 %v2018, %v2010
      %v2611 = vpack.c.b16 %v2019, %v2011
      %v2612 = vpack.c.b16 %v2020, %v2012
      %v2613 = vpack.c.b16 %v2021, %v2013
      %v2614 = vpack.c.b16 %v2022, %v2014
      %v2615 = vpack.c.b16 %v2023, %v2015
      %v2616 = vpack.c.b16 %v2024, %v2016
      %v2617 = vpack.c.b16 %v2025, %v2017
      %v2618 = vpack.c.b16 %v2034, %v2026
      %v2619 = vpack.c.b16 %v2035, %v2027
      %v2620 = vpack.c.b16 %v2036, %v2028
      %v2621 = vpack.c.b16 %v2037, %v2029
      %v2622 = vpack.c.b16 %v2038, %v2030
      %v2623 = vpack.c.b16 %v2039, %v2031
      %v2624 = vpack.c.b16 %v2040, %v2032
      %v2625 = vpack.c.b16 %v2041, %v2033
      %v2626 = vpack.c.b16 %v2050, %v2042
      %v2627 = vpack.c.b16 %v2051, %v2043
      %v2628 = vpack.c.b16 %v2052, %v2044
      %v2629 = vpack.c.b16 %v2053, %v2045
      %v2630 = vpack.c.b16 %v2054, %v2046
      %v2631 = vpack.c.b16 %v2055, %v2047
      %v2632 = vpack.c.b16 %v2056, %v2048
      %v2633 = vpack.c.b16 %v2057, %v2049
      %v2634 = vpack.c.b16 %v2066, %v2058
      %v2635 = vpack.c.b16 %v2067, %v2059
      %v2636 = vpack.c.b16 %v2068, %v2060
      %v2637 = vpack.c.b16 %v2069, %v2061
      %v2638 = vpack.c.b16 %v2070, %v2062
      %v2639 = vpack.c.b16 %v2071, %v2063
      %v2640 = vpack.c.b16 %v2072, %v2064
      %v2641 = vpack.c.b16 %v2073, %v2065
      %v2642 = vpack.c.b16 %v2082, %v2074
      %v2643 = vpack.c.b16 %v2083, %v2075
      %v2644 = vpack.c.b16 %v2084, %v2076
      %v2645 = vpack.c.b16 %v2085, %v2077
      %v2646 = vpack.c.b16 %v2086, %v2078
      %v2647 = vpack.c.b16 %v2087, %v2079
      %v2648 = vpack.c.b16 %v2088, %v2080
      %v2649 = vpack.c.b16 %v2089, %v2081
      %v2650 = vpack.c.b16 %v2098, %v2090
      %v2651 = vpack.c.b16 %v2099, %v2091
      %v2652 = vpack.c.b16 %v2100, %v2092
      %v2653 = vpack.c.b16 %v2101, %v2093
      %v2654 = vpack.c.b16 %v2102, %v2094
      %v2655 = vpack.c.b16 %v2103, %v2095
      %v2656 = vpack.c.b16 %v2104, %v2096
      %v2657 = vpack.c.b16 %v2105, %v2097
      %v2658 = vpack.c.b16 %v2114, %v2106
      %v2659 = vpack.c.b16 %v2115, %v2107
      %v2660 = vpack.c.b16 %v2116, %v2108
      %v2661 = vpack.c.b16 %v2117, %v2109
      %v2662 = vpack.c.b16 %v2118, %v2110
      %v2663 = vpack.c.b16 %v2119, %v2111
      %v2664 = vpack.c.b16 %v2120, %v2112
      %v2665 = vpack.c.b16 %v2121, %v2113
      %v2666 = vpack.c.b16 %v2130, %v2122
      %v2667 = vpack.c.b16 %v2131, %v2123
      %v2668 = vpack.c.b16 %v2132, %v2124
      %v2669 = vpack.c.b16 %v2133, %v2125
      %v2670 = vpack.c.b16 %v2134, %v2126
      %v2671 = vpack.c.b16 %v2135, %v2127
      %v2672 = vpack.c.b16 %v2136, %v2128
      %v2673 = vpack.c.b16 %v2137, %v2129
      %v2674 = vpack.c.b16 %v2146, %v2138
      %v2675 = vpack.c.b16 %v2147, %v2139
      %v2676 = vpack.c.b16 %v2148, %v2140
      %v2677 = vpack.c.b16 %v2149, %v2141
      %v2678 = vpack.c.b16 %v2150, %v2142
      %v2679 = vpack.c.b16 %v2151, %v2143
      %v2680 = vpack.c.b16 %v2152, %v2144
      %v2681 = vpack.c.b16 %v2153, %v2145
      %v2682 = vpack.c.b16 %v2162, %v2154
      %v2683 = vpack.c.b16 %v2163, %v2155
      %v2684 = vpack.c.b16 %v2164, %v2156
      %v2685 = vpack.c.b16 %v2165, %v2157
      %v2686 = vpack.c.b16 %v2166, %v2158
      %v2687 = vpack.c.b16 %v2167, %v2159
      %v2688 = vpack.c.b16 %v2168, %v2160
      %v2689 = vpack.c.b16 %v2169, %v2161
      %v2690 = vpack.c.b16 %v2178, %v2170
      %v2691 = vpack.c.b16 %v2179, %v2171
      %v2692 = vpack.c.b16 %v2180, %v2172
      %v2693 = vpack.c.b16 %v2181, %v2173
      %v2694 = vpack.c.b16 %v2182, %v2174
      %v2695 = vpack.c.b16 %v2183, %v2175
      %v2696 = vpack.c.b16 %v2184, %v2176
      %v2697 = vpack.c.b16 %v2185, %v2177
      %v2698 = vpack.c.b16 %v2194, %v2186
      %v2699 = vpack.c.b16 %v2195, %v2187
      %v2700 = vpack.c.b16 %v2196, %v2188
      %v2701 = vpack.c.b16 %v2197, %v2189
      %v2702 = vpack.c.b16 %v2198, %v2190
      %v2703 = vpack.c.b16 %v2199, %v2191
      %v2704 = vpack.c.b16 %v2200, %v2192
      %v2705 = vpack.c.b16 %v2201, %v2193
      %v2706 = vpack.c.b16 %v2210, %v2202
      %v2707 = vpack.c.b16 %v2211, %v2203
      %v2708 = vpack.c.b16 %v2212, %v2204
      %v2709 = vpack.c.b16 %v2213, %v2205
      %v2710 = vpack.c.b16 %v2214, %v2206
      %v2711 = vpack.c.b16 %v2215, %v2207
      %v2712 = vpack.c.b16 %v2216, %v2208
      %v2713 = vpack.c.b16 %v2217, %v2209
      %v2714 = vpack.c.b16 %v2226, %v2218
      %v2715 = vpack.c.b16 %v2227, %v2219
      %v2716 = vpack.c.b16 %v2228, %v2220
      %v2717 = vpack.c.b16 %v2229, %v2221
      %v2718 = vpack.c.b16 %v2230, %v2222
      %v2719 = vpack.c.b16 %v2231, %v2223
      %v2720 = vpack.c.b16 %v2232, %v2224
      %v2721 = vpack.c.b16 %v2233, %v2225
      %v2722 = vpack.c.b16 %v2242, %v2234
      %v2723 = vpack.c.b16 %v2243, %v2235
      %v2724 = vpack.c.b16 %v2244, %v2236
      %v2725 = vpack.c.b16 %v2245, %v2237
      %v2726 = vpack.c.b16 %v2246, %v2238
      %v2727 = vpack.c.b16 %v2247, %v2239
      %v2728 = vpack.c.b16 %v2248, %v2240
      %v2729 = vpack.c.b16 %v2249, %v2241
      %v2730 = vpack.c.b16 %v2258, %v2250
      %v2731 = vpack.c.b16 %v2259, %v2251
      %v2732 = vpack.c.b16 %v2260, %v2252
      %v2733 = vpack.c.b16 %v2261, %v2253
      %v2734 = vpack.c.b16 %v2262, %v2254
      %v2735 = vpack.c.b16 %v2263, %v2255
      %v2736 = vpack.c.b16 %v2264, %v2256
      %v2737 = vpack.c.b16 %v2265, %v2257
      %v2738 = vpack.c.b16 %v2274, %v2266
      %v2739 = vpack.c.b16 %v2275, %v2267
      %v2740 = vpack.c.b16 %v2276, %v2268
      %v2741 = vpack.c.b16 %v2277, %v2269
      %v2742 = vpack.c.b16 %v2278, %v2270
      %v2743 = vpack.c.b16 %v2279, %v2271
      %v2744 = vpack.c.b16 %v2280, %v2272
      %v2745 = vpack.c.b16 %v2281, %v2273
      %v2746 = vpack.c.b16 %v2290, %v2282
      %v2747 = vpack.c.b16 %v2291, %v2283
      %v2748 = vpack.c.b16 %v2292, %v2284
      %v2749 = vpack.c.b16 %v2293, %v2285
      %v2750 = vpack.c.b16 %v2294, %v2286
      %v2751 = vpack.c.b16 %v2295, %v2287
      %v2752 = vpack.c.b16 %v2296, %v2288
      %v2753 = vpack.c.b16 %v2297, %v2289
      %v2754 = vpack.c.b16 %v2306, %v2298
      %v2755 = vpack.c.b16 %v2307, %v2299
      %v2756 = vpack.c.b16 %v2308, %v2300
      %v2757 = vpack.c.b16 %v2309, %v2301
      %v2758 = vpack.c.b16 %v2310, %v2302
      %v2759 = vpack.c.b16 %v2311, %v2303
      %v2760 = vpack.c.b16 %v2312, %v2304
      %v2761 = vpack.c.b16 %v2313, %v2305
      %v2762 = vpack.c.b16 %v2322, %v2314
      %v2763 = vpack.c.b16 %v2323, %v2315
      %v2764 = vpack.c.b16 %v2324, %v2316
      %v2765 = vpack.c.b16 %v2325, %v2317
      %v2766 = vpack.c.b16 %v2326, %v2318
      %v2767 = vpack.c.b16 %v2327, %v2319
      %v2768 = vpack.c.b16 %v2328, %v2320
      %v2769 = vpack.c.b16 %v2329, %v2321
      %v2770 = vpack.c.b16 %v2338, %v2330
      %v2771 = vpack.c.b16 %v2339, %v2331
      %v2772 = vpack.c.b16 %v2340, %v2332
      %v2773 = vpack.c.b16 %v2341, %v2333
      %v2774 = vpack.c.b16 %v2342, %v2334
      %v2775 = vpack.c.b16 %v2343, %v2335
      %v2776 = vpack.c.b16 %v2344, %v2336
      %v2777 = vpack.c.b16 %v2345, %v2337
      %v2778 = vpack.c.b16 %v2354, %v2346
      %v2779 = vpack.c.b16 %v2355, %v2347
      %v2780 = vpack.c.b16 %v2356, %v2348
      %v2781 = vpack.c.b16 %v2357, %v2349
      %v2782 = vpack.c.b16 %v2358, %v2350
      %v2783 = vpack.c.b16 %v2359, %v2351
      %v2784 = vpack.c.b16 %v2360, %v2352
      %v2785 = vpack.c.b16 %v2361, %v2353
      %v2786 = vpack.c.b16 %v2370, %v2362
      %v2787 = vpack.c.b16 %v2371, %v2363
      %v2788 = vpack.c.b16 %v2372, %v2364
      %v2789 = vpack.c.b16 %v2373, %v2365
      %v2790 = vpack.c.b16 %v2374, %v2366
      %v2791 = vpack.c.b16 %v2375, %v2367
      %v2792 = vpack.c.b16 %v2376, %v2368
      %v2793 = vpack.c.b16 %v2377, %v2369
      %v2794 = vpack.c.b16 %v2386, %v2378
      %v2795 = vpack.c.b16 %v2387, %v2379
      %v2796 = vpack.c.b16 %v2388, %v2380
      %v2797 = vpack.c.b16 %v2389, %v2381
      %v2798 = vpack.c.b16 %v2390, %v2382
      %v2799 = vpack.c.b16 %v2391, %v2383
      %v2800 = vpack.c.b16 %v2392, %v2384
      %v2801 = vpack.c.b16 %v2393, %v2385
      %v2802 = vpack.c.b16 %v2402, %v2394
      %v2803 = vpack.c.b16 %v2403, %v2395
      %v2804 = vpack.c.b16 %v2404, %v2396
      %v2805 = vpack.c.b16 %v2405, %v2397
      %v2806 = vpack.c.b16 %v2406, %v2398
      %v2807 = vpack.c.b16 %v2407, %v2399
      %v2808 = vpack.c.b16 %v2408, %v2400
      %v2809 = vpack.c.b16 %v2409, %v2401
      %v2810 = vpack.c.b16 %v2418, %v2410
      %v2811 = vpack.c.b16 %v2419, %v2411
      %v2812 = vpack.c.b16 %v2420, %v2412
      %v2813 = vpack.c.b16 %v2421, %v2413
      %v2814 = vpack.c.b16 %v2422, %v2414
      %v2815 = vpack.c.b16 %v2423, %v2415
      %v2816 = vpack.c.b16 %v2424, %v2416
      %v2817 = vpack.c.b16 %v2425, %v2417
      %v2818 = vpack.c.b16 %v2434, %v2426
      %v2819 = vpack.c.b16 %v2435, %v2427
      %v2820 = vpack.c.b16 %v2436, %v2428
      %v2821 = vpack.c.b16 %v2437, %v2429
      %v2822 = vpack.c.b16 %v2438, %v2430
      %v2823 = vpack.c.b16 %v2439, %v2431
      %v2824 = vpack.c.b16 %v2440, %v2432
      %v2825 = vpack.c.b16 %v2441, %v2433
      %v2826 = vpack.c.b16 %v2450, %v2442
      %v2827 = vpack.c.b16 %v2451, %v2443
      %v2828 = vpack.c.b16 %v2452, %v2444
      %v2829 = vpack.c.b16 %v2453, %v2445
      %v2830 = vpack.c.b16 %v2454, %v2446
      %v2831 = vpack.c.b16 %v2455, %v2447
      %v2832 = vpack.c.b16 %v2456, %v2448
      %v2833 = vpack.c.b16 %v2457, %v2449
      %v2834 = vpack.c.b16 %v2466, %v2458
      %v2835 = vpack.c.b16 %v2467, %v2459
      %v2836 = vpack.c.b16 %v2468, %v2460
      %v2837 = vpack.c.b16 %v2469, %v2461
      %v2838 = vpack.c.b16 %v2470, %v2462
      %v2839 = vpack.c.b16 %v2471, %v2463
      %v2840 = vpack.c.b16 %v2472, %v2464
      %v2841 = vpack.c.b16 %v2473, %v2465
      %v2842 = vpack.c.b16 %v2482, %v2474
      %v2843 = vpack.c.b16 %v2483, %v2475
      %v2844 = vpack.c.b16 %v2484, %v2476
      %v2845 = vpack.c.b16 %v2485, %v2477
      %v2846 = vpack.c.b16 %v2486, %v2478
      %v2847 = vpack.c.b16 %v2487, %v2479
      %v2848 = vpack.c.b16 %v2488, %v2480
      %v2849 = vpack.c.b16 %v2489, %v2481
      %v2850 = vpack.c.b16 %v2498, %v2490
      %v2851 = vpack.c.b16 %v2499, %v2491
      %v2852 = vpack.c.b16 %v2500, %v2492
      %v2853 = vpack.c.b16 %v2501, %v2493
      %v2854 = vpack.c.b16 %v2502, %v2494
      %v2855 = vpack.c.b16 %v2503, %v2495
      %v2856 = vpack.c.b16 %v2504, %v2496
      %v2857 = vpack.c.b16 %v2505, %v2497
      %v2858 = vpack.c.b16 %v2514, %v2506
      %v2859 = vpack.c.b16 %v2515, %v2507
      %v2860 = vpack.c.b16 %v2516, %v2508
      %v2861 = vpack.c.b16 %v2517, %v2509
      %v2862 = vpack.c.b16 %v2518, %v2510
      %v2863 = vpack.c.b16 %v2519, %v2511
      %v2864 = vpack.c.b16 %v2520, %v2512
      %v2865 = vpack.c.b16 %v2521, %v2513
      %v2866 = vpack.c.b16 %v2530, %v2522
      %v2867 = vpack.c.b16 %v2531, %v2523
      %v2868 = vpack.c.b16 %v2532, %v2524
      %v2869 = vpack.c.b16 %v2533, %v2525
      %v2870 = vpack.c.b16 %v2534, %v2526
      %v2871 = vpack.c.b16 %v2535, %v2527
      %v2872 = vpack.c.b16 %v2536, %v2528
      %v2873 = vpack.c.b16 %v2537, %v2529
      %v2874 = vpack.c.b16 %v2546, %v2538
      %v2875 = vpack.c.b16 %v2547, %v2539
      %v2876 = vpack.c.b16 %v2548, %v2540
      %v2877 = vpack.c.b16 %v2549, %v2541
      %v2878 = vpack.c.b16 %v2550, %v2542
      %v2879 = vpack.c.b16 %v2551, %v2543
      %v2880 = vpack.c.b16 %v2552, %v2544
      %v2881 = vpack.c.b16 %v2553, %v2545
      %v2882 = vpack.c.b16 %v2562, %v2554
      %v2883 = vpack.c.b16 %v2563, %v2555
      %v2884 = vpack.c.b16 %v2564, %v2556
      %v2885 = vpack.c.b16 %v2565, %v2557
      %v2886 = vpack.c.b16 %v2566, %v2558
      %v2887 = vpack.c.b16 %v2567, %v2559
      %v2888 = vpack.c.b16 %v2568, %v2560
      %v2889 = vpack.c.b16 %v2569, %v2561
      %3210 = vmatprep.subr.bf16.mxu0 %v2571
      %3211 = vmatpush1.bf16.msra.mxu0 %v2570
      %3212 = vmatprep.subr.bf16.mxu0 %v2579
      %3213 = vmatpush1.bf16.msra.mxu0 %v2578
      %3214 = vmatprep.subr.bf16.mxu0 %v2587
      %3215 = vmatpush1.bf16.msra.mxu0 %v2586
      %3216 = vmatprep.subr.bf16.mxu0 %v2595
      %3217 = vmatpush1.bf16.msra.mxu0 %v2594
      %3218 = vmatprep.subr.bf16.mxu0 %v2603
      %3219 = vmatpush1.bf16.msra.mxu0 %v2602
      %3220 = vmatprep.subr.bf16.mxu0 %v2611
      %3221 = vmatpush1.bf16.msra.mxu0 %v2610
      %3222 = vmatprep.subr.bf16.mxu0 %v2619
      %3223 = vmatpush1.bf16.msra.mxu0 %v2618
      %3224 = vmatprep.subr.bf16.mxu0 %v2627
      %3225 = vmatpush1.bf16.msra.mxu0 %v2626
      %3226 = vmatprep.subr.bf16.mxu0 %v2635
      %3227 = vmatpush1.bf16.msra.mxu0 %v2634
      %3228 = vmatprep.subr.bf16.mxu0 %v2643
      %3229 = vmatpush1.bf16.msra.mxu0 %v2642
      %3230 = vmatprep.subr.bf16.mxu0 %v2651
      %3231 = vmatpush1.bf16.msra.mxu0 %v2650
      %3232 = vmatprep.subr.bf16.mxu0 %v2659
      %3233 = vmatpush1.bf16.msra.mxu0 %v2658
      %3234 = vmatprep.subr.bf16.mxu0 %v2667
      %3235 = vmatpush1.bf16.msra.mxu0 %v2666
      %3236 = vmatprep.subr.bf16.mxu0 %v2675
      %3237 = vmatpush1.bf16.msra.mxu0 %v2674
      %3238 = vmatprep.subr.bf16.mxu0 %v2683
      %3239 = vmatpush1.bf16.msra.mxu0 %v2682
      %3240 = vmatprep.subr.bf16.mxu0 %v2691
      %3241 = vmatpush1.bf16.msra.mxu0 %v2690
      %3242 = vmatprep.mubr.bf16.mxu0 %v1244
      %3243 = vmatmul.mubr.bf16.gmra.mrb[0].mxu0 %v1243
      %v3244 = vpop.f32.mrb[0].mxu0
      %v3245 = vadd.f32 %v1573, %v3244
      %v3246 = vpop.f32.mrb[0].mxu0
      %v3247 = vadd.f32 %v1577, %v3246
      %v3248 = vpop.f32.mrb[0].mxu0
      %v3249 = vpop.f32.mrb[0].mxu0
      %3250 = vdwg.mxu0
      %3251 = vmatprep.subr.bf16.mxu0 %v2699
      %3252 = vmatpush1.bf16.msra.mxu0 %v2698
      %3253 = vmatprep.subr.bf16.mxu0 %v2707
      %3254 = vmatpush1.bf16.msra.mxu0 %v2706
      %3255 = vmatprep.subr.bf16.mxu0 %v2715
      %3256 = vmatpush1.bf16.msra.mxu0 %v2714
      %3257 = vmatprep.subr.bf16.mxu0 %v2723
      %3258 = vmatpush1.bf16.msra.mxu0 %v2722
      %3259 = vmatprep.subr.bf16.mxu0 %v2731
      %3260 = vmatpush1.bf16.msra.mxu0 %v2730
      %3261 = vmatprep.subr.bf16.mxu0 %v2739
      %3262 = vmatpush1.bf16.msra.mxu0 %v2738
      %3263 = vmatprep.subr.bf16.mxu0 %v2747
      %3264 = vmatpush1.bf16.msra.mxu0 %v2746
      %3265 = vmatprep.subr.bf16.mxu0 %v2755
      %3266 = vmatpush1.bf16.msra.mxu0 %v2754
      %3267 = vmatprep.subr.bf16.mxu0 %v2763
      %3268 = vmatpush1.bf16.msra.mxu0 %v2762
      %3269 = vmatprep.subr.bf16.mxu0 %v2771
      %3270 = vmatpush1.bf16.msra.mxu0 %v2770
      %3271 = vmatprep.subr.bf16.mxu0 %v2779
      %3272 = vmatpush1.bf16.msra.mxu0 %v2778
      %3273 = vmatprep.subr.bf16.mxu0 %v2787
      %3274 = vmatpush1.bf16.msra.mxu0 %v2786
      %3275 = vmatprep.subr.bf16.mxu0 %v2795
      %3276 = vmatpush1.bf16.msra.mxu0 %v2794
      %3277 = vmatprep.subr.bf16.mxu0 %v2803
      %3278 = vmatpush1.bf16.msra.mxu0 %v2802
      %3279 = vmatprep.subr.bf16.mxu0 %v2811
      %3280 = vmatpush1.bf16.msra.mxu0 %v2810
      %3281 = vmatprep.subr.bf16.mxu0 %v2819
      %3282 = vmatpush1.bf16.msra.mxu0 %v2818
      %3283 = vmatprep.mubr.bf16.mxu0 %v1246
      %3284 = vmatmul.mubr.bf16.gmra.mrb[0].mxu0 %v1245
      %v3285 = vpop.f32.mrb[0].mxu0
      %v3286 = vadd.f32 %v3245, %v3285
      %v3287 = vpop.f32.mrb[0].mxu0
      %v3288 = vadd.f32 %v3247, %v3287
      %v3289 = vpop.f32.mrb[0].mxu0
      %v3290 = vpop.f32.mrb[0].mxu0
      %3291 = vdwg.mxu0
      %3292 = vmatprep.subr.bf16.mxu0 %v2827
      %3293 = vmatpush1.bf16.msra.mxu0 %v2826
      %3294 = vmatprep.subr.bf16.mxu0 %v2835
      %3295 = vmatpush1.bf16.msra.mxu0 %v2834
      %3296 = vmatprep.subr.bf16.mxu0 %v2843
      %3297 = vmatpush1.bf16.msra.mxu0 %v2842
      %3298 = vmatprep.subr.bf16.mxu0 %v2851
      %3299 = vmatpush1.bf16.msra.mxu0 %v2850
      %3300 = vmatprep.subr.bf16.mxu0 %v2859
      %3301 = vmatpush1.bf16.msra.mxu0 %v2858
      %3302 = vmatprep.subr.bf16.mxu0 %v2867
      %3303 = vmatpush1.bf16.msra.mxu0 %v2866
      %3304 = vmatprep.subr.bf16.mxu0 %v2875
      %3305 = vmatpush1.bf16.msra.mxu0 %v2874
      %3306 = vmatprep.subr.bf16.mxu0 %v2883
      %3307 = vmatpush1.bf16.msra.mxu0 %v2882
      %3308 = vmatprep.subr.bf16.mxu0 0
      %3309 = vmatpush1.bf16.msra.mxu0 0
      %3310 = vmatprep.subr.bf16.mxu0 0
      %3311 = vmatpush1.bf16.msra.mxu0 0
      %3312 = vmatprep.subr.bf16.mxu0 0
      %3313 = vmatpush1.bf16.msra.mxu0 0
      %3314 = vmatprep.subr.bf16.mxu0 0
      %3315 = vmatpush1.bf16.msra.mxu0 0
      %3316 = vmatprep.subr.bf16.mxu0 0
      %3317 = vmatpush1.bf16.msra.mxu0 0
      %3318 = vmatprep.subr.bf16.mxu0 0
      %3319 = vmatpush1.bf16.msra.mxu0 0
      %3320 = vmatprep.subr.bf16.mxu0 0
      %3321 = vmatpush1.bf16.msra.mxu0 0
      %3322 = vmatprep.subr.bf16.mxu0 0
      %3323 = vmatpush1.bf16.msra.mxu0 0
      %3324 = vmatprep.mubr.bf16.mxu0 0
      %3325 = vmatmul.mubr.bf16.gmra.mrb[0].mxu0 %v1247
      %v3326 = vpop.f32.mrb[0].mxu0
      %v3327 = vadd.f32 %v3286, %v3326
      %v3328 = vpop.f32.mrb[0].mxu0
      %v3329 = vadd.f32 %v3288, %v3328
      %v3330 = vpop.f32.mrb[0].mxu0
      %v3331 = vpop.f32.mrb[0].mxu0
      %3332 = vdwg.mxu0
      %3333 = vmatprep.subr.bf16.mxu0 %v2573
      %3334 = vmatpush1.bf16.msra.mxu0 %v2572
      %3335 = vmatprep.subr.bf16.mxu0 %v2581
      %3336 = vmatpush1.bf16.msra.mxu0 %v2580
      %3337 = vmatprep.subr.bf16.mxu0 %v2589
      %3338 = vmatpush1.bf16.msra.mxu0 %v2588
      %3339 = vmatprep.subr.bf16.mxu0 %v2597
      %3340 = vmatpush1.bf16.msra.mxu0 %v2596
      %3341 = vmatprep.subr.bf16.mxu0 %v2605
      %3342 = vmatpush1.bf16.msra.mxu0 %v2604
      %3343 = vmatprep.subr.bf16.mxu0 %v2613
      %3344 = vmatpush1.bf16.msra.mxu0 %v2612
      %3345 = vmatprep.subr.bf16.mxu0 %v2621
      %3346 = vmatpush1.bf16.msra.mxu0 %v2620
      %3347 = vmatprep.subr.bf16.mxu0 %v2629
      %3348 = vmatpush1.bf16.msra.mxu0 %v2628
      %3349 = vmatprep.subr.bf16.mxu0 %v2637
      %3350 = vmatpush1.bf16.msra.mxu0 %v2636
      %3351 = vmatprep.subr.bf16.mxu0 %v2645
      %3352 = vmatpush1.bf16.msra.mxu0 %v2644
      %3353 = vmatprep.subr.bf16.mxu0 %v2653
      %3354 = vmatpush1.bf16.msra.mxu0 %v2652
      %3355 = vmatprep.subr.bf16.mxu0 %v2661
      %3356 = vmatpush1.bf16.msra.mxu0 %v2660
      %3357 = vmatprep.subr.bf16.mxu0 %v2669
      %3358 = vmatpush1.bf16.msra.mxu0 %v2668
      %3359 = vmatprep.subr.bf16.mxu0 %v2677
      %3360 = vmatpush1.bf16.msra.mxu0 %v2676
      %3361 = vmatprep.subr.bf16.mxu0 %v2685
      %3362 = vmatpush1.bf16.msra.mxu0 %v2684
      %3363 = vmatprep.subr.bf16.mxu0 %v2693
      %3364 = vmatpush1.bf16.msra.mxu0 %v2692
      %3365 = vmatprep.mubr.bf16.mxu0 %v1244
      %3366 = vmatmul.mubr.bf16.gmra.mrb[0].mxu0 %v1243
      %v3367 = vpop.f32.mrb[0].mxu0
      %v3368 = vadd.f32 %v1581, %v3367
      %v3369 = vpop.f32.mrb[0].mxu0
      %v3370 = vadd.f32 %v1585, %v3369
      %v3371 = vpop.f32.mrb[0].mxu0
      %v3372 = vpop.f32.mrb[0].mxu0
      %3373 = vdwg.mxu0
      %3374 = vmatprep.subr.bf16.mxu0 %v2701
      %3375 = vmatpush1.bf16.msra.mxu0 %v2700
      %3376 = vmatprep.subr.bf16.mxu0 %v2709
      %3377 = vmatpush1.bf16.msra.mxu0 %v2708
      %3378 = vmatprep.subr.bf16.mxu0 %v2717
      %3379 = vmatpush1.bf16.msra.mxu0 %v2716
      %3380 = vmatprep.subr.bf16.mxu0 %v2725
      %3381 = vmatpush1.bf16.msra.mxu0 %v2724
      %3382 = vmatprep.subr.bf16.mxu0 %v2733
      %3383 = vmatpush1.bf16.msra.mxu0 %v2732
      %3384 = vmatprep.subr.bf16.mxu0 %v2741
      %3385 = vmatpush1.bf16.msra.mxu0 %v2740
      %3386 = vmatprep.subr.bf16.mxu0 %v2749
      %3387 = vmatpush1.bf16.msra.mxu0 %v2748
      %3388 = vmatprep.subr.bf16.mxu0 %v2757
      %3389 = vmatpush1.bf16.msra.mxu0 %v2756
      %3390 = vmatprep.subr.bf16.mxu0 %v2765
      %3391 = vmatpush1.bf16.msra.mxu0 %v2764
      %3392 = vmatprep.subr.bf16.mxu0 %v2773
      %3393 = vmatpush1.bf16.msra.mxu0 %v2772
      %3394 = vmatprep.subr.bf16.mxu0 %v2781
      %3395 = vmatpush1.bf16.msra.mxu0 %v2780
      %3396 = vmatprep.subr.bf16.mxu0 %v2789
      %3397 = vmatpush1.bf16.msra.mxu0 %v2788
      %3398 = vmatprep.subr.bf16.mxu0 %v2797
      %3399 = vmatpush1.bf16.msra.mxu0 %v2796
      %3400 = vmatprep.subr.bf16.mxu0 %v2805
      %3401 = vmatpush1.bf16.msra.mxu0 %v2804
      %3402 = vmatprep.subr.bf16.mxu0 %v2813
      %3403 = vmatpush1.bf16.msra.mxu0 %v2812
      %3404 = vmatprep.subr.bf16.mxu0 %v2821
      %3405 = vmatpush1.bf16.msra.mxu0 %v2820
      %3406 = vmatprep.mubr.bf16.mxu0 %v1246
      %3407 = vmatmul.mubr.bf16.gmra.mrb[0].mxu0 %v1245
      %v3408 = vpop.f32.mrb[0].mxu0
      %v3409 = vadd.f32 %v3368, %v3408
      %v3410 = vpop.f32.mrb[0].mxu0
      %v3411 = vadd.f32 %v3370, %v3410
      %v3412 = vpop.f32.mrb[0].mxu0
      %v3413 = vpop.f32.mrb[0].mxu0
      %3414 = vdwg.mxu0
      %3415 = vmatprep.subr.bf16.mxu0 %v2829
      %3416 = vmatpush1.bf16.msra.mxu0 %v2828
      %3417 = vmatprep.subr.bf16.mxu0 %v2837
      %3418 = vmatpush1.bf16.msra.mxu0 %v2836
      %3419 = vmatprep.subr.bf16.mxu0 %v2845
      %3420 = vmatpush1.bf16.msra.mxu0 %v2844
      %3421 = vmatprep.subr.bf16.mxu0 %v2853
      %3422 = vmatpush1.bf16.msra.mxu0 %v2852
      %3423 = vmatprep.subr.bf16.mxu0 %v2861
      %3424 = vmatpush1.bf16.msra.mxu0 %v2860
      %3425 = vmatprep.subr.bf16.mxu0 %v2869
      %3426 = vmatpush1.bf16.msra.mxu0 %v2868
      %3427 = vmatprep.subr.bf16.mxu0 %v2877
      %3428 = vmatpush1.bf16.msra.mxu0 %v2876
      %3429 = vmatprep.subr.bf16.mxu0 %v2885
      %3430 = vmatpush1.bf16.msra.mxu0 %v2884
      %3431 = vmatprep.subr.bf16.mxu0 0
      %3432 = vmatpush1.bf16.msra.mxu0 0
      %3433 = vmatprep.subr.bf16.mxu0 0
      %3434 = vmatpush1.bf16.msra.mxu0 0
      %3435 = vmatprep.subr.bf16.mxu0 0
      %3436 = vmatpush1.bf16.msra.mxu0 0
      %3437 = vmatprep.subr.bf16.mxu0 0
      %3438 = vmatpush1.bf16.msra.mxu0 0
      %3439 = vmatprep.subr.bf16.mxu0 0
      %3440 = vmatpush1.bf16.msra.mxu0 0
      %3441 = vmatprep.subr.bf16.mxu0 0
      %3442 = vmatpush1.bf16.msra.mxu0 0
      %3443 = vmatprep.subr.bf16.mxu0 0
      %3444 = vmatpush1.bf16.msra.mxu0 0
      %3445 = vmatprep.subr.bf16.mxu0 0
      %3446 = vmatpush1.bf16.msra.mxu0 0
      %3447 = vmatprep.mubr.bf16.mxu0 0
      %3448 = vmatmul.mubr.bf16.gmra.mrb[0].mxu0 %v1247
      %v3449 = vpop.f32.mrb[0].mxu0
      %v3450 = vadd.f32 %v3409, %v3449
      %v3451 = vpop.f32.mrb[0].mxu0
      %v3452 = vadd.f32 %v3411, %v3451
      %v3453 = vpop.f32.mrb[0].mxu0
      %v3454 = vpop.f32.mrb[0].mxu0
      %3455 = vdwg.mxu0
      %3456 = vmatprep.subr.bf16.mxu0 %v2575
      %3457 = vmatpush1.bf16.msra.mxu0 %v2574
      %3458 = vmatprep.subr.bf16.mxu0 %v2583
      %3459 = vmatpush1.bf16.msra.mxu0 %v2582
      %3460 = vmatprep.subr.bf16.mxu0 %v2591
      %3461 = vmatpush1.bf16.msra.mxu0 %v2590
      %3462 = vmatprep.subr.bf16.mxu0 %v2599
      %3463 = vmatpush1.bf16.msra.mxu0 %v2598
      %3464 = vmatprep.subr.bf16.mxu0 %v2607
      %3465 = vmatpush1.bf16.msra.mxu0 %v2606
      %3466 = vmatprep.subr.bf16.mxu0 %v2615
      %3467 = vmatpush1.bf16.msra.mxu0 %v2614
      %3468 = vmatprep.subr.bf16.mxu0 %v2623
      %3469 = vmatpush1.bf16.msra.mxu0 %v2622
      %3470 = vmatprep.subr.bf16.mxu0 %v2631
      %3471 = vmatpush1.bf16.msra.mxu0 %v2630
      %3472 = vmatprep.subr.bf16.mxu0 %v2639
      %3473 = vmatpush1.bf16.msra.mxu0 %v2638
      %3474 = vmatprep.subr.bf16.mxu0 %v2647
      %3475 = vmatpush1.bf16.msra.mxu0 %v2646
      %3476 = vmatprep.subr.bf16.mxu0 %v2655
      %3477 = vmatpush1.bf16.msra.mxu0 %v2654
      %3478 = vmatprep.subr.bf16.mxu0 %v2663
      %3479 = vmatpush1.bf16.msra.mxu0 %v2662
      %3480 = vmatprep.subr.bf16.mxu0 %v2671
      %3481 = vmatpush1.bf16.msra.mxu0 %v2670
      %3482 = vmatprep.subr.bf16.mxu0 %v2679
      %3483 = vmatpush1.bf16.msra.mxu0 %v2678
      %3484 = vmatprep.subr.bf16.mxu0 %v2687
      %3485 = vmatpush1.bf16.msra.mxu0 %v2686
      %3486 = vmatprep.subr.bf16.mxu0 %v2695
      %3487 = vmatpush1.bf16.msra.mxu0 %v2694
      %3488 = vmatprep.mubr.bf16.mxu0 %v1244
      %3489 = vmatmul.mubr.bf16.gmra.mrb[0].mxu0 %v1243
      %v3490 = vpop.f32.mrb[0].mxu0
      %v3491 = vadd.f32 %v1589, %v3490
      %v3492 = vpop.f32.mrb[0].mxu0
      %v3493 = vadd.f32 %v1593, %v3492
      %v3494 = vpop.f32.mrb[0].mxu0
      %v3495 = vpop.f32.mrb[0].mxu0
      %3496 = vdwg.mxu0
      %3497 = vmatprep.subr.bf16.mxu0 %v2703
      %3498 = vmatpush1.bf16.msra.mxu0 %v2702
      %3499 = vmatprep.subr.bf16.mxu0 %v2711
      %3500 = vmatpush1.bf16.msra.mxu0 %v2710
      %3501 = vmatprep.subr.bf16.mxu0 %v2719
      %3502 = vmatpush1.bf16.msra.mxu0 %v2718
      %3503 = vmatprep.subr.bf16.mxu0 %v2727
      %3504 = vmatpush1.bf16.msra.mxu0 %v2726
      %3505 = vmatprep.subr.bf16.mxu0 %v2735
      %3506 = vmatpush1.bf16.msra.mxu0 %v2734
      %3507 = vmatprep.subr.bf16.mxu0 %v2743
      %3508 = vmatpush1.bf16.msra.mxu0 %v2742
      %3509 = vmatprep.subr.bf16.mxu0 %v2751
      %3510 = vmatpush1.bf16.msra.mxu0 %v2750
      %3511 = vmatprep.subr.bf16.mxu0 %v2759
      %3512 = vmatpush1.bf16.msra.mxu0 %v2758
      %3513 = vmatprep.subr.bf16.mxu0 %v2767
      %3514 = vmatpush1.bf16.msra.mxu0 %v2766
      %3515 = vmatprep.subr.bf16.mxu0 %v2775
      %3516 = vmatpush1.bf16.msra.mxu0 %v2774
      %3517 = vmatprep.subr.bf16.mxu0 %v2783
      %3518 = vmatpush1.bf16.msra.mxu0 %v2782
      %3519 = vmatprep.subr.bf16.mxu0 %v2791
      %3520 = vmatpush1.bf16.msra.mxu0 %v2790
      %3521 = vmatprep.subr.bf16.mxu0 %v2799
      %3522 = vmatpush1.bf16.msra.mxu0 %v2798
      %3523 = vmatprep.subr.bf16.mxu0 %v2807
      %3524 = vmatpush1.bf16.msra.mxu0 %v2806
      %3525 = vmatprep.subr.bf16.mxu0 %v2815
      %3526 = vmatpush1.bf16.msra.mxu0 %v2814
      %3527 = vmatprep.subr.bf16.mxu0 %v2823
      %3528 = vmatpush1.bf16.msra.mxu0 %v2822
      %3529 = vmatprep.mubr.bf16.mxu0 %v1246
      %3530 = vmatmul.mubr.bf16.gmra.mrb[0].mxu0 %v1245
      %v3531 = vpop.f32.mrb[0].mxu0
      %v3532 = vadd.f32 %v3491, %v3531
      %v3533 = vpop.f32.mrb[0].mxu0
      %v3534 = vadd.f32 %v3493, %v3533
      %v3535 = vpop.f32.mrb[0].mxu0
      %v3536 = vpop.f32.mrb[0].mxu0
      %3537 = vdwg.mxu0
      %3538 = vmatprep.subr.bf16.mxu0 %v2831
      %3539 = vmatpush1.bf16.msra.mxu0 %v2830
      %3540 = vmatprep.subr.bf16.mxu0 %v2839
      %3541 = vmatpush1.bf16.msra.mxu0 %v2838
      %3542 = vmatprep.subr.bf16.mxu0 %v2847
      %3543 = vmatpush1.bf16.msra.mxu0 %v2846
      %3544 = vmatprep.subr.bf16.mxu0 %v2855
      %3545 = vmatpush1.bf16.msra.mxu0 %v2854
      %3546 = vmatprep.subr.bf16.mxu0 %v2863
      %3547 = vmatpush1.bf16.msra.mxu0 %v2862
      %3548 = vmatprep.subr.bf16.mxu0 %v2871
      %3549 = vmatpush1.bf16.msra.mxu0 %v2870
      %3550 = vmatprep.subr.bf16.mxu0 %v2879
      %3551 = vmatpush1.bf16.msra.mxu0 %v2878
      %3552 = vmatprep.subr.bf16.mxu0 %v2887
      %3553 = vmatpush1.bf16.msra.mxu0 %v2886
      %3554 = vmatprep.subr.bf16.mxu0 0
      %3555 = vmatpush1.bf16.msra.mxu0 0
      %3556 = vmatprep.subr.bf16.mxu0 0
      %3557 = vmatpush1.bf16.msra.mxu0 0
      %3558 = vmatprep.subr.bf16.mxu0 0
      %3559 = vmatpush1.bf16.msra.mxu0 0
      %3560 = vmatprep.subr.bf16.mxu0 0
      %3561 = vmatpush1.bf16.msra.mxu0 0
      %3562 = vmatprep.subr.bf16.mxu0 0
      %3563 = vmatpush1.bf16.msra.mxu0 0
      %3564 = vmatprep.subr.bf16.mxu0 0
      %3565 = vmatpush1.bf16.msra.mxu0 0
      %3566 = vmatprep.subr.bf16.mxu0 0
      %3567 = vmatpush1.bf16.msra.mxu0 0
      %3568 = vmatprep.subr.bf16.mxu0 0
      %3569 = vmatpush1.bf16.msra.mxu0 0
      %3570 = vmatprep.mubr.bf16.mxu0 0
      %3571 = vmatmul.mubr.bf16.gmra.mrb[0].mxu0 %v1247
      %v3572 = vpop.f32.mrb[0].mxu0
      %v3573 = vadd.f32 %v3532, %v3572
      %v3574 = vpop.f32.mrb[0].mxu0
      %v3575 = vadd.f32 %v3534, %v3574
      %v3576 = vpop.f32.mrb[0].mxu0
      %v3577 = vpop.f32.mrb[0].mxu0
      %3578 = vdwg.mxu0
      %3579 = vmatprep.subr.bf16.mxu0 %v2577
      %3580 = vmatpush1.bf16.msra.mxu0 %v2576
      %3581 = vmatprep.subr.bf16.mxu0 %v2585
      %3582 = vmatpush1.bf16.msra.mxu0 %v2584
      %3583 = vmatprep.subr.bf16.mxu0 %v2593
      %3584 = vmatpush1.bf16.msra.mxu0 %v2592
      %3585 = vmatprep.subr.bf16.mxu0 %v2601
      %3586 = vmatpush1.bf16.msra.mxu0 %v2600
      %3587 = vmatprep.subr.bf16.mxu0 %v2609
      %3588 = vmatpush1.bf16.msra.mxu0 %v2608
      %3589 = vmatprep.subr.bf16.mxu0 %v2617
      %3590 = vmatpush1.bf16.msra.mxu0 %v2616
      %3591 = vmatprep.subr.bf16.mxu0 %v2625
      %3592 = vmatpush1.bf16.msra.mxu0 %v2624
      %3593 = vmatprep.subr.bf16.mxu0 %v2633
      %3594 = vmatpush1.bf16.msra.mxu0 %v2632
      %3595 = vmatprep.subr.bf16.mxu0 %v2641
      %3596 = vmatpush1.bf16.msra.mxu0 %v2640
      %3597 = vmatprep.subr.bf16.mxu0 %v2649
      %3598 = vmatpush1.bf16.msra.mxu0 %v2648
      %3599 = vmatprep.subr.bf16.mxu0 %v2657
      %3600 = vmatpush1.bf16.msra.mxu0 %v2656
      %3601 = vmatprep.subr.bf16.mxu0 %v2665
      %3602 = vmatpush1.bf16.msra.mxu0 %v2664
      %3603 = vmatprep.subr.bf16.mxu0 %v2673
      %3604 = vmatpush1.bf16.msra.mxu0 %v2672
      %3605 = vmatprep.subr.bf16.mxu0 %v2681
      %3606 = vmatpush1.bf16.msra.mxu0 %v2680
      %3607 = vmatprep.subr.bf16.mxu0 %v2689
      %3608 = vmatpush1.bf16.msra.mxu0 %v2688
      %3609 = vmatprep.subr.bf16.mxu0 %v2697
      %3610 = vmatpush1.bf16.msra.mxu0 %v2696
      %3611 = vmatprep.mubr.bf16.mxu0 %v1244
      %3612 = vmatmul.mubr.bf16.gmra.mrb[0].mxu0 %v1243
      %v3613 = vpop.f32.mrb[0].mxu0
      %v3614 = vadd.f32 %v1597, %v3613
      %v3615 = vpop.f32.mrb[0].mxu0
      %v3616 = vadd.f32 %v1601, %v3615
      %v3617 = vpop.f32.mrb[0].mxu0
      %v3618 = vpop.f32.mrb[0].mxu0
      %3619 = vdwg.mxu0
      %3620 = vmatprep.subr.bf16.mxu0 %v2705
      %3621 = vmatpush1.bf16.msra.mxu0 %v2704
      %3622 = vmatprep.subr.bf16.mxu0 %v2713
      %3623 = vmatpush1.bf16.msra.mxu0 %v2712
      %3624 = vmatprep.subr.bf16.mxu0 %v2721
      %3625 = vmatpush1.bf16.msra.mxu0 %v2720
      %3626 = vmatprep.subr.bf16.mxu0 %v2729
      %3627 = vmatpush1.bf16.msra.mxu0 %v2728
      %3628 = vmatprep.subr.bf16.mxu0 %v2737
      %3629 = vmatpush1.bf16.msra.mxu0 %v2736
      %3630 = vmatprep.subr.bf16.mxu0 %v2745
      %3631 = vmatpush1.bf16.msra.mxu0 %v2744
      %3632 = vmatprep.subr.bf16.mxu0 %v2753
      %3633 = vmatpush1.bf16.msra.mxu0 %v2752
      %3634 = vmatprep.subr.bf16.mxu0 %v2761
      %3635 = vmatpush1.bf16.msra.mxu0 %v2760
      %3636 = vmatprep.subr.bf16.mxu0 %v2769
      %3637 = vmatpush1.bf16.msra.mxu0 %v2768
      %3638 = vmatprep.subr.bf16.mxu0 %v2777
      %3639 = vmatpush1.bf16.msra.mxu0 %v2776
      %3640 = vmatprep.subr.bf16.mxu0 %v2785
      %3641 = vmatpush1.bf16.msra.mxu0 %v2784
      %3642 = vmatprep.subr.bf16.mxu0 %v2793
      %3643 = vmatpush1.bf16.msra.mxu0 %v2792
      %3644 = vmatprep.subr.bf16.mxu0 %v2801
      %3645 = vmatpush1.bf16.msra.mxu0 %v2800
      %3646 = vmatprep.subr.bf16.mxu0 %v2809
      %3647 = vmatpush1.bf16.msra.mxu0 %v2808
      %3648 = vmatprep.subr.bf16.mxu0 %v2817
      %3649 = vmatpush1.bf16.msra.mxu0 %v2816
      %3650 = vmatprep.subr.bf16.mxu0 %v2825
      %3651 = vmatpush1.bf16.msra.mxu0 %v2824
      %3652 = vmatprep.mubr.bf16.mxu0 %v1246
      %3653 = vmatmul.mubr.bf16.gmra.mrb[0].mxu0 %v1245
      %v3654 = vpop.f32.mrb[0].mxu0
      %v3655 = vadd.f32 %v3614, %v3654
      %v3656 = vpop.f32.mrb[0].mxu0
      %v3657 = vadd.f32 %v3616, %v3656
      %v3658 = vpop.f32.mrb[0].mxu0
      %v3659 = vpop.f32.mrb[0].mxu0
      %3660 = vdwg.mxu0
      %3661 = vmatprep.subr.bf16.mxu0 %v2833
      %3662 = vmatpush1.bf16.msra.mxu0 %v2832
      %3663 = vmatprep.subr.bf16.mxu0 %v2841
      %3664 = vmatpush1.bf16.msra.mxu0 %v2840
      %3665 = vmatprep.subr.bf16.mxu0 %v2849
      %3666 = vmatpush1.bf16.msra.mxu0 %v2848
      %3667 = vmatprep.subr.bf16.mxu0 %v2857
      %3668 = vmatpush1.bf16.msra.mxu0 %v2856
      %3669 = vmatprep.subr.bf16.mxu0 %v2865
      %3670 = vmatpush1.bf16.msra.mxu0 %v2864
      %3671 = vmatprep.subr.bf16.mxu0 %v2873
      %3672 = vmatpush1.bf16.msra.mxu0 %v2872
      %3673 = vmatprep.subr.bf16.mxu0 %v2881
      %3674 = vmatpush1.bf16.msra.mxu0 %v2880
      %3675 = vmatprep.subr.bf16.mxu0 %v2889
      %3676 = vmatpush1.bf16.msra.mxu0 %v2888
      %3677 = vmatprep.subr.bf16.mxu0 0
      %3678 = vmatpush1.bf16.msra.mxu0 0
      %3679 = vmatprep.subr.bf16.mxu0 0
      %3680 = vmatpush1.bf16.msra.mxu0 0
      %3681 = vmatprep.subr.bf16.mxu0 0
      %3682 = vmatpush1.bf16.msra.mxu0 0
      %3683 = vmatprep.subr.bf16.mxu0 0
      %3684 = vmatpush1.bf16.msra.mxu0 0
      %3685 = vmatprep.subr.bf16.mxu0 0
      %3686 = vmatpush1.bf16.msra.mxu0 0
      %3687 = vmatprep.subr.bf16.mxu0 0
      %3688 = vmatpush1.bf16.msra.mxu0 0
      %3689 = vmatprep.subr.bf16.mxu0 0
      %3690 = vmatpush1.bf16.msra.mxu0 0
      %3691 = vmatprep.subr.bf16.mxu0 0
      %3692 = vmatpush1.bf16.msra.mxu0 0
      %3693 = vmatprep.mubr.bf16.mxu0 0
      %3694 = vmatmul.mubr.bf16.gmra.mrb[0].mxu0 %v1247
      %v3695 = vpop.f32.mrb[0].mxu0
      %v3696 = vadd.f32 %v3655, %v3695
      %v3697 = vpop.f32.mrb[0].mxu0
      %v3698 = vadd.f32 %v3657, %v3697
      %v3699 = vpop.f32.mrb[0].mxu0
      %v3700 = vpop.f32.mrb[0].mxu0
      %3701 = vdwg.mxu0
      %v3702 = vmax.f32 %v3327, 0.0
      %v3703 = vmax.f32 %v3329, 0.0
      %v3704 = vmax.f32 %v3450, 0.0
      %v3705 = vmax.f32 %v3452, 0.0
      %v3706 = vmax.f32 %v3573, 0.0
      %v3707 = vmax.f32 %v3575, 0.0
      %v3708 = vmax.f32 %v3696, 0.0
      %v3709 = vmax.f32 %v3698, 0.0
      %v3710 = vpack.c.bf16 %v3702, %v3702
      %v3711 = vpack.c.bf16 %v3703, %v3703
      %v3712 = vpack.c.bf16 %v3704, %v3704
      %v3713 = vpack.c.bf16 %v3705, %v3705
      %v3714 = vpack.c.bf16 %v3706, %v3706
      %v3715 = vpack.c.bf16 %v3707, %v3707
      %v3716 = vpack.c.bf16 %v3708, %v3708
      %v3717 = vpack.c.bf16 %v3709, %v3709
      %v3718 = vld [vmem:[#allocation12] sm:$0xf]
      %v3719 = vld [vmem:[#allocation12 + $0x4] sm:$0xf]
      %v3720 = vld [vmem:[#allocation12 + $0x8] sm:$0xf]
      %v3721 = vld [vmem:[#allocation12 + $0xc] sm:$0xf]
      %v3722 = vld [vmem:[#allocation12 + $0x10] sm:$0xf]
      %v3723 = vld [vmem:[#allocation12 + $0x14] sm:$0xf]
      %v3724 = vld [vmem:[#allocation12 + $0x18] sm:$0xf]
      %v3725 = vld [vmem:[#allocation12 + $0x1c] sm:$0xf]
      %v3726 = vld [vmem:[#allocation12 + $0x20] sm:$0xf]
      %v3727 = vld [vmem:[#allocation12 + $0x24] sm:$0xf]
      %v3728 = vld [vmem:[#allocation12 + $0x28] sm:$0xf]
      %v3729 = vld [vmem:[#allocation12 + $0x2c] sm:$0xf]
      %v3730 = vld [vmem:[#allocation12 + $0x30] sm:$0xf]
      %v3731 = vld [vmem:[#allocation12 + $0x34] sm:$0xf]
      %v3732 = vld [vmem:[#allocation12 + $0x38] sm:$0xf]
      %v3733 = vld [vmem:[#allocation12 + $0x3c] sm:$0xf]
      %v3734 = vld [vmem:[#allocation12 + $0x40] sm:$0xf]
      %v3735 = vld [vmem:[#allocation12 + $0x44] sm:$0xf]
      %v3736 = vld [vmem:[#allocation12 + $0x48] sm:$0xf]
      %v3737 = vld [vmem:[#allocation12 + $0x4c] sm:$0xf]
      %v3738 = vld [vmem:[#allocation12 + $0x50] sm:$0xf]
      %v3739 = vld [vmem:[#allocation12 + $0x54] sm:$0xf]
      %v3740 = vld [vmem:[#allocation12 + $0x58] sm:$0xf]
      %v3741 = vld [vmem:[#allocation12 + $0x5c] sm:$0xf]
      %v3742 = vld [vmem:[#allocation12 + $0x60] sm:$0xf]
      %v3743 = vld [vmem:[#allocation12 + $0x64] sm:$0xf]
      %v3744 = vld [vmem:[#allocation12 + $0x68] sm:$0xf]
      %v3745 = vld [vmem:[#allocation12 + $0x6c] sm:$0xf]
      %v3746 = vld [vmem:[#allocation12 + $0x70] sm:$0xf]
      %v3747 = vld [vmem:[#allocation12 + $0x74] sm:$0xf]
      %v3748 = vld [vmem:[#allocation12 + $0x78] sm:$0xf]
      %v3749 = vld [vmem:[#allocation12 + $0x7c] sm:$0xf]
      %v3750 = vld [vmem:[#allocation12 + $0x80] sm:$0xf]
      %v3751 = vld [vmem:[#allocation12 + $0x84] sm:$0xf]
      %v3752 = vld [vmem:[#allocation12 + $0x88] sm:$0xf]
      %v3753 = vld [vmem:[#allocation12 + $0x8c] sm:$0xf]
      %v3754 = vld [vmem:[#allocation12 + $0x90] sm:$0xf]
      %v3755 = vld [vmem:[#allocation12 + $0x94] sm:$0xf]
      %v3756 = vld [vmem:[#allocation12 + $0x98] sm:$0xf]
      %v3757 = vld [vmem:[#allocation12 + $0x9c] sm:$0xf]
      %v3758 = vld [vmem:[#allocation12 + $0xa0] sm:$0xf]
      %v3759 = vld [vmem:[#allocation12 + $0xa4] sm:$0xf]
      %v3760 = vld [vmem:[#allocation12 + $0xa8] sm:$0xf]
      %v3761 = vld [vmem:[#allocation12 + $0xac] sm:$0xf]
      %v3762 = vld [vmem:[#allocation12 + $0xb0] sm:$0xf]
      %v3763 = vld [vmem:[#allocation12 + $0xb4] sm:$0xf]
      %v3764 = vld [vmem:[#allocation12 + $0xb8] sm:$0xf]
      %v3765 = vld [vmem:[#allocation12 + $0xbc] sm:$0xf]
      %v3766 = vld [vmem:[#allocation12 + $0xc0] sm:$0xf]
      %v3767 = vld [vmem:[#allocation12 + $0xc4] sm:$0xf]
      %v3768 = vld [vmem:[#allocation12 + $0xc8] sm:$0xf]
      %v3769 = vld [vmem:[#allocation12 + $0xcc] sm:$0xf]
      %v3770 = vld [vmem:[#allocation12 + $0xd0] sm:$0xf]
      %v3771 = vld [vmem:[#allocation12 + $0xd4] sm:$0xf]
      %v3772 = vld [vmem:[#allocation12 + $0xd8] sm:$0xf]
      %v3773 = vld [vmem:[#allocation12 + $0xdc] sm:$0xf]
      %v3774 = vld [vmem:[#allocation12 + $0xe0] sm:$0xf]
      %v3775 = vld [vmem:[#allocation12 + $0xe4] sm:$0xf]
      %v3776 = vld [vmem:[#allocation12 + $0xe8] sm:$0xf]
      %v3777 = vld [vmem:[#allocation12 + $0xec] sm:$0xf]
      %v3778 = vld [vmem:[#allocation12 + $0xf0] sm:$0xf]
      %v3779 = vld [vmem:[#allocation12 + $0xf4] sm:$0xf]
      %v3780 = vld [vmem:[#allocation12 + $0xf8] sm:$0xf]
      %v3781 = vld [vmem:[#allocation12 + $0xfc] sm:$0xf]
      %v3782 = vld [vmem:[#allocation12 + $0x100] sm:$0xf]
      %v3783 = vld [vmem:[#allocation12 + $0x104] sm:$0xf]
      %v3784 = vld [vmem:[#allocation12 + $0x108] sm:$0xf]
      %v3785 = vld [vmem:[#allocation12 + $0x10c] sm:$0xf]
      %v3786 = vld [vmem:[#allocation12 + $0x110] sm:$0xf]
      %v3787 = vld [vmem:[#allocation12 + $0x114] sm:$0xf]
      %v3788 = vld [vmem:[#allocation12 + $0x118] sm:$0xf]
      %v3789 = vld [vmem:[#allocation12 + $0x11c] sm:$0xf]
      %v3790 = vld [vmem:[#allocation12 + $0x120] sm:$0xf]
      %v3791 = vld [vmem:[#allocation12 + $0x124] sm:$0xf]
      %v3792 = vld [vmem:[#allocation12 + $0x128] sm:$0xf]
      %v3793 = vld [vmem:[#allocation12 + $0x12c] sm:$0xf]
      %v3794 = vld [vmem:[#allocation12 + $0x130] sm:$0xf]
      %v3795 = vld [vmem:[#allocation12 + $0x134] sm:$0xf]
      %v3796 = vld [vmem:[#allocation12 + $0x138] sm:$0xf]
      %v3797 = vld [vmem:[#allocation12 + $0x13c] sm:$0xf]
      %v3798 = vld [vmem:[#allocation12 + $0x140] sm:$0xf]
      %v3799 = vld [vmem:[#allocation12 + $0x144] sm:$0xf]
      %v3800 = vld [vmem:[#allocation12 + $0x148] sm:$0xf]
      %v3801 = vld [vmem:[#allocation12 + $0x14c] sm:$0xf]
      %v3802 = vld [vmem:[#allocation12 + $0x150] sm:$0xf]
      %v3803 = vld [vmem:[#allocation12 + $0x154] sm:$0xf]
      %v3804 = vld [vmem:[#allocation12 + $0x158] sm:$0xf]
      %v3805 = vld [vmem:[#allocation12 + $0x15c] sm:$0xf]
      %v3806 = vld [vmem:[#allocation12 + $0x160] sm:$0xf]
      %v3807 = vld [vmem:[#allocation12 + $0x164] sm:$0xf]
      %v3808 = vld [vmem:[#allocation12 + $0x168] sm:$0xf]
      %v3809 = vld [vmem:[#allocation12 + $0x16c] sm:$0xf]
      %v3810 = vld [vmem:[#allocation12 + $0x170] sm:$0xf]
      %v3811 = vld [vmem:[#allocation12 + $0x174] sm:$0xf]
      %v3812 = vld [vmem:[#allocation12 + $0x178] sm:$0xf]
      %v3813 = vld [vmem:[#allocation12 + $0x17c] sm:$0xf]
      %v3814 = vld [vmem:[#allocation12 + $0x180] sm:$0xf]
      %v3815 = vld [vmem:[#allocation12 + $0x184] sm:$0xf]
      %v3816 = vld [vmem:[#allocation12 + $0x188] sm:$0xf]
      %v3817 = vld [vmem:[#allocation12 + $0x18c] sm:$0xf]
      %v3818 = vld [vmem:[#allocation12 + $0x190] sm:$0xf]
      %v3819 = vld [vmem:[#allocation12 + $0x194] sm:$0xf]
      %v3820 = vld [vmem:[#allocation12 + $0x198] sm:$0xf]
      %v3821 = vld [vmem:[#allocation12 + $0x19c] sm:$0xf]
      %v3822 = vld [vmem:[#allocation12 + $0x1a0] sm:$0xf]
      %v3823 = vld [vmem:[#allocation12 + $0x1a4] sm:$0xf]
      %v3824 = vld [vmem:[#allocation12 + $0x1a8] sm:$0xf]
      %v3825 = vld [vmem:[#allocation12 + $0x1ac] sm:$0xf]
      %v3826 = vld [vmem:[#allocation12 + $0x1b0] sm:$0xf]
      %v3827 = vld [vmem:[#allocation12 + $0x1b4] sm:$0xf]
      %v3828 = vld [vmem:[#allocation12 + $0x1b8] sm:$0xf]
      %v3829 = vld [vmem:[#allocation12 + $0x1bc] sm:$0xf]
      %v3830 = vld [vmem:[#allocation12 + $0x1c0] sm:$0xf]
      %v3831 = vld [vmem:[#allocation12 + $0x1c4] sm:$0xf]
      %v3832 = vld [vmem:[#allocation12 + $0x1c8] sm:$0xf]
      %v3833 = vld [vmem:[#allocation12 + $0x1cc] sm:$0xf]
      %v3834 = vld [vmem:[#allocation12 + $0x1d0] sm:$0xf]
      %v3835 = vld [vmem:[#allocation12 + $0x1d4] sm:$0xf]
      %v3836 = vld [vmem:[#allocation12 + $0x1d8] sm:$0xf]
      %v3837 = vld [vmem:[#allocation12 + $0x1dc] sm:$0xf]
      %v3838 = vld [vmem:[#allocation12 + $0x1e0] sm:$0xf]
      %v3839 = vld [vmem:[#allocation12 + $0x1e4] sm:$0xf]
      %v3840 = vld [vmem:[#allocation12 + $0x1e8] sm:$0xf]
      %v3841 = vld [vmem:[#allocation12 + $0x1ec] sm:$0xf]
      %v3842 = vld [vmem:[#allocation12 + $0x1f0] sm:$0xf]
      %v3843 = vld [vmem:[#allocation12 + $0x1f4] sm:$0xf]
      %v3844 = vld [vmem:[#allocation12 + $0x1f8] sm:$0xf]
      %v3845 = vld [vmem:[#allocation12 + $0x1fc] sm:$0xf]
      %v3846 = vld [vmem:[#allocation14] sm:$0x1]
      %v3848 = vlaneseq
      %v3849 = vshrl.u32 %v3848, 7
      %v3850 = vsub.s32 0, %v3849
      %v3851 = vrot.slane %v3846, %v3850
      %v3981 = vunpack.c.l.b16 %v3718
      %v3982 = vunpack.c.l.b16 %v3719
      %v3983 = vunpack.c.l.b16 %v3720
      %v3984 = vunpack.c.l.b16 %v3721
      %v3985 = vunpack.c.l.b16 %v3722
      %v3986 = vunpack.c.l.b16 %v3723
      %v3987 = vunpack.c.l.b16 %v3724
      %v3988 = vunpack.c.l.b16 %v3725
      %v3989 = vunpack.c.l.b16 %v3726
      %v3990 = vunpack.c.l.b16 %v3727
      %v3991 = vunpack.c.l.b16 %v3728
      %v3992 = vunpack.c.l.b16 %v3729
      %v3993 = vunpack.c.l.b16 %v3730
      %v3994 = vunpack.c.l.b16 %v3731
      %v3995 = vunpack.c.l.b16 %v3732
      %v3996 = vunpack.c.l.b16 %v3733
      %v3997 = vunpack.c.l.b16 %v3734
      %v3998 = vunpack.c.l.b16 %v3735
      %v3999 = vunpack.c.l.b16 %v3736
      %v4000 = vunpack.c.l.b16 %v3737
      %v4001 = vunpack.c.l.b16 %v3738
      %v4002 = vunpack.c.l.b16 %v3739
      %v4003 = vunpack.c.l.b16 %v3740
      %v4004 = vunpack.c.l.b16 %v3741
      %v4005 = vunpack.c.l.b16 %v3742
      %v4006 = vunpack.c.l.b16 %v3743
      %v4007 = vunpack.c.l.b16 %v3744
      %v4008 = vunpack.c.l.b16 %v3745
      %v4009 = vunpack.c.l.b16 %v3746
      %v4010 = vunpack.c.l.b16 %v3747
      %v4011 = vunpack.c.l.b16 %v3748
      %v4012 = vunpack.c.l.b16 %v3749
      %v4013 = vunpack.c.l.b16 %v3750
      %v4014 = vunpack.c.l.b16 %v3751
      %v4015 = vunpack.c.l.b16 %v3752
      %v4016 = vunpack.c.l.b16 %v3753
      %v4017 = vunpack.c.l.b16 %v3754
      %v4018 = vunpack.c.l.b16 %v3755
      %v4019 = vunpack.c.l.b16 %v3756
      %v4020 = vunpack.c.l.b16 %v3757
      %v4021 = vunpack.c.l.b16 %v3758
      %v4022 = vunpack.c.l.b16 %v3759
      %v4023 = vunpack.c.l.b16 %v3760
      %v4024 = vunpack.c.l.b16 %v3761
      %v4025 = vunpack.c.l.b16 %v3762
      %v4026 = vunpack.c.l.b16 %v3763
      %v4027 = vunpack.c.l.b16 %v3764
      %v4028 = vunpack.c.l.b16 %v3765
      %v4029 = vunpack.c.l.b16 %v3766
      %v4030 = vunpack.c.l.b16 %v3767
      %v4031 = vunpack.c.l.b16 %v3768
      %v4032 = vunpack.c.l.b16 %v3769
      %v4033 = vunpack.c.l.b16 %v3770
      %v4034 = vunpack.c.l.b16 %v3771
      %v4035 = vunpack.c.l.b16 %v3772
      %v4036 = vunpack.c.l.b16 %v3773
      %v4037 = vunpack.c.l.b16 %v3774
      %v4038 = vunpack.c.l.b16 %v3775
      %v4039 = vunpack.c.l.b16 %v3776
      %v4040 = vunpack.c.l.b16 %v3777
      %v4041 = vunpack.c.l.b16 %v3778
      %v4042 = vunpack.c.l.b16 %v3779
      %v4043 = vunpack.c.l.b16 %v3780
      %v4044 = vunpack.c.l.b16 %v3781
      %v4045 = vunpack.c.l.b16 %v3782
      %v4046 = vunpack.c.l.b16 %v3783
      %v4047 = vunpack.c.l.b16 %v3784
      %v4048 = vunpack.c.l.b16 %v3785
      %v4049 = vunpack.c.l.b16 %v3786
      %v4050 = vunpack.c.l.b16 %v3787
      %v4051 = vunpack.c.l.b16 %v3788
      %v4052 = vunpack.c.l.b16 %v3789
      %v4053 = vunpack.c.l.b16 %v3790
      %v4054 = vunpack.c.l.b16 %v3791
      %v4055 = vunpack.c.l.b16 %v3792
      %v4056 = vunpack.c.l.b16 %v3793
      %v4057 = vunpack.c.l.b16 %v3794
      %v4058 = vunpack.c.l.b16 %v3795
      %v4059 = vunpack.c.l.b16 %v3796
      %v4060 = vunpack.c.l.b16 %v3797
      %v4061 = vunpack.c.l.b16 %v3798
      %v4062 = vunpack.c.l.b16 %v3799
      %v4063 = vunpack.c.l.b16 %v3800
      %v4064 = vunpack.c.l.b16 %v3801
      %v4065 = vunpack.c.l.b16 %v3802
      %v4066 = vunpack.c.l.b16 %v3803
      %v4067 = vunpack.c.l.b16 %v3804
      %v4068 = vunpack.c.l.b16 %v3805
      %v4069 = vunpack.c.l.b16 %v3806
      %v4070 = vunpack.c.l.b16 %v3807
      %v4071 = vunpack.c.l.b16 %v3808
      %v4072 = vunpack.c.l.b16 %v3809
      %v4073 = vunpack.c.l.b16 %v3810
      %v4074 = vunpack.c.l.b16 %v3811
      %v4075 = vunpack.c.l.b16 %v3812
      %v4076 = vunpack.c.l.b16 %v3813
      %v4077 = vunpack.c.l.b16 %v3814
      %v4078 = vunpack.c.l.b16 %v3815
      %v4079 = vunpack.c.l.b16 %v3816
      %v4080 = vunpack.c.l.b16 %v3817
      %v4081 = vunpack.c.l.b16 %v3818
      %v4082 = vunpack.c.l.b16 %v3819
      %v4083 = vunpack.c.l.b16 %v3820
      %v4084 = vunpack.c.l.b16 %v3821
      %v4085 = vunpack.c.l.b16 %v3822
      %v4086 = vunpack.c.l.b16 %v3823
      %v4087 = vunpack.c.l.b16 %v3824
      %v4088 = vunpack.c.l.b16 %v3825
      %v4089 = vunpack.c.l.b16 %v3826
      %v4090 = vunpack.c.l.b16 %v3827
      %v4091 = vunpack.c.l.b16 %v3828
      %v4092 = vunpack.c.l.b16 %v3829
      %v4093 = vunpack.c.l.b16 %v3830
      %v4094 = vunpack.c.l.b16 %v3831
      %v4095 = vunpack.c.l.b16 %v3832
      %v4096 = vunpack.c.l.b16 %v3833
      %v4097 = vunpack.c.l.b16 %v3834
      %v4098 = vunpack.c.l.b16 %v3835
      %v4099 = vunpack.c.l.b16 %v3836
      %v4100 = vunpack.c.l.b16 %v3837
      %v4101 = vunpack.c.l.b16 %v3838
      %v4102 = vunpack.c.l.b16 %v3839
      %v4103 = vunpack.c.l.b16 %v3840
      %v4104 = vunpack.c.l.b16 %v3841
      %v4105 = vunpack.c.l.b16 %v3842
      %v4106 = vunpack.c.l.b16 %v3843
      %v4107 = vunpack.c.l.b16 %v3844
      %v4108 = vunpack.c.l.b16 %v3845
      %v4109 = vpack.c.b16 %v3982, %v3981
      %v4110 = vpack.c.b16 %v3984, %v3983
      %v4111 = vpack.c.b16 %v3986, %v3985
      %v4112 = vpack.c.b16 %v3988, %v3987
      %v4113 = vpack.c.b16 %v3990, %v3989
      %v4114 = vpack.c.b16 %v3992, %v3991
      %v4115 = vpack.c.b16 %v3994, %v3993
      %v4116 = vpack.c.b16 %v3996, %v3995
      %v4117 = vpack.c.b16 %v3998, %v3997
      %v4118 = vpack.c.b16 %v4000, %v3999
      %v4119 = vpack.c.b16 %v4002, %v4001
      %v4120 = vpack.c.b16 %v4004, %v4003
      %v4121 = vpack.c.b16 %v4006, %v4005
      %v4122 = vpack.c.b16 %v4008, %v4007
      %v4123 = vpack.c.b16 %v4010, %v4009
      %v4124 = vpack.c.b16 %v4012, %v4011
      %v4125 = vpack.c.b16 %v4014, %v4013
      %v4126 = vpack.c.b16 %v4016, %v4015
      %v4127 = vpack.c.b16 %v4018, %v4017
      %v4128 = vpack.c.b16 %v4020, %v4019
      %v4129 = vpack.c.b16 %v4022, %v4021
      %v4130 = vpack.c.b16 %v4024, %v4023
      %v4131 = vpack.c.b16 %v4026, %v4025
      %v4132 = vpack.c.b16 %v4028, %v4027
      %v4133 = vpack.c.b16 %v4030, %v4029
      %v4134 = vpack.c.b16 %v4032, %v4031
      %v4135 = vpack.c.b16 %v4034, %v4033
      %v4136 = vpack.c.b16 %v4036, %v4035
      %v4137 = vpack.c.b16 %v4038, %v4037
      %v4138 = vpack.c.b16 %v4040, %v4039
      %v4139 = vpack.c.b16 %v4042, %v4041
      %v4140 = vpack.c.b16 %v4044, %v4043
      %v4141 = vpack.c.b16 %v4046, %v4045
      %v4142 = vpack.c.b16 %v4048, %v4047
      %v4143 = vpack.c.b16 %v4050, %v4049
      %v4144 = vpack.c.b16 %v4052, %v4051
      %v4145 = vpack.c.b16 %v4054, %v4053
      %v4146 = vpack.c.b16 %v4056, %v4055
      %v4147 = vpack.c.b16 %v4058, %v4057
      %v4148 = vpack.c.b16 %v4060, %v4059
      %v4149 = vpack.c.b16 %v4062, %v4061
      %v4150 = vpack.c.b16 %v4064, %v4063
      %v4151 = vpack.c.b16 %v4066, %v4065
      %v4152 = vpack.c.b16 %v4068, %v4067
      %v4153 = vpack.c.b16 %v4070, %v4069
      %v4154 = vpack.c.b16 %v4072, %v4071
      %v4155 = vpack.c.b16 %v4074, %v4073
      %v4156 = vpack.c.b16 %v4076, %v4075
      %v4157 = vpack.c.b16 %v4078, %v4077
      %v4158 = vpack.c.b16 %v4080, %v4079
      %v4159 = vpack.c.b16 %v4082, %v4081
      %v4160 = vpack.c.b16 %v4084, %v4083
      %v4161 = vpack.c.b16 %v4086, %v4085
      %v4162 = vpack.c.b16 %v4088, %v4087
      %v4163 = vpack.c.b16 %v4090, %v4089
      %v4164 = vpack.c.b16 %v4092, %v4091
      %v4165 = vpack.c.b16 %v4094, %v4093
      %v4166 = vpack.c.b16 %v4096, %v4095
      %v4167 = vpack.c.b16 %v4098, %v4097
      %v4168 = vpack.c.b16 %v4100, %v4099
      %v4169 = vpack.c.b16 %v4102, %v4101
      %v4170 = vpack.c.b16 %v4104, %v4103
      %v4171 = vpack.c.b16 %v4106, %v4105
      %v4172 = vpack.c.b16 %v4108, %v4107
      %4237 = vmatprep.subr.bf16.mxu0 0
      %4238 = vmatpush1.bf16.msra.mxu0 %v4109
      %4239 = vmatprep.subr.bf16.mxu0 0
      %4240 = vmatpush1.bf16.msra.mxu0 %v4110
      %4241 = vmatprep.subr.bf16.mxu0 0
      %4242 = vmatpush1.bf16.msra.mxu0 %v4111
      %4243 = vmatprep.subr.bf16.mxu0 0
      %4244 = vmatpush1.bf16.msra.mxu0 %v4112
      %4245 = vmatprep.subr.bf16.mxu0 0
      %4246 = vmatpush1.bf16.msra.mxu0 %v4113
      %4247 = vmatprep.subr.bf16.mxu0 0
      %4248 = vmatpush1.bf16.msra.mxu0 %v4114
      %4249 = vmatprep.subr.bf16.mxu0 0
      %4250 = vmatpush1.bf16.msra.mxu0 %v4115
      %4251 = vmatprep.subr.bf16.mxu0 0
      %4252 = vmatpush1.bf16.msra.mxu0 %v4116
      %4253 = vmatprep.subr.bf16.mxu0 0
      %4254 = vmatpush1.bf16.msra.mxu0 %v4117
      %4255 = vmatprep.subr.bf16.mxu0 0
      %4256 = vmatpush1.bf16.msra.mxu0 %v4118
      %4257 = vmatprep.subr.bf16.mxu0 0
      %4258 = vmatpush1.bf16.msra.mxu0 %v4119
      %4259 = vmatprep.subr.bf16.mxu0 0
      %4260 = vmatpush1.bf16.msra.mxu0 %v4120
      %4261 = vmatprep.subr.bf16.mxu0 0
      %4262 = vmatpush1.bf16.msra.mxu0 %v4121
      %4263 = vmatprep.subr.bf16.mxu0 0
      %4264 = vmatpush1.bf16.msra.mxu0 %v4122
      %4265 = vmatprep.subr.bf16.mxu0 0
      %4266 = vmatpush1.bf16.msra.mxu0 %v4123
      %4267 = vmatprep.subr.bf16.mxu0 0
      %4268 = vmatpush1.bf16.msra.mxu0 %v4124
      %4269 = vmatprep.mubr.bf16.mxu0 %v3711
      %4270 = vmatmul.mubr.bf16.gmra.mrb[0].mxu0 %v3710
      %v4271 = vpop.f32.mrb[0].mxu0
      %v4272 = vadd.f32 %v3851, %v4271
      %v4273 = vpop.f32.mrb[0].mxu0
      %v4274 = vpop.f32.mrb[0].mxu0
      %v4275 = vpop.f32.mrb[0].mxu0
      %4276 = vdwg.mxu0
      %4277 = vmatprep.subr.bf16.mxu0 0
      %4278 = vmatpush1.bf16.msra.mxu0 %v4125
      %4279 = vmatprep.subr.bf16.mxu0 0
      %4280 = vmatpush1.bf16.msra.mxu0 %v4126
      %4281 = vmatprep.subr.bf16.mxu0 0
      %4282 = vmatpush1.bf16.msra.mxu0 %v4127
      %4283 = vmatprep.subr.bf16.mxu0 0
      %4284 = vmatpush1.bf16.msra.mxu0 %v4128
      %4285 = vmatprep.subr.bf16.mxu0 0
      %4286 = vmatpush1.bf16.msra.mxu0 %v4129
      %4287 = vmatprep.subr.bf16.mxu0 0
      %4288 = vmatpush1.bf16.msra.mxu0 %v4130
      %4289 = vmatprep.subr.bf16.mxu0 0
      %4290 = vmatpush1.bf16.msra.mxu0 %v4131
      %4291 = vmatprep.subr.bf16.mxu0 0
      %4292 = vmatpush1.bf16.msra.mxu0 %v4132
      %4293 = vmatprep.subr.bf16.mxu0 0
      %4294 = vmatpush1.bf16.msra.mxu0 %v4133
      %4295 = vmatprep.subr.bf16.mxu0 0
      %4296 = vmatpush1.bf16.msra.mxu0 %v4134
      %4297 = vmatprep.subr.bf16.mxu0 0
      %4298 = vmatpush1.bf16.msra.mxu0 %v4135
      %4299 = vmatprep.subr.bf16.mxu0 0
      %4300 = vmatpush1.bf16.msra.mxu0 %v4136
      %4301 = vmatprep.subr.bf16.mxu0 0
      %4302 = vmatpush1.bf16.msra.mxu0 %v4137
      %4303 = vmatprep.subr.bf16.mxu0 0
      %4304 = vmatpush1.bf16.msra.mxu0 %v4138
      %4305 = vmatprep.subr.bf16.mxu0 0
      %4306 = vmatpush1.bf16.msra.mxu0 %v4139
      %4307 = vmatprep.subr.bf16.mxu0 0
      %4308 = vmatpush1.bf16.msra.mxu0 %v4140
      %4309 = vmatprep.mubr.bf16.mxu0 %v3713
      %4310 = vmatmul.mubr.bf16.gmra.mrb[0].mxu0 %v3712
      %v4311 = vpop.f32.mrb[0].mxu0
      %v4312 = vadd.f32 %v4272, %v4311
      %v4313 = vpop.f32.mrb[0].mxu0
      %v4314 = vpop.f32.mrb[0].mxu0
      %v4315 = vpop.f32.mrb[0].mxu0
      %4316 = vdwg.mxu0
      %4317 = vmatprep.subr.bf16.mxu0 0
      %4318 = vmatpush1.bf16.msra.mxu0 %v4141
      %4319 = vmatprep.subr.bf16.mxu0 0
      %4320 = vmatpush1.bf16.msra.mxu0 %v4142
      %4321 = vmatprep.subr.bf16.mxu0 0
      %4322 = vmatpush1.bf16.msra.mxu0 %v4143
      %4323 = vmatprep.subr.bf16.mxu0 0
      %4324 = vmatpush1.bf16.msra.mxu0 %v4144
      %4325 = vmatprep.subr.bf16.mxu0 0
      %4326 = vmatpush1.bf16.msra.mxu0 %v4145
      %4327 = vmatprep.subr.bf16.mxu0 0
      %4328 = vmatpush1.bf16.msra.mxu0 %v4146
      %4329 = vmatprep.subr.bf16.mxu0 0
      %4330 = vmatpush1.bf16.msra.mxu0 %v4147
      %4331 = vmatprep.subr.bf16.mxu0 0
      %4332 = vmatpush1.bf16.msra.mxu0 %v4148
      %4333 = vmatprep.subr.bf16.mxu0 0
      %4334 = vmatpush1.bf16.msra.mxu0 %v4149
      %4335 = vmatprep.subr.bf16.mxu0 0
      %4336 = vmatpush1.bf16.msra.mxu0 %v4150
      %4337 = vmatprep.subr.bf16.mxu0 0
      %4338 = vmatpush1.bf16.msra.mxu0 %v4151
      %4339 = vmatprep.subr.bf16.mxu0 0
      %4340 = vmatpush1.bf16.msra.mxu0 %v4152
      %4341 = vmatprep.subr.bf16.mxu0 0
      %4342 = vmatpush1.bf16.msra.mxu0 %v4153
      %4343 = vmatprep.subr.bf16.mxu0 0
      %4344 = vmatpush1.bf16.msra.mxu0 %v4154
      %4345 = vmatprep.subr.bf16.mxu0 0
      %4346 = vmatpush1.bf16.msra.mxu0 %v4155
      %4347 = vmatprep.subr.bf16.mxu0 0
      %4348 = vmatpush1.bf16.msra.mxu0 %v4156
      %4349 = vmatprep.mubr.bf16.mxu0 %v3715
      %4350 = vmatmul.mubr.bf16.gmra.mrb[0].mxu0 %v3714
      %v4351 = vpop.f32.mrb[0].mxu0
      %v4352 = vadd.f32 %v4312, %v4351
      %v4353 = vpop.f32.mrb[0].mxu0
      %v4354 = vpop.f32.mrb[0].mxu0
      %v4355 = vpop.f32.mrb[0].mxu0
      %4356 = vdwg.mxu0
      %4357 = vmatprep.subr.bf16.mxu0 0
      %4358 = vmatpush1.bf16.msra.mxu0 %v4157
      %4359 = vmatprep.subr.bf16.mxu0 0
      %4360 = vmatpush1.bf16.msra.mxu0 %v4158
      %4361 = vmatprep.subr.bf16.mxu0 0
      %4362 = vmatpush1.bf16.msra.mxu0 %v4159
      %4363 = vmatprep.subr.bf16.mxu0 0
      %4364 = vmatpush1.bf16.msra.mxu0 %v4160
      %4365 = vmatprep.subr.bf16.mxu0 0
      %4366 = vmatpush1.bf16.msra.mxu0 %v4161
      %4367 = vmatprep.subr.bf16.mxu0 0
      %4368 = vmatpush1.bf16.msra.mxu0 %v4162
      %4369 = vmatprep.subr.bf16.mxu0 0
      %4370 = vmatpush1.bf16.msra.mxu0 %v4163
      %4371 = vmatprep.subr.bf16.mxu0 0
      %4372 = vmatpush1.bf16.msra.mxu0 %v4164
      %4373 = vmatprep.subr.bf16.mxu0 0
      %4374 = vmatpush1.bf16.msra.mxu0 %v4165
      %4375 = vmatprep.subr.bf16.mxu0 0
      %4376 = vmatpush1.bf16.msra.mxu0 %v4166
      %4377 = vmatprep.subr.bf16.mxu0 0
      %4378 = vmatpush1.bf16.msra.mxu0 %v4167
      %4379 = vmatprep.subr.bf16.mxu0 0
      %4380 = vmatpush1.bf16.msra.mxu0 %v4168
      %4381 = vmatprep.subr.bf16.mxu0 0
      %4382 = vmatpush1.bf16.msra.mxu0 %v4169
      %4383 = vmatprep.subr.bf16.mxu0 0
      %4384 = vmatpush1.bf16.msra.mxu0 %v4170
      %4385 = vmatprep.subr.bf16.mxu0 0
      %4386 = vmatpush1.bf16.msra.mxu0 %v4171
      %4387 = vmatprep.subr.bf16.mxu0 0
      %4388 = vmatpush1.bf16.msra.mxu0 %v4172
      %4389 = vmatprep.mubr.bf16.mxu0 %v3717
      %4390 = vmatmul.mubr.bf16.gmra.mrb[0].mxu0 %v3716
      %v4391 = vpop.f32.mrb[0].mxu0
      %v4392 = vadd.f32 %v4352, %v4391
      %v4393 = vpop.f32.mrb[0].mxu0
      %v4394 = vpop.f32.mrb[0].mxu0
      %v4395 = vpop.f32.mrb[0].mxu0
      %4396 = vdwg.mxu0
      %4397 = vst [vmem:[#allocation15] sm:$0xff] %v4392
    $region65: #{tpu_custom_call.1} parent=1 // pred_fallthru
      _
    // Predicated region
    $region66: #{tpu_custom_call.1} parent=1 // pred_check
      _
    $region67: #{tpu_custom_call.1} parent=1 // pred_check_branch
      %4399 = sbr.rel (0) target = $region69
    $region68: #{tpu_custom_call.1} parent=1 // pred_region
      %s4401 = ssub.s32 128, 128
      %4402 = vsyncadd [#allocation5], %s4401
      %s4404 = sshll.u32 [#allocation15], 4
      %s4405 = int_to_ptr.vmem [resolvable:$true] %s4404
      %4407 = dma.vmem_to_hbm [thread:$0]  %s4405, 128, %s7, [#allocation5]
    $region69: #{tpu_custom_call.1} parent=1 // pred_fallthru
      _
    // Predicated region
    $region70: #{tpu_custom_call.1} parent=1 // pred_check
      _
    $region71: #{tpu_custom_call.1} parent=1 // pred_check_branch
      %4409 = sbr.rel (0) target = $region73
    $region72: #{tpu_custom_call.1} parent=1 // pred_region
      %4410 = dma.done [#allocation5], 128
    $region73: #{tpu_custom_call.1} parent=1 // pred_fallthru
      _
    %4411 = vsyncpa [#allocation4], 1
    %4412 = vsyncpa [#allocation7], 1
    %4413 = vsyncpa [#allocation10], 1
    %4414 = vsyncpa [#allocation13], 1
    %4415 = vsyncpa [#allocation5], 1

</llo_original>
